<compile_context>
chip_gen: v5e
topology: v5e:2x2
jax: 0.10.0
libtpu: 0.0.40
codegen_flags: <defaults>
</compile_context>

<pallas_src>
import jax
import jax.numpy as jnp
from jax.experimental import pallas as pl
from jax.experimental.pallas import tpu as pltpu

# ------------------------- static configuration -------------------------
B = 2
N = 16
DIM_TOKEN = 32
DIM_PAIR = 8
NHEADS = 4
DIM_HEAD = DIM_TOKEN // NHEADS
DIM_COND = 16
EXPANSION = 4
DIM_INNER = DIM_TOKEN * EXPANSION

RESIDUAL_MHA = True
RESIDUAL_TRANSITION = True
PARALLEL = False          # sequential: mha -> transition
USE_QKLN = True
LN_EPS = 1e-5
NEG_INF = -1e9

PARAM_SHAPES = [
    # adaln 1 (attention branch)
    ("ln_c1_w", (1, DIM_COND)), ("ln_c1_b", (1, DIM_COND)),
    ("wg1", (DIM_COND, DIM_TOKEN)), ("bg1", (1, DIM_TOKEN)),
    ("wb1", (DIM_COND, DIM_TOKEN)),
    # pair-bias multi-head attention
    ("wq", (DIM_TOKEN, DIM_TOKEN)), ("bq", (1, DIM_TOKEN)),
    ("wk", (DIM_TOKEN, DIM_TOKEN)), ("bk", (1, DIM_TOKEN)),
    ("wv", (DIM_TOKEN, DIM_TOKEN)), ("bv", (1, DIM_TOKEN)),
    ("lnq_w", (1, DIM_HEAD)), ("lnq_b", (1, DIM_HEAD)),
    ("lnk_w", (1, DIM_HEAD)), ("lnk_b", (1, DIM_HEAD)),
    ("ln_p_w", (1, DIM_PAIR)), ("ln_p_b", (1, DIM_PAIR)),
    ("w_pair", (DIM_PAIR, NHEADS)),
    ("wo", (DIM_TOKEN, DIM_TOKEN)), ("bo", (1, DIM_TOKEN)),
    # output scale 1
    ("wsc1", (DIM_COND, DIM_TOKEN)), ("bsc1", (1, DIM_TOKEN)),
    # adaln 2 (transition branch)
    ("ln_c2_w", (1, DIM_COND)), ("ln_c2_b", (1, DIM_COND)),
    ("wg2", (DIM_COND, DIM_TOKEN)), ("bg2", (1, DIM_TOKEN)),
    ("wb2", (DIM_COND, DIM_TOKEN)),
    # transition (SwiGLU)
    ("wi", (DIM_TOKEN, 2 * DIM_INNER)),
    ("wout", (DIM_INNER, DIM_TOKEN)),
    # output scale 2
    ("wsc2", (DIM_COND, DIM_TOKEN)), ("bsc2", (1, DIM_TOKEN)),
]
LN_WEIGHT_NAMES = {"ln_c1_w", "ln_c2_w", "lnq_w", "lnk_w", "ln_p_w"}


def init_params(key):
    params = {}
    for name, shape in PARAM_SHAPES:
        key, sub = jax.random.split(key)
        if name in LN_WEIGHT_NAMES:
            params[name] = 1.0 + 0.05 * jax.random.normal(sub, shape, jnp.float32)
        elif shape[0] == 1:  # biases / LN biases
            params[name] = 0.1 * jax.random.normal(sub, shape, jnp.float32)
        else:                # [in, out] weight matrices
            params[name] = jax.random.normal(sub, shape, jnp.float32) / jnp.sqrt(shape[0])
    return params


# ------------------------- in-kernel helpers -------------------------
def _ln_last(x, w=None, b=None):
    """LayerNorm over the last axis (eps = 1e-5, like torch)."""
    mu = jnp.mean(x, axis=-1, keepdims=True)
    var = jnp.mean(jnp.square(x - mu), axis=-1, keepdims=True)
    y = (x - mu) * jax.lax.rsqrt(var + LN_EPS)
    if w is not None:
        y = y * w
    if b is not None:
        y = y + b
    return y


# ------------------------- fused kernel (single grid step, batch folded) -----
def _fused_kernel(x_ref, cond_ref, pair_ref, amask_ref, mc_ref,
                  wcond_ref, wtok_ref, wout_ref, vec_ref, scal_ref, out_ref):
    D, DH, DP, H = DIM_TOKEN, DIM_HEAD, DIM_PAIR, NHEADS

    x = x_ref[...]            # [BN, D]
    cond = cond_ref[...]      # [BN, C]
    pr = pair_ref[...]        # [dp, BN, BN]  (block-diagonal over batches)
    amask = amask_ref[...]    # [BN, BN]      additive mask (0 / -1e9)
    mc = mc_ref[...]          # [BN, 1]

    # tile-aligned slab slices (each logical weight starts at lane 0 / 128 / 256)
    w_qkv = wtok_ref[:, 0:3 * D]                      # [D, 3D]   tile 0
    w_in = wtok_ref[:, 256:256 + 2 * DIM_INNER]       # [D, 2*inner] tiles 2-3
    w_out = wout_ref[...]                             # [inner, D]

    b_cond = vec_ref[0:1, :6 * D]                     # [1, 6D]
    b_qkv = vec_ref[1:2, :3 * D]                      # [1, 3D]
    b_o = vec_ref[2:3, :D]                            # [1, D]
    lnq_w = vec_ref[3:4, :DH]
    lnq_b = vec_ref[4:5, :DH]
    lnk_w = vec_ref[5:6, :DH]
    lnk_b = vec_ref[6:7, :DH]

    x = x * mc

    # ---- cond path: ONE fused matmul -> [gamma1|beta1|gamma2|beta2|s1|s2] ----
    cnorm = _ln_last(cond)
    clhs = jnp.concatenate([cnorm, cond], axis=-1)                       # [BN, 2C]
    cp = jnp.dot(clhs, wcond_ref[...],
                 preferred_element_type=jnp.float32) + b_cond            # [BN, 6D]
    gamma1 = jax.nn.sigmoid(cp[:, 0:D])
    beta1 = cp[:, D:2 * D]
    gamma2 = jax.nn.sigmoid(cp[:, 2 * D:3 * D])
    beta2 = cp[:, 3 * D:4 * D]
    s1 = jax.nn.sigmoid(cp[:, 4 * D:5 * D])
    s2 = jax.nn.sigmoid(cp[:, 5 * D:6 * D])

    # ---- pair bias: LN over the leading dp axis + VPU leading-axis contraction
    # (LN affine is folded into the SMEM scalars; off-diagonal zero blocks give
    #  finite values that are killed by the additive mask).
    mu = jnp.mean(pr, axis=0, keepdims=True)
    var = jnp.mean(jnp.square(pr - mu), axis=0, keepdims=True)
    prn = (pr - mu) * jax.lax.rsqrt(var + LN_EPS)                        # [dp, BN, BN]
    bias = []
    for h in range(H):
        acc = prn[0] * scal_ref[0 * H + h]
        for p_ in range(1, DP):
            acc = acc + prn[p_] * scal_ref[p_ * H + h]
        bias.append(acc + scal_ref[DP * H + h])                          # + ln_p_b @ w_pair

    scale = DH ** -0.5

    def mhba(x_in):
        h1 = (_ln_last(x_in) * gamma1 + beta1) * mc                      # adaLN (folded affine)
        qkv = jnp.dot(h1, w_qkv, preferred_element_type=jnp.float32) + b_qkv   # [BN, 3D]
        o_proj = None
        for h in range(H):
            qh = qkv[:, h * DH:(h + 1) * DH]                             # [BN, dh]
            kh = qkv[:, D + h * DH:D + (h + 1) * DH]
            vh = qkv[:, 2 * D + h * DH:2 * D + (h + 1) * DH]
            if USE_QKLN:
                qh = _ln_last(qh, lnq_w, lnq_b)
                kh = _ln_last(kh, lnk_w, lnk_b)
            logits = jnp.einsum("qd,kd->qk", qh, kh,
                                preferred_element_type=jnp.float32) * scale
            logits = logits + bias[h] + amask                            # additive mask
            m = jnp.max(logits, axis=-1, keepdims=True)
            e = jnp.exp(logits - m)
            attn = e * pl.reciprocal(jnp.sum(e, axis=-1, keepdims=True), approx=True)
            oh = jnp.dot(attn, vh, preferred_element_type=jnp.float32)   # [BN, dh]
            # head-concat folded into the output projection:
            #   concat_h(oh) @ W_o == sum_h oh @ W_o[h*dh:(h+1)*dh, :]
            woh = wtok_ref[h * DH:(h + 1) * DH, 128:128 + D]             # [dh, D] (tile 1)
            contrib = jnp.dot(oh, woh, preferred_element_type=jnp.float32)
            o_proj = contrib if o_proj is None else o_proj + contrib
        o_proj = o_proj + b_o
        return o_proj * s1 * mc                                          # output scale + mask

    def transition(x_in):
        h2 = (_ln_last(x_in) * gamma2 + beta2) * mc
        t = jnp.dot(h2, w_in, preferred_element_type=jnp.float32)        # [BN, 2*inner]
        val = t[:, :DIM_INNER]
        gate = t[:, DIM_INNER:]
        t = jax.nn.silu(gate) * val
        t = jnp.dot(t, w_out, preferred_element_type=jnp.float32)
        t = t * mc
        return t * s2 * mc

    def apply_mha(x_in):
        xa = mhba(x_in)
        if RESIDUAL_MHA:
            xa = xa + x_in
        return xa * mc

    def apply_transition(x_in):
        xt = transition(x_in)
        if RESIDUAL_TRANSITION:
            xt = xt + x_in
        return xt * mc

    if PARALLEL:
        x_new = apply_mha(x) + apply_transition(x)
    else:
        x_new = apply_transition(apply_mha(x))

    out_ref[...] = (x_new * mc).astype(out_ref.dtype)


# ------------------------- host-side parameter packing -------------------------
def pack_params(p):
    """Fold the adaLN / pair-LN affines into the weights and pack into
    tile-aligned slabs (every logical tensor starts at a 128-lane boundary
    or on its own vec row)."""
    def fold(ln_w, ln_b, w):
        # (LN(c)*ln_w + ln_b) @ w  ==  LN(c) @ (ln_w.T * w) + ln_b @ w
        return ln_w.reshape(-1, 1) * w, ln_b @ w

    wg1_f, c1 = fold(p["ln_c1_w"], p["ln_c1_b"], p["wg1"])
    wb1_f, c2 = fold(p["ln_c1_w"], p["ln_c1_b"], p["wb1"])
    wg2_f, c3 = fold(p["ln_c2_w"], p["ln_c2_b"], p["wg2"])
    wb2_f, c4 = fold(p["ln_c2_w"], p["ln_c2_b"], p["wb2"])

    w_adaln = jnp.concatenate([wg1_f, wb1_f, wg2_f, wb2_f], axis=1)            # [C, 4D]
    b_adaln = jnp.concatenate([c1 + p["bg1"], c2, c3 + p["bg2"], c4], axis=1)  # [1, 4D]
    w_scale = jnp.concatenate([p["wsc1"], p["wsc2"]], axis=1)                  # [C, 2D]
    b_scale = jnp.concatenate([p["bsc1"], p["bsc2"]], axis=1)                  # [1, 2D]

    # block-diagonal fused cond weight: [LN(cond)|cond] @ slab_cond -> [adaLN | scales]
    slab_cond = jnp.zeros((2 * DIM_COND, 6 * DIM_TOKEN), jnp.float32)
    slab_cond = slab_cond.at[:DIM_COND, :4 * DIM_TOKEN].set(w_adaln)
    slab_cond = slab_cond.at[DIM_COND:, 4 * DIM_TOKEN:].set(w_scale)
    b_cond = jnp.concatenate([b_adaln, b_scale], axis=1)                       # [1, 6D]

    # token-proj slab, each weight starting on a 128-lane tile boundary
    w_qkv = jnp.concatenate([p["wq"], p["wk"], p["wv"]], axis=1)               # [D, 3D]
    b_qkv = jnp.concatenate([p["bq"], p["bk"], p["bv"]], axis=1)               # [1, 3D]
    slab_tok = jnp.zeros((DIM_TOKEN, 4 * 128), jnp.float32)
    slab_tok = slab_tok.at[:, 0:3 * DIM_TOKEN].set(w_qkv)                      # tile 0
    slab_tok = slab_tok.at[:, 128:128 + DIM_TOKEN].set(p["wo"])                # tile 1
    slab_tok = slab_tok.at[:, 256:256 + 2 * DIM_INNER].set(p["wi"])            # tiles 2-3

    # one logical vector per row, all at lane offset 0
    vec = jnp.zeros((8, 256), jnp.float32)
    vec = vec.at[0, :6 * DIM_TOKEN].set(b_cond[0])
    vec = vec.at[1, :3 * DIM_TOKEN].set(b_qkv[0])
    vec = vec.at[2, :DIM_TOKEN].set(p["bo"][0])
    vec = vec.at[3, :DIM_HEAD].set(p["lnq_w"][0])
    vec = vec.at[4, :DIM_HEAD].set(p["lnq_b"][0])
    vec = vec.at[5, :DIM_HEAD].set(p["lnk_w"][0])
    vec = vec.at[6, :DIM_HEAD].set(p["lnk_b"][0])

    # pair-bias scalars (pair-LN affine folded into w_pair), consumed from SMEM
    wpf = p["ln_p_w"].reshape(-1, 1) * p["w_pair"]                             # [dp, H]
    bias_const = (p["ln_p_b"] @ p["w_pair"]).reshape(-1)                       # [H]
    scal = jnp.zeros((40,), jnp.float32)
    scal = scal.at[:DIM_PAIR * NHEADS].set(wpf.reshape(-1))                    # p-major
    scal = scal.at[DIM_PAIR * NHEADS:DIM_PAIR * NHEADS + NHEADS].set(bias_const)

    return slab_cond, slab_tok, p["wout"], vec, scal


# ------------------------- wrapper -------------------------
def forward_pallas(x, pair_rep, cond, mask, params):
    b, n, d = x.shape
    bn = b * n

    maskf = mask.astype(jnp.float32).reshape(bn)
    mc = maskf[:, None]                                                  # [BN, 1]
    # block-diagonal additive mask: 0 where valid & same batch, -1e9 otherwise
    bidx = jnp.arange(bn) // n
    same = (bidx[:, None] == bidx[None, :]).astype(jnp.float32)
    valid = same * maskf[:, None] * maskf[None, :]
    amask = (valid - 1.0) * (-NEG_INF)                                   # [BN, BN]

    x_fold = x.reshape(bn, d)
    cond_fold = cond.reshape(bn, DIM_COND)
    # pair rep -> [dp, BN, BN], batch blocks on the diagonal (lane-dense-ish,
    # leading dp axis -> VPU LN / contraction)
    pr_t = jnp.transpose(pair_rep, (0, 3, 1, 2))                         # [b, dp, n, n]
    pair_bd = jnp.zeros((DIM_PAIR, bn, bn), jnp.float32)
    for bi in range(b):
        pair_bd = pair_bd.at[:, bi * n:(bi + 1) * n, bi * n:(bi + 1) * n].set(pr_t[bi])

    slab_cond, slab_tok, w_out, vec, scal = pack_params(params)

    grid_spec = pltpu.PrefetchScalarGridSpec(
        num_scalar_prefetch=0,
        grid=(1,),
        in_specs=[
            pl.BlockSpec((bn, DIM_TOKEN), lambda i: (0, 0)),              # x (folded)
            pl.BlockSpec((bn, DIM_COND), lambda i: (0, 0)),               # cond (folded)
            pl.BlockSpec((DIM_PAIR, bn, bn), lambda i: (0, 0, 0)),        # pair (dp-major)
            pl.BlockSpec((bn, bn), lambda i: (0, 0)),                     # additive mask
            pl.BlockSpec((bn, 1), lambda i: (0, 0)),                      # mask column
            pl.BlockSpec((2 * DIM_COND, 6 * DIM_TOKEN), lambda i: (0, 0)),  # fused cond slab
            pl.BlockSpec((DIM_TOKEN, 4 * 128), lambda i: (0, 0)),         # token-proj slab
            pl.BlockSpec((DIM_INNER, DIM_TOKEN), lambda i: (0, 0)),       # transition out
            pl.BlockSpec((8, 256), lambda i: (0, 0)),                     # packed vectors
            pl.BlockSpec(memory_space=pltpu.MemorySpace.SMEM),            # pair-bias scalars
        ],
        out_specs=pl.BlockSpec((bn, DIM_TOKEN), lambda i: (0, 0)),
    )

    out = pl.pallas_call(
        _fused_kernel,
        out_shape=jax.ShapeDtypeStruct((bn, DIM_TOKEN), jnp.float32),
        grid_spec=grid_spec,
        # grid=(1,): single step on v5e/v6e.  TODO(synk): on v7x benchmark the
        # alternative grid=(B,) with dimension_semantics=("parallel",) (1 batch
        # per TensorCore) and keep whichever is faster.
        compiler_params=pltpu.CompilerParams(dimension_semantics=("arbitrary",)),
    )(x_fold, cond_fold, pair_bd, amask, mc, slab_cond, slab_tok, w_out, vec, scal)

    return out.reshape(b, n, d)


# ------------------------- pure-JAX reference (for validation) -------------------------
def forward_ref(x, pair_rep, cond, mask, p):
    mc = mask[..., None].astype(jnp.float32)                      # [b,n,1]
    pair_mask = mask[:, :, None] * mask[:, None, :]               # [b,n,n]
    x = x * mc

    def adaln(x_in, lnw, lnb, wg, bg, wb):
        c = _ln_last(cond, p[lnw], p[lnb])
        gamma = jax.nn.sigmoid(c @ p[wg] + p[bg])
        beta = c @ p[wb]
        return (_ln_last(x_in) * gamma + beta) * mc

    def out_scale(x_in, wsc, bsc):
        return x_in * jax.nn.sigmoid(cond @ p[wsc] + p[bsc]) * mc

    def mhba(x_in):
        b, n, _ = x_in.shape
        h = adaln(x_in, "ln_c1_w", "ln_c1_b", "wg1", "bg1", "wb1")
        q = (h @ p["wq"] + p["bq"]).reshape(b, n, NHEADS, DIM_HEAD)
        k = (h @ p["wk"] + p["bk"]).reshape(b, n, NHEADS, DIM_HEAD)
        v = (h @ p["wv"] + p["bv"]).reshape(b, n, NHEADS, DIM_HEAD)
        if USE_QKLN:
            q = _ln_last(q, p["lnq_w"], p["lnq_b"])
            k = _ln_last(k, p["lnk_w"], p["lnk_b"])
        prn = _ln_last(pair_rep, p["ln_p_w"], p["ln_p_b"])
        bias = jnp.einsum("bijp,ph->bhij", prn, p["w_pair"])
        logits = jnp.einsum("bihd,bjhd->bhij", q, k) / (DIM_HEAD ** 0.5) + bias
        logits = jnp.where(pair_mask[:, None] > 0, logits, NEG_INF)
        m = jnp.max(logits, axis=-1, keepdims=True)
        e = jnp.exp(logits - m)
        attn = e / jnp.sum(e, axis=-1, keepdims=True)
        o = jnp.einsum("bhij,bjhd->bihd", attn, v).reshape(b, n, DIM_TOKEN)
        o = o @ p["wo"] + p["bo"]
        return out_scale(o, "wsc1", "bsc1") * mc

    def transition(x_in):
        h = adaln(x_in, "ln_c2_w", "ln_c2_b", "wg2", "bg2", "wb2")
        t = h @ p["wi"]
        val, gate = t[..., :DIM_INNER], t[..., DIM_INNER:]
        t = (jax.nn.silu(gate) * val) @ p["wout"]
        t = t * mc
        return out_scale(t, "wsc2", "bsc2") * mc

    def apply_mha(x_in):
        xa = mhba(x_in)
        if RESIDUAL_MHA:
            xa = xa + x_in
        return xa * mc

    def apply_transition(x_in):
        xt = transition(x_in)
        if RESIDUAL_TRANSITION:
            xt = xt + x_in
        return xt * mc

    if PARALLEL:
        x = apply_mha(x) + apply_transition(x)
    else:
        x = apply_transition(apply_mha(x))
    return x * mc


if __name__ == "__main__":
    key = jax.random.PRNGKey(0)
    k1, k2, k3, k4, kp = jax.random.split(key, 5)
    x = jax.random.normal(k1, (B, N, DIM_TOKEN), jnp.float32)
    pair_rep = jax.random.normal(k2, (B, N, N, DIM_PAIR), jnp.float32)
    cond = jax.random.normal(k3, (B, N, DIM_COND), jnp.float32)
    mask = (jax.random.uniform(k4, (B, N)) > 0.25).astype(jnp.float32)
    params = init_params(kp)

    out = forward_pallas(x, pair_rep, cond, mask, params)
    out = jax.block_until_ready(out)

    ref = forward_ref(x, pair_rep, cond, mask, params)
    assert out.shape == (B, N, DIM_TOKEN)
    err = float(jnp.max(jnp.abs(out - ref)))
    assert jnp.allclose(out, ref, atol=5e-3, rtol=5e-3), err
    print("KERNEL_OK")
</pallas_src>

<mosaic_0001>
module attributes {stable_mosaic.version = 11 : i64} {
  func.func @_fused_kernel(%arg0: i32, %arg1: memref<32x32xf32, #tpu.memory_space<vmem>>, %arg2: memref<32x16xf32, #tpu.memory_space<vmem>>, %arg3: memref<8x32x32xf32, #tpu.memory_space<vmem>>, %arg4: memref<32x32xf32, #tpu.memory_space<vmem>>, %arg5: memref<32x1xf32, #tpu.memory_space<vmem>>, %arg6: memref<32x192xf32, #tpu.memory_space<vmem>>, %arg7: memref<32x512xf32, #tpu.memory_space<vmem>>, %arg8: memref<128x32xf32, #tpu.memory_space<vmem>>, %arg9: memref<8x256xf32, #tpu.memory_space<vmem>>, %arg10: memref<40xf32, #tpu.memory_space<smem>>, %arg11: memref<32x32xf32, #tpu.memory_space<vmem>>) attributes {dimension_semantics = [#tpu.dimension_semantics<arbitrary>], iteration_bounds = array<i64: 1>, scalar_prefetch = 0 : i64, scratch_operands = 0 : i64, tpu.core_type = #tpu.core_type<tc>, window_params = [{pipeline_mode = #tpu.pipeline_mode<synchronous>, transform_indices = @transform_0, window_bounds = array<i64: 32, 32>}, {pipeline_mode = #tpu.pipeline_mode<synchronous>, transform_indices = @transform_1, window_bounds = array<i64: 32, 16>}, {pipeline_mode = #tpu.pipeline_mode<synchronous>, transform_indices = @transform_2, window_bounds = array<i64: 8, 32, 32>}, {pipeline_mode = #tpu.pipeline_mode<synchronous>, transform_indices = @transform_3, window_bounds = array<i64: 32, 32>}, {pipeline_mode = #tpu.pipeline_mode<synchronous>, transform_indices = @transform_4, window_bounds = array<i64: 32, 1>}, {pipeline_mode = #tpu.pipeline_mode<synchronous>, transform_indices = @transform_5, window_bounds = array<i64: 32, 192>}, {pipeline_mode = #tpu.pipeline_mode<synchronous>, transform_indices = @transform_6, window_bounds = array<i64: 32, 512>}, {pipeline_mode = #tpu.pipeline_mode<synchronous>, transform_indices = @transform_7, window_bounds = array<i64: 128, 32>}, {pipeline_mode = #tpu.pipeline_mode<synchronous>, transform_indices = @transform_8, window_bounds = array<i64: 8, 256>}, {transform_indices = @transform_9, window_bounds = array<i64: 40>}, {pipeline_mode = #tpu.pipeline_mode<synchronous>, transform_indices = @transform_10, window_bounds = array<i64: 32, 32>}]} {
    %c0 = arith.constant 0 : index
    %c0_0 = arith.constant 0 : index
    %0 = vector.load %arg1[%c0, %c0_0] : memref<32x32xf32, #tpu.memory_space<vmem>>, vector<32x32xf32>
    %c0_1 = arith.constant 0 : index
    %c0_2 = arith.constant 0 : index
    %1 = vector.load %arg2[%c0_1, %c0_2] : memref<32x16xf32, #tpu.memory_space<vmem>>, vector<32x16xf32>
    %c0_3 = arith.constant 0 : index
    %c0_4 = arith.constant 0 : index
    %c0_5 = arith.constant 0 : index
    %2 = vector.load %arg3[%c0_3, %c0_4, %c0_5] : memref<8x32x32xf32, #tpu.memory_space<vmem>>, vector<8x32x32xf32>
    %c0_6 = arith.constant 0 : index
    %c0_7 = arith.constant 0 : index
    %3 = vector.load %arg4[%c0_6, %c0_7] : memref<32x32xf32, #tpu.memory_space<vmem>>, vector<32x32xf32>
    %c0_8 = arith.constant 0 : index
    %c0_9 = arith.constant 0 : index
    %4 = vector.load %arg5[%c0_8, %c0_9] : memref<32x1xf32, #tpu.memory_space<vmem>>, vector<32x1xf32>
    %c0_10 = arith.constant 0 : index
    %c0_11 = arith.constant 0 : index
    %5 = vector.load %arg7[%c0_10, %c0_11] : memref<32x512xf32, #tpu.memory_space<vmem>>, vector<32x96xf32>
    %c0_12 = arith.constant 0 : index
    %c256 = arith.constant 256 : index
    %6 = vector.load %arg7[%c0_12, %c256] : memref<32x512xf32, #tpu.memory_space<vmem>>, vector<32x256xf32>
    %c0_13 = arith.constant 0 : index
    %c0_14 = arith.constant 0 : index
    %7 = vector.load %arg8[%c0_13, %c0_14] : memref<128x32xf32, #tpu.memory_space<vmem>>, vector<128x32xf32>
    %c0_15 = arith.constant 0 : index
    %c0_16 = arith.constant 0 : index
    %8 = vector.load %arg9[%c0_15, %c0_16] : memref<8x256xf32, #tpu.memory_space<vmem>>, vector<1x192xf32>
    %c1 = arith.constant 1 : index
    %c0_17 = arith.constant 0 : index
    %9 = vector.load %arg9[%c1, %c0_17] : memref<8x256xf32, #tpu.memory_space<vmem>>, vector<1x96xf32>
    %c2 = arith.constant 2 : index
    %c0_18 = arith.constant 0 : index
    %10 = vector.load %arg9[%c2, %c0_18] : memref<8x256xf32, #tpu.memory_space<vmem>>, vector<1x32xf32>
    %c3 = arith.constant 3 : index
    %c0_19 = arith.constant 0 : index
    %11 = vector.load %arg9[%c3, %c0_19] : memref<8x256xf32, #tpu.memory_space<vmem>>, vector<1x8xf32>
    %c4 = arith.constant 4 : index
    %c0_20 = arith.constant 0 : index
    %12 = vector.load %arg9[%c4, %c0_20] : memref<8x256xf32, #tpu.memory_space<vmem>>, vector<1x8xf32>
    %c5 = arith.constant 5 : index
    %c0_21 = arith.constant 0 : index
    %13 = vector.load %arg9[%c5, %c0_21] : memref<8x256xf32, #tpu.memory_space<vmem>>, vector<1x8xf32>
    %c6 = arith.constant 6 : index
    %c0_22 = arith.constant 0 : index
    %14 = vector.load %arg9[%c6, %c0_22] : memref<8x256xf32, #tpu.memory_space<vmem>>, vector<1x8xf32>
    %15 = vector.broadcast %4 : vector<32x1xf32> to vector<32x32xf32>
    %16 = arith.mulf %0, %15 : vector<32x32xf32>
    %cst = arith.constant dense<0.000000e+00> : vector<32xf32>
    %17 = vector.multi_reduction <add>, %1, %cst [1] : vector<32x16xf32> to vector<32xf32>
    %18 = vector.shape_cast %17 : vector<32xf32> to vector<32x1xf32>
    %cst_23 = arith.constant 1.600000e+01 : f32
    %19 = vector.broadcast %cst_23 : f32 to vector<32x1xf32>
    %20 = arith.divf %18, %19 : vector<32x1xf32>
    %21 = vector.broadcast %20 : vector<32x1xf32> to vector<32x16xf32>
    %22 = arith.subf %1, %21 : vector<32x16xf32>
    %23 = arith.mulf %22, %22 : vector<32x16xf32>
    %cst_24 = arith.constant dense<0.000000e+00> : vector<32xf32>
    %24 = vector.multi_reduction <add>, %23, %cst_24 [1] : vector<32x16xf32> to vector<32xf32>
    %25 = vector.shape_cast %24 : vector<32xf32> to vector<32x1xf32>
    %cst_25 = arith.constant 1.600000e+01 : f32
    %26 = vector.broadcast %cst_25 : f32 to vector<32x1xf32>
    %27 = arith.divf %25, %26 : vector<32x1xf32>
    %28 = vector.broadcast %20 : vector<32x1xf32> to vector<32x16xf32>
    %29 = arith.subf %1, %28 : vector<32x16xf32>
    %cst_26 = arith.constant 9.99999974E-6 : f32
    %30 = vector.broadcast %cst_26 : f32 to vector<32x1xf32>
    %31 = arith.addf %27, %30 : vector<32x1xf32>
    %32 = math.rsqrt %31 : vector<32x1xf32>
    %33 = vector.broadcast %32 : vector<32x1xf32> to vector<32x16xf32>
    %34 = arith.mulf %29, %33 : vector<32x16xf32>
    %35 = tpu.concatenate %34, %1 in 1 : vector<32x16xf32>, vector<32x16xf32> -> vector<32x32xf32>
    %c0_27 = arith.constant 0 : index
    %c0_28 = arith.constant 0 : index
    %36 = vector.load %arg6[%c0_27, %c0_28] : memref<32x192xf32, #tpu.memory_space<vmem>>, vector<32x192xf32>
    %cst_29 = arith.constant dense<0.000000e+00> : vector<32x192xf32>
    %37 = tpu.matmul %35, %36, %cst_29 {dimension_numbers = #tpu.dot_dimension_numbers<[1], [0], [0], [1], [0, 0, 1, 1], [], []>} : vector<32x32xf32>, vector<32x192xf32>, vector<32x192xf32> -> vector<32x192xf32>
    %38 = vector.broadcast %8 : vector<1x192xf32> to vector<32x192xf32>
    %39 = arith.addf %37, %38 : vector<32x192xf32>
    %40 = vector.extract_strided_slice %39 {offsets = [0, 0], sizes = [32, 32], strides = [1, 1]} : vector<32x192xf32> to vector<32x32xf32>
    %41 = arith.negf %40 : vector<32x32xf32>
    %42 = math.exp %41 : vector<32x32xf32>
    %cst_30 = arith.constant 1.000000e+00 : f32
    %43 = vector.broadcast %cst_30 : f32 to vector<32x32xf32>
    %44 = arith.addf %43, %42 : vector<32x32xf32>
    %45 = arith.divf %43, %44 : vector<32x32xf32>
    %46 = vector.extract_strided_slice %39 {offsets = [0, 32], sizes = [32, 32], strides = [1, 1]} : vector<32x192xf32> to vector<32x32xf32>
    %47 = vector.extract_strided_slice %39 {offsets = [0, 64], sizes = [32, 32], strides = [1, 1]} : vector<32x192xf32> to vector<32x32xf32>
    %48 = arith.negf %47 : vector<32x32xf32>
    %49 = math.exp %48 : vector<32x32xf32>
    %cst_31 = arith.constant 1.000000e+00 : f32
    %50 = vector.broadcast %cst_31 : f32 to vector<32x32xf32>
    %51 = arith.addf %50, %49 : vector<32x32xf32>
    %52 = arith.divf %50, %51 : vector<32x32xf32>
    %53 = vector.extract_strided_slice %39 {offsets = [0, 96], sizes = [32, 32], strides = [1, 1]} : vector<32x192xf32> to vector<32x32xf32>
    %54 = vector.extract_strided_slice %39 {offsets = [0, 128], sizes = [32, 32], strides = [1, 1]} : vector<32x192xf32> to vector<32x32xf32>
    %55 = arith.negf %54 : vector<32x32xf32>
    %56 = math.exp %55 : vector<32x32xf32>
    %cst_32 = arith.constant 1.000000e+00 : f32
    %57 = vector.broadcast %cst_32 : f32 to vector<32x32xf32>
    %58 = arith.addf %57, %56 : vector<32x32xf32>
    %59 = arith.divf %57, %58 : vector<32x32xf32>
    %60 = vector.extract_strided_slice %39 {offsets = [0, 160], sizes = [32, 32], strides = [1, 1]} : vector<32x192xf32> to vector<32x32xf32>
    %61 = arith.negf %60 : vector<32x32xf32>
    %62 = math.exp %61 : vector<32x32xf32>
    %cst_33 = arith.constant 1.000000e+00 : f32
    %63 = vector.broadcast %cst_33 : f32 to vector<32x32xf32>
    %64 = arith.addf %63, %62 : vector<32x32xf32>
    %65 = arith.divf %63, %64 : vector<32x32xf32>
    %cst_34 = arith.constant dense<0.000000e+00> : vector<32x32xf32>
    %66 = vector.multi_reduction <add>, %2, %cst_34 [0] : vector<8x32x32xf32> to vector<32x32xf32>
    %67 = vector.shape_cast %66 : vector<32x32xf32> to vector<1x32x32xf32>
    %cst_35 = arith.constant 8.000000e+00 : f32
    %68 = vector.broadcast %cst_35 : f32 to vector<1x32x32xf32>
    %69 = arith.divf %67, %68 : vector<1x32x32xf32>
    %70 = vector.broadcast %69 : vector<1x32x32xf32> to vector<8x32x32xf32>
    %71 = arith.subf %2, %70 : vector<8x32x32xf32>
    %72 = arith.mulf %71, %71 : vector<8x32x32xf32>
    %cst_36 = arith.constant dense<0.000000e+00> : vector<32x32xf32>
    %73 = vector.multi_reduction <add>, %72, %cst_36 [0] : vector<8x32x32xf32> to vector<32x32xf32>
    %74 = vector.shape_cast %73 : vector<32x32xf32> to vector<1x32x32xf32>
    %cst_37 = arith.constant 8.000000e+00 : f32
    %75 = vector.broadcast %cst_37 : f32 to vector<1x32x32xf32>
    %76 = arith.divf %74, %75 : vector<1x32x32xf32>
    %77 = vector.broadcast %69 : vector<1x32x32xf32> to vector<8x32x32xf32>
    %78 = arith.subf %2, %77 : vector<8x32x32xf32>
    %cst_38 = arith.constant 9.99999974E-6 : f32
    %79 = vector.broadcast %cst_38 : f32 to vector<1x32x32xf32>
    %80 = arith.addf %76, %79 : vector<1x32x32xf32>
    %81 = math.rsqrt %80 : vector<1x32x32xf32>
    %82 = vector.broadcast %81 : vector<1x32x32xf32> to vector<8x32x32xf32>
    %83 = arith.mulf %78, %82 : vector<8x32x32xf32>
    %84 = vector.extract_strided_slice %83 {offsets = [0, 0, 0], sizes = [1, 32, 32], strides = [1, 1, 1]} : vector<8x32x32xf32> to vector<1x32x32xf32>
    %85 = vector.shape_cast %84 : vector<1x32x32xf32> to vector<32x32xf32>
    %c0_39 = arith.constant 0 : index
    %86 = memref.load %arg10[%c0_39] : memref<40xf32, #tpu.memory_space<smem>>
    %87 = vector.broadcast %86 : f32 to vector<32x32xf32>
    %88 = arith.mulf %85, %87 : vector<32x32xf32>
    %89 = vector.extract_strided_slice %83 {offsets = [1, 0, 0], sizes = [1, 32, 32], strides = [1, 1, 1]} : vector<8x32x32xf32> to vector<1x32x32xf32>
    %90 = vector.shape_cast %89 : vector<1x32x32xf32> to vector<32x32xf32>
    %c4_40 = arith.constant 4 : index
    %91 = memref.load %arg10[%c4_40] : memref<40xf32, #tpu.memory_space<smem>>
    %92 = vector.broadcast %91 : f32 to vector<32x32xf32>
    %93 = arith.mulf %90, %92 : vector<32x32xf32>
    %94 = arith.addf %88, %93 : vector<32x32xf32>
    %95 = vector.extract_strided_slice %83 {offsets = [2, 0, 0], sizes = [1, 32, 32], strides = [1, 1, 1]} : vector<8x32x32xf32> to vector<1x32x32xf32>
    %96 = vector.shape_cast %95 : vector<1x32x32xf32> to vector<32x32xf32>
    %c8 = arith.constant 8 : index
    %97 = memref.load %arg10[%c8] : memref<40xf32, #tpu.memory_space<smem>>
    %98 = vector.broadcast %97 : f32 to vector<32x32xf32>
    %99 = arith.mulf %96, %98 : vector<32x32xf32>
    %100 = arith.addf %94, %99 : vector<32x32xf32>
    %101 = vector.extract_strided_slice %83 {offsets = [3, 0, 0], sizes = [1, 32, 32], strides = [1, 1, 1]} : vector<8x32x32xf32> to vector<1x32x32xf32>
    %102 = vector.shape_cast %101 : vector<1x32x32xf32> to vector<32x32xf32>
    %c12 = arith.constant 12 : index
    %103 = memref.load %arg10[%c12] : memref<40xf32, #tpu.memory_space<smem>>
    %104 = vector.broadcast %103 : f32 to vector<32x32xf32>
    %105 = arith.mulf %102, %104 : vector<32x32xf32>
    %106 = arith.addf %100, %105 : vector<32x32xf32>
    %107 = vector.extract_strided_slice %83 {offsets = [4, 0, 0], sizes = [1, 32, 32], strides = [1, 1, 1]} : vector<8x32x32xf32> to vector<1x32x32xf32>
    %108 = vector.shape_cast %107 : vector<1x32x32xf32> to vector<32x32xf32>
    %c16 = arith.constant 16 : index
    %109 = memref.load %arg10[%c16] : memref<40xf32, #tpu.memory_space<smem>>
    %110 = vector.broadcast %109 : f32 to vector<32x32xf32>
    %111 = arith.mulf %108, %110 : vector<32x32xf32>
    %112 = arith.addf %106, %111 : vector<32x32xf32>
    %113 = vector.extract_strided_slice %83 {offsets = [5, 0, 0], sizes = [1, 32, 32], strides = [1, 1, 1]} : vector<8x32x32xf32> to vector<1x32x32xf32>
    %114 = vector.shape_cast %113 : vector<1x32x32xf32> to vector<32x32xf32>
    %c20 = arith.constant 20 : index
    %115 = memref.load %arg10[%c20] : memref<40xf32, #tpu.memory_space<smem>>
    %116 = vector.broadcast %115 : f32 to vector<32x32xf32>
    %117 = arith.mulf %114, %116 : vector<32x32xf32>
    %118 = arith.addf %112, %117 : vector<32x32xf32>
    %119 = vector.extract_strided_slice %83 {offsets = [6, 0, 0], sizes = [1, 32, 32], strides = [1, 1, 1]} : vector<8x32x32xf32> to vector<1x32x32xf32>
    %120 = vector.shape_cast %119 : vector<1x32x32xf32> to vector<32x32xf32>
    %c24 = arith.constant 24 : index
    %121 = memref.load %arg10[%c24] : memref<40xf32, #tpu.memory_space<smem>>
    %122 = vector.broadcast %121 : f32 to vector<32x32xf32>
    %123 = arith.mulf %120, %122 : vector<32x32xf32>
    %124 = arith.addf %118, %123 : vector<32x32xf32>
    %125 = vector.extract_strided_slice %83 {offsets = [7, 0, 0], sizes = [1, 32, 32], strides = [1, 1, 1]} : vector<8x32x32xf32> to vector<1x32x32xf32>
    %126 = vector.shape_cast %125 : vector<1x32x32xf32> to vector<32x32xf32>
    %c28 = arith.constant 28 : index
    %127 = memref.load %arg10[%c28] : memref<40xf32, #tpu.memory_space<smem>>
    %128 = vector.broadcast %127 : f32 to vector<32x32xf32>
    %129 = arith.mulf %126, %128 : vector<32x32xf32>
    %130 = arith.addf %124, %129 : vector<32x32xf32>
    %c32 = arith.constant 32 : index
    %131 = memref.load %arg10[%c32] : memref<40xf32, #tpu.memory_space<smem>>
    %132 = vector.broadcast %131 : f32 to vector<32x32xf32>
    %133 = arith.addf %130, %132 : vector<32x32xf32>
    %134 = vector.extract_strided_slice %83 {offsets = [0, 0, 0], sizes = [1, 32, 32], strides = [1, 1, 1]} : vector<8x32x32xf32> to vector<1x32x32xf32>
    %135 = vector.shape_cast %134 : vector<1x32x32xf32> to vector<32x32xf32>
    %c1_41 = arith.constant 1 : index
    %136 = memref.load %arg10[%c1_41] : memref<40xf32, #tpu.memory_space<smem>>
    %137 = vector.broadcast %136 : f32 to vector<32x32xf32>
    %138 = arith.mulf %135, %137 : vector<32x32xf32>
    %139 = vector.extract_strided_slice %83 {offsets = [1, 0, 0], sizes = [1, 32, 32], strides = [1, 1, 1]} : vector<8x32x32xf32> to vector<1x32x32xf32>
    %140 = vector.shape_cast %139 : vector<1x32x32xf32> to vector<32x32xf32>
    %c5_42 = arith.constant 5 : index
    %141 = memref.load %arg10[%c5_42] : memref<40xf32, #tpu.memory_space<smem>>
    %142 = vector.broadcast %141 : f32 to vector<32x32xf32>
    %143 = arith.mulf %140, %142 : vector<32x32xf32>
    %144 = arith.addf %138, %143 : vector<32x32xf32>
    %145 = vector.extract_strided_slice %83 {offsets = [2, 0, 0], sizes = [1, 32, 32], strides = [1, 1, 1]} : vector<8x32x32xf32> to vector<1x32x32xf32>
    %146 = vector.shape_cast %145 : vector<1x32x32xf32> to vector<32x32xf32>
    %c9 = arith.constant 9 : index
    %147 = memref.load %arg10[%c9] : memref<40xf32, #tpu.memory_space<smem>>
    %148 = vector.broadcast %147 : f32 to vector<32x32xf32>
    %149 = arith.mulf %146, %148 : vector<32x32xf32>
    %150 = arith.addf %144, %149 : vector<32x32xf32>
    %151 = vector.extract_strided_slice %83 {offsets = [3, 0, 0], sizes = [1, 32, 32], strides = [1, 1, 1]} : vector<8x32x32xf32> to vector<1x32x32xf32>
    %152 = vector.shape_cast %151 : vector<1x32x32xf32> to vector<32x32xf32>
    %c13 = arith.constant 13 : index
    %153 = memref.load %arg10[%c13] : memref<40xf32, #tpu.memory_space<smem>>
    %154 = vector.broadcast %153 : f32 to vector<32x32xf32>
    %155 = arith.mulf %152, %154 : vector<32x32xf32>
    %156 = arith.addf %150, %155 : vector<32x32xf32>
    %157 = vector.extract_strided_slice %83 {offsets = [4, 0, 0], sizes = [1, 32, 32], strides = [1, 1, 1]} : vector<8x32x32xf32> to vector<1x32x32xf32>
    %158 = vector.shape_cast %157 : vector<1x32x32xf32> to vector<32x32xf32>
    %c17 = arith.constant 17 : index
    %159 = memref.load %arg10[%c17] : memref<40xf32, #tpu.memory_space<smem>>
    %160 = vector.broadcast %159 : f32 to vector<32x32xf32>
    %161 = arith.mulf %158, %160 : vector<32x32xf32>
    %162 = arith.addf %156, %161 : vector<32x32xf32>
    %163 = vector.extract_strided_slice %83 {offsets = [5, 0, 0], sizes = [1, 32, 32], strides = [1, 1, 1]} : vector<8x32x32xf32> to vector<1x32x32xf32>
    %164 = vector.shape_cast %163 : vector<1x32x32xf32> to vector<32x32xf32>
    %c21 = arith.constant 21 : index
    %165 = memref.load %arg10[%c21] : memref<40xf32, #tpu.memory_space<smem>>
    %166 = vector.broadcast %165 : f32 to vector<32x32xf32>
    %167 = arith.mulf %164, %166 : vector<32x32xf32>
    %168 = arith.addf %162, %167 : vector<32x32xf32>
    %169 = vector.extract_strided_slice %83 {offsets = [6, 0, 0], sizes = [1, 32, 32], strides = [1, 1, 1]} : vector<8x32x32xf32> to vector<1x32x32xf32>
    %170 = vector.shape_cast %169 : vector<1x32x32xf32> to vector<32x32xf32>
    %c25 = arith.constant 25 : index
    %171 = memref.load %arg10[%c25] : memref<40xf32, #tpu.memory_space<smem>>
    %172 = vector.broadcast %171 : f32 to vector<32x32xf32>
    %173 = arith.mulf %170, %172 : vector<32x32xf32>
    %174 = arith.addf %168, %173 : vector<32x32xf32>
    %175 = vector.extract_strided_slice %83 {offsets = [7, 0, 0], sizes = [1, 32, 32], strides = [1, 1, 1]} : vector<8x32x32xf32> to vector<1x32x32xf32>
    %176 = vector.shape_cast %175 : vector<1x32x32xf32> to vector<32x32xf32>
    %c29 = arith.constant 29 : index
    %177 = memref.load %arg10[%c29] : memref<40xf32, #tpu.memory_space<smem>>
    %178 = vector.broadcast %177 : f32 to vector<32x32xf32>
    %179 = arith.mulf %176, %178 : vector<32x32xf32>
    %180 = arith.addf %174, %179 : vector<32x32xf32>
    %c33 = arith.constant 33 : index
    %181 = memref.load %arg10[%c33] : memref<40xf32, #tpu.memory_space<smem>>
    %182 = vector.broadcast %181 : f32 to vector<32x32xf32>
    %183 = arith.addf %180, %182 : vector<32x32xf32>
    %184 = vector.extract_strided_slice %83 {offsets = [0, 0, 0], sizes = [1, 32, 32], strides = [1, 1, 1]} : vector<8x32x32xf32> to vector<1x32x32xf32>
    %185 = vector.shape_cast %184 : vector<1x32x32xf32> to vector<32x32xf32>
    %c2_43 = arith.constant 2 : index
    %186 = memref.load %arg10[%c2_43] : memref<40xf32, #tpu.memory_space<smem>>
    %187 = vector.broadcast %186 : f32 to vector<32x32xf32>
    %188 = arith.mulf %185, %187 : vector<32x32xf32>
    %189 = vector.extract_strided_slice %83 {offsets = [1, 0, 0], sizes = [1, 32, 32], strides = [1, 1, 1]} : vector<8x32x32xf32> to vector<1x32x32xf32>
    %190 = vector.shape_cast %189 : vector<1x32x32xf32> to vector<32x32xf32>
    %c6_44 = arith.constant 6 : index
    %191 = memref.load %arg10[%c6_44] : memref<40xf32, #tpu.memory_space<smem>>
    %192 = vector.broadcast %191 : f32 to vector<32x32xf32>
    %193 = arith.mulf %190, %192 : vector<32x32xf32>
    %194 = arith.addf %188, %193 : vector<32x32xf32>
    %195 = vector.extract_strided_slice %83 {offsets = [2, 0, 0], sizes = [1, 32, 32], strides = [1, 1, 1]} : vector<8x32x32xf32> to vector<1x32x32xf32>
    %196 = vector.shape_cast %195 : vector<1x32x32xf32> to vector<32x32xf32>
    %c10 = arith.constant 10 : index
    %197 = memref.load %arg10[%c10] : memref<40xf32, #tpu.memory_space<smem>>
    %198 = vector.broadcast %197 : f32 to vector<32x32xf32>
    %199 = arith.mulf %196, %198 : vector<32x32xf32>
    %200 = arith.addf %194, %199 : vector<32x32xf32>
    %201 = vector.extract_strided_slice %83 {offsets = [3, 0, 0], sizes = [1, 32, 32], strides = [1, 1, 1]} : vector<8x32x32xf32> to vector<1x32x32xf32>
    %202 = vector.shape_cast %201 : vector<1x32x32xf32> to vector<32x32xf32>
    %c14 = arith.constant 14 : index
    %203 = memref.load %arg10[%c14] : memref<40xf32, #tpu.memory_space<smem>>
    %204 = vector.broadcast %203 : f32 to vector<32x32xf32>
    %205 = arith.mulf %202, %204 : vector<32x32xf32>
    %206 = arith.addf %200, %205 : vector<32x32xf32>
    %207 = vector.extract_strided_slice %83 {offsets = [4, 0, 0], sizes = [1, 32, 32], strides = [1, 1, 1]} : vector<8x32x32xf32> to vector<1x32x32xf32>
    %208 = vector.shape_cast %207 : vector<1x32x32xf32> to vector<32x32xf32>
    %c18 = arith.constant 18 : index
    %209 = memref.load %arg10[%c18] : memref<40xf32, #tpu.memory_space<smem>>
    %210 = vector.broadcast %209 : f32 to vector<32x32xf32>
    %211 = arith.mulf %208, %210 : vector<32x32xf32>
    %212 = arith.addf %206, %211 : vector<32x32xf32>
    %213 = vector.extract_strided_slice %83 {offsets = [5, 0, 0], sizes = [1, 32, 32], strides = [1, 1, 1]} : vector<8x32x32xf32> to vector<1x32x32xf32>
    %214 = vector.shape_cast %213 : vector<1x32x32xf32> to vector<32x32xf32>
    %c22 = arith.constant 22 : index
    %215 = memref.load %arg10[%c22] : memref<40xf32, #tpu.memory_space<smem>>
    %216 = vector.broadcast %215 : f32 to vector<32x32xf32>
    %217 = arith.mulf %214, %216 : vector<32x32xf32>
    %218 = arith.addf %212, %217 : vector<32x32xf32>
    %219 = vector.extract_strided_slice %83 {offsets = [6, 0, 0], sizes = [1, 32, 32], strides = [1, 1, 1]} : vector<8x32x32xf32> to vector<1x32x32xf32>
    %220 = vector.shape_cast %219 : vector<1x32x32xf32> to vector<32x32xf32>
    %c26 = arith.constant 26 : index
    %221 = memref.load %arg10[%c26] : memref<40xf32, #tpu.memory_space<smem>>
    %222 = vector.broadcast %221 : f32 to vector<32x32xf32>
    %223 = arith.mulf %220, %222 : vector<32x32xf32>
    %224 = arith.addf %218, %223 : vector<32x32xf32>
    %225 = vector.extract_strided_slice %83 {offsets = [7, 0, 0], sizes = [1, 32, 32], strides = [1, 1, 1]} : vector<8x32x32xf32> to vector<1x32x32xf32>
    %226 = vector.shape_cast %225 : vector<1x32x32xf32> to vector<32x32xf32>
    %c30 = arith.constant 30 : index
    %227 = memref.load %arg10[%c30] : memref<40xf32, #tpu.memory_space<smem>>
    %228 = vector.broadcast %227 : f32 to vector<32x32xf32>
    %229 = arith.mulf %226, %228 : vector<32x32xf32>
    %230 = arith.addf %224, %229 : vector<32x32xf32>
    %c34 = arith.constant 34 : index
    %231 = memref.load %arg10[%c34] : memref<40xf32, #tpu.memory_space<smem>>
    %232 = vector.broadcast %231 : f32 to vector<32x32xf32>
    %233 = arith.addf %230, %232 : vector<32x32xf32>
    %234 = vector.extract_strided_slice %83 {offsets = [0, 0, 0], sizes = [1, 32, 32], strides = [1, 1, 1]} : vector<8x32x32xf32> to vector<1x32x32xf32>
    %235 = vector.shape_cast %234 : vector<1x32x32xf32> to vector<32x32xf32>
    %c3_45 = arith.constant 3 : index
    %236 = memref.load %arg10[%c3_45] : memref<40xf32, #tpu.memory_space<smem>>
    %237 = vector.broadcast %236 : f32 to vector<32x32xf32>
    %238 = arith.mulf %235, %237 : vector<32x32xf32>
    %239 = vector.extract_strided_slice %83 {offsets = [1, 0, 0], sizes = [1, 32, 32], strides = [1, 1, 1]} : vector<8x32x32xf32> to vector<1x32x32xf32>
    %240 = vector.shape_cast %239 : vector<1x32x32xf32> to vector<32x32xf32>
    %c7 = arith.constant 7 : index
    %241 = memref.load %arg10[%c7] : memref<40xf32, #tpu.memory_space<smem>>
    %242 = vector.broadcast %241 : f32 to vector<32x32xf32>
    %243 = arith.mulf %240, %242 : vector<32x32xf32>
    %244 = arith.addf %238, %243 : vector<32x32xf32>
    %245 = vector.extract_strided_slice %83 {offsets = [2, 0, 0], sizes = [1, 32, 32], strides = [1, 1, 1]} : vector<8x32x32xf32> to vector<1x32x32xf32>
    %246 = vector.shape_cast %245 : vector<1x32x32xf32> to vector<32x32xf32>
    %c11 = arith.constant 11 : index
    %247 = memref.load %arg10[%c11] : memref<40xf32, #tpu.memory_space<smem>>
    %248 = vector.broadcast %247 : f32 to vector<32x32xf32>
    %249 = arith.mulf %246, %248 : vector<32x32xf32>
    %250 = arith.addf %244, %249 : vector<32x32xf32>
    %251 = vector.extract_strided_slice %83 {offsets = [3, 0, 0], sizes = [1, 32, 32], strides = [1, 1, 1]} : vector<8x32x32xf32> to vector<1x32x32xf32>
    %252 = vector.shape_cast %251 : vector<1x32x32xf32> to vector<32x32xf32>
    %c15 = arith.constant 15 : index
    %253 = memref.load %arg10[%c15] : memref<40xf32, #tpu.memory_space<smem>>
    %254 = vector.broadcast %253 : f32 to vector<32x32xf32>
    %255 = arith.mulf %252, %254 : vector<32x32xf32>
    %256 = arith.addf %250, %255 : vector<32x32xf32>
    %257 = vector.extract_strided_slice %83 {offsets = [4, 0, 0], sizes = [1, 32, 32], strides = [1, 1, 1]} : vector<8x32x32xf32> to vector<1x32x32xf32>
    %258 = vector.shape_cast %257 : vector<1x32x32xf32> to vector<32x32xf32>
    %c19 = arith.constant 19 : index
    %259 = memref.load %arg10[%c19] : memref<40xf32, #tpu.memory_space<smem>>
    %260 = vector.broadcast %259 : f32 to vector<32x32xf32>
    %261 = arith.mulf %258, %260 : vector<32x32xf32>
    %262 = arith.addf %256, %261 : vector<32x32xf32>
    %263 = vector.extract_strided_slice %83 {offsets = [5, 0, 0], sizes = [1, 32, 32], strides = [1, 1, 1]} : vector<8x32x32xf32> to vector<1x32x32xf32>
    %264 = vector.shape_cast %263 : vector<1x32x32xf32> to vector<32x32xf32>
    %c23 = arith.constant 23 : index
    %265 = memref.load %arg10[%c23] : memref<40xf32, #tpu.memory_space<smem>>
    %266 = vector.broadcast %265 : f32 to vector<32x32xf32>
    %267 = arith.mulf %264, %266 : vector<32x32xf32>
    %268 = arith.addf %262, %267 : vector<32x32xf32>
    %269 = vector.extract_strided_slice %83 {offsets = [6, 0, 0], sizes = [1, 32, 32], strides = [1, 1, 1]} : vector<8x32x32xf32> to vector<1x32x32xf32>
    %270 = vector.shape_cast %269 : vector<1x32x32xf32> to vector<32x32xf32>
    %c27 = arith.constant 27 : index
    %271 = memref.load %arg10[%c27] : memref<40xf32, #tpu.memory_space<smem>>
    %272 = vector.broadcast %271 : f32 to vector<32x32xf32>
    %273 = arith.mulf %270, %272 : vector<32x32xf32>
    %274 = arith.addf %268, %273 : vector<32x32xf32>
    %275 = vector.extract_strided_slice %83 {offsets = [7, 0, 0], sizes = [1, 32, 32], strides = [1, 1, 1]} : vector<8x32x32xf32> to vector<1x32x32xf32>
    %276 = vector.shape_cast %275 : vector<1x32x32xf32> to vector<32x32xf32>
    %c31 = arith.constant 31 : index
    %277 = memref.load %arg10[%c31] : memref<40xf32, #tpu.memory_space<smem>>
    %278 = vector.broadcast %277 : f32 to vector<32x32xf32>
    %279 = arith.mulf %276, %278 : vector<32x32xf32>
    %280 = arith.addf %274, %279 : vector<32x32xf32>
    %c35 = arith.constant 35 : index
    %281 = memref.load %arg10[%c35] : memref<40xf32, #tpu.memory_space<smem>>
    %282 = vector.broadcast %281 : f32 to vector<32x32xf32>
    %283 = arith.addf %280, %282 : vector<32x32xf32>
    %cst_46 = arith.constant dense<0.000000e+00> : vector<32xf32>
    %284 = vector.multi_reduction <add>, %16, %cst_46 [1] : vector<32x32xf32> to vector<32xf32>
    %285 = vector.shape_cast %284 : vector<32xf32> to vector<32x1xf32>
    %cst_47 = arith.constant 3.200000e+01 : f32
    %286 = vector.broadcast %cst_47 : f32 to vector<32x1xf32>
    %287 = arith.divf %285, %286 : vector<32x1xf32>
    %288 = vector.broadcast %287 : vector<32x1xf32> to vector<32x32xf32>
    %289 = arith.subf %16, %288 : vector<32x32xf32>
    %290 = arith.mulf %289, %289 : vector<32x32xf32>
    %cst_48 = arith.constant dense<0.000000e+00> : vector<32xf32>
    %291 = vector.multi_reduction <add>, %290, %cst_48 [1] : vector<32x32xf32> to vector<32xf32>
    %292 = vector.shape_cast %291 : vector<32xf32> to vector<32x1xf32>
    %cst_49 = arith.constant 3.200000e+01 : f32
    %293 = vector.broadcast %cst_49 : f32 to vector<32x1xf32>
    %294 = arith.divf %292, %293 : vector<32x1xf32>
    %295 = vector.broadcast %287 : vector<32x1xf32> to vector<32x32xf32>
    %296 = arith.subf %16, %295 : vector<32x32xf32>
    %cst_50 = arith.constant 9.99999974E-6 : f32
    %297 = vector.broadcast %cst_50 : f32 to vector<32x1xf32>
    %298 = arith.addf %294, %297 : vector<32x1xf32>
    %299 = math.rsqrt %298 : vector<32x1xf32>
    %300 = vector.broadcast %299 : vector<32x1xf32> to vector<32x32xf32>
    %301 = arith.mulf %296, %300 : vector<32x32xf32>
    %302 = arith.mulf %301, %45 : vector<32x32xf32>
    %303 = arith.addf %302, %46 : vector<32x32xf32>
    %304 = vector.broadcast %4 : vector<32x1xf32> to vector<32x32xf32>
    %305 = arith.mulf %303, %304 : vector<32x32xf32>
    %cst_51 = arith.constant dense<0.000000e+00> : vector<32x96xf32>
    %306 = tpu.matmul %305, %5, %cst_51 {dimension_numbers = #tpu.dot_dimension_numbers<[1], [0], [0], [1], [0, 0, 1, 1], [], []>} : vector<32x32xf32>, vector<32x96xf32>, vector<32x96xf32> -> vector<32x96xf32>
    %307 = vector.broadcast %9 : vector<1x96xf32> to vector<32x96xf32>
    %308 = arith.addf %306, %307 : vector<32x96xf32>
    %309 = vector.extract_strided_slice %308 {offsets = [0, 0], sizes = [32, 8], strides = [1, 1]} : vector<32x96xf32> to vector<32x8xf32>
    %310 = vector.extract_strided_slice %308 {offsets = [0, 32], sizes = [32, 8], strides = [1, 1]} : vector<32x96xf32> to vector<32x8xf32>
    %311 = vector.extract_strided_slice %308 {offsets = [0, 64], sizes = [32, 8], strides = [1, 1]} : vector<32x96xf32> to vector<32x8xf32>
    %cst_52 = arith.constant dense<0.000000e+00> : vector<32xf32>
    %312 = vector.multi_reduction <add>, %309, %cst_52 [1] : vector<32x8xf32> to vector<32xf32>
    %313 = vector.shape_cast %312 : vector<32xf32> to vector<32x1xf32>
    %cst_53 = arith.constant 8.000000e+00 : f32
    %314 = vector.broadcast %cst_53 : f32 to vector<32x1xf32>
    %315 = arith.divf %313, %314 : vector<32x1xf32>
    %316 = vector.broadcast %315 : vector<32x1xf32> to vector<32x8xf32>
    %317 = arith.subf %309, %316 : vector<32x8xf32>
    %318 = arith.mulf %317, %317 : vector<32x8xf32>
    %cst_54 = arith.constant dense<0.000000e+00> : vector<32xf32>
    %319 = vector.multi_reduction <add>, %318, %cst_54 [1] : vector<32x8xf32> to vector<32xf32>
    %320 = vector.shape_cast %319 : vector<32xf32> to vector<32x1xf32>
    %cst_55 = arith.constant 8.000000e+00 : f32
    %321 = vector.broadcast %cst_55 : f32 to vector<32x1xf32>
    %322 = arith.divf %320, %321 : vector<32x1xf32>
    %323 = vector.broadcast %315 : vector<32x1xf32> to vector<32x8xf32>
    %324 = arith.subf %309, %323 : vector<32x8xf32>
    %cst_56 = arith.constant 9.99999974E-6 : f32
    %325 = vector.broadcast %cst_56 : f32 to vector<32x1xf32>
    %326 = arith.addf %322, %325 : vector<32x1xf32>
    %327 = math.rsqrt %326 : vector<32x1xf32>
    %328 = vector.broadcast %327 : vector<32x1xf32> to vector<32x8xf32>
    %329 = arith.mulf %324, %328 : vector<32x8xf32>
    %330 = vector.broadcast %11 : vector<1x8xf32> to vector<32x8xf32>
    %331 = arith.mulf %329, %330 : vector<32x8xf32>
    %332 = vector.broadcast %12 : vector<1x8xf32> to vector<32x8xf32>
    %333 = arith.addf %331, %332 : vector<32x8xf32>
    %cst_57 = arith.constant dense<0.000000e+00> : vector<32xf32>
    %334 = vector.multi_reduction <add>, %310, %cst_57 [1] : vector<32x8xf32> to vector<32xf32>
    %335 = vector.shape_cast %334 : vector<32xf32> to vector<32x1xf32>
    %cst_58 = arith.constant 8.000000e+00 : f32
    %336 = vector.broadcast %cst_58 : f32 to vector<32x1xf32>
    %337 = arith.divf %335, %336 : vector<32x1xf32>
    %338 = vector.broadcast %337 : vector<32x1xf32> to vector<32x8xf32>
    %339 = arith.subf %310, %338 : vector<32x8xf32>
    %340 = arith.mulf %339, %339 : vector<32x8xf32>
    %cst_59 = arith.constant dense<0.000000e+00> : vector<32xf32>
    %341 = vector.multi_reduction <add>, %340, %cst_59 [1] : vector<32x8xf32> to vector<32xf32>
    %342 = vector.shape_cast %341 : vector<32xf32> to vector<32x1xf32>
    %cst_60 = arith.constant 8.000000e+00 : f32
    %343 = vector.broadcast %cst_60 : f32 to vector<32x1xf32>
    %344 = arith.divf %342, %343 : vector<32x1xf32>
    %345 = vector.broadcast %337 : vector<32x1xf32> to vector<32x8xf32>
    %346 = arith.subf %310, %345 : vector<32x8xf32>
    %cst_61 = arith.constant 9.99999974E-6 : f32
    %347 = vector.broadcast %cst_61 : f32 to vector<32x1xf32>
    %348 = arith.addf %344, %347 : vector<32x1xf32>
    %349 = math.rsqrt %348 : vector<32x1xf32>
    %350 = vector.broadcast %349 : vector<32x1xf32> to vector<32x8xf32>
    %351 = arith.mulf %346, %350 : vector<32x8xf32>
    %352 = vector.broadcast %13 : vector<1x8xf32> to vector<32x8xf32>
    %353 = arith.mulf %351, %352 : vector<32x8xf32>
    %354 = vector.broadcast %14 : vector<1x8xf32> to vector<32x8xf32>
    %355 = arith.addf %353, %354 : vector<32x8xf32>
    "tpu.trace_start"() <{level = 10 : i32, message = "qd,kd->qk"}> : () -> ()
    %cst_62 = arith.constant dense<0.000000e+00> : vector<32x32xf32>
    %356 = tpu.matmul %333, %355, %cst_62 {dimension_numbers = #tpu.dot_dimension_numbers<[1], [1], [0], [0], [0, 0, 1, 0], [], []>} : vector<32x8xf32>, vector<32x8xf32>, vector<32x32xf32> -> vector<32x32xf32>
    "tpu.trace_stop"() : () -> ()
    %cst_63 = arith.constant 0.353553385 : f32
    %357 = vector.broadcast %cst_63 : f32 to vector<32x32xf32>
    %358 = arith.mulf %356, %357 : vector<32x32xf32>
    %359 = arith.addf %358, %133 : vector<32x32xf32>
    %360 = arith.addf %359, %3 : vector<32x32xf32>
    %cst_64 = arith.constant dense<0xFF800000> : vector<32xf32>
    %361 = vector.multi_reduction <maximumf>, %360, %cst_64 [1] : vector<32x32xf32> to vector<32xf32>
    %362 = vector.shape_cast %361 : vector<32xf32> to vector<32x1xf32>
    %363 = vector.broadcast %362 : vector<32x1xf32> to vector<32x32xf32>
    %364 = arith.subf %360, %363 : vector<32x32xf32>
    %365 = math.exp %364 : vector<32x32xf32>
    %cst_65 = arith.constant dense<0.000000e+00> : vector<32xf32>
    %366 = vector.multi_reduction <add>, %365, %cst_65 [1] : vector<32x32xf32> to vector<32xf32>
    %367 = vector.shape_cast %366 : vector<32xf32> to vector<32x1xf32>
    %368 = tpu.reciprocal %367 {approx = true} : vector<32x1xf32> -> vector<32x1xf32>
    %369 = vector.broadcast %368 : vector<32x1xf32> to vector<32x32xf32>
    %370 = arith.mulf %365, %369 : vector<32x32xf32>
    %cst_66 = arith.constant dense<0.000000e+00> : vector<32x8xf32>
    %371 = tpu.matmul %370, %311, %cst_66 {dimension_numbers = #tpu.dot_dimension_numbers<[1], [0], [0], [1], [0, 0, 1, 1], [], []>} : vector<32x32xf32>, vector<32x8xf32>, vector<32x8xf32> -> vector<32x8xf32>
    %c0_67 = arith.constant 0 : index
    %c128 = arith.constant 128 : index
    %372 = vector.load %arg7[%c0_67, %c128] : memref<32x512xf32, #tpu.memory_space<vmem>>, vector<8x32xf32>
    %cst_68 = arith.constant dense<0.000000e+00> : vector<32x32xf32>
    %373 = tpu.matmul %371, %372, %cst_68 {dimension_numbers = #tpu.dot_dimension_numbers<[1], [0], [0], [1], [0, 0, 1, 1], [], []>} : vector<32x8xf32>, vector<8x32xf32>, vector<32x32xf32> -> vector<32x32xf32>
    %374 = vector.extract_strided_slice %308 {offsets = [0, 8], sizes = [32, 8], strides = [1, 1]} : vector<32x96xf32> to vector<32x8xf32>
    %375 = vector.extract_strided_slice %308 {offsets = [0, 40], sizes = [32, 8], strides = [1, 1]} : vector<32x96xf32> to vector<32x8xf32>
    %376 = vector.extract_strided_slice %308 {offsets = [0, 72], sizes = [32, 8], strides = [1, 1]} : vector<32x96xf32> to vector<32x8xf32>
    %cst_69 = arith.constant dense<0.000000e+00> : vector<32xf32>
    %377 = vector.multi_reduction <add>, %374, %cst_69 [1] : vector<32x8xf32> to vector<32xf32>
    %378 = vector.shape_cast %377 : vector<32xf32> to vector<32x1xf32>
    %cst_70 = arith.constant 8.000000e+00 : f32
    %379 = vector.broadcast %cst_70 : f32 to vector<32x1xf32>
    %380 = arith.divf %378, %379 : vector<32x1xf32>
    %381 = vector.broadcast %380 : vector<32x1xf32> to vector<32x8xf32>
    %382 = arith.subf %374, %381 : vector<32x8xf32>
    %383 = arith.mulf %382, %382 : vector<32x8xf32>
    %cst_71 = arith.constant dense<0.000000e+00> : vector<32xf32>
    %384 = vector.multi_reduction <add>, %383, %cst_71 [1] : vector<32x8xf32> to vector<32xf32>
    %385 = vector.shape_cast %384 : vector<32xf32> to vector<32x1xf32>
    %cst_72 = arith.constant 8.000000e+00 : f32
    %386 = vector.broadcast %cst_72 : f32 to vector<32x1xf32>
    %387 = arith.divf %385, %386 : vector<32x1xf32>
    %388 = vector.broadcast %380 : vector<32x1xf32> to vector<32x8xf32>
    %389 = arith.subf %374, %388 : vector<32x8xf32>
    %cst_73 = arith.constant 9.99999974E-6 : f32
    %390 = vector.broadcast %cst_73 : f32 to vector<32x1xf32>
    %391 = arith.addf %387, %390 : vector<32x1xf32>
    %392 = math.rsqrt %391 : vector<32x1xf32>
    %393 = vector.broadcast %392 : vector<32x1xf32> to vector<32x8xf32>
    %394 = arith.mulf %389, %393 : vector<32x8xf32>
    %395 = vector.broadcast %11 : vector<1x8xf32> to vector<32x8xf32>
    %396 = arith.mulf %394, %395 : vector<32x8xf32>
    %397 = vector.broadcast %12 : vector<1x8xf32> to vector<32x8xf32>
    %398 = arith.addf %396, %397 : vector<32x8xf32>
    %cst_74 = arith.constant dense<0.000000e+00> : vector<32xf32>
    %399 = vector.multi_reduction <add>, %375, %cst_74 [1] : vector<32x8xf32> to vector<32xf32>
    %400 = vector.shape_cast %399 : vector<32xf32> to vector<32x1xf32>
    %cst_75 = arith.constant 8.000000e+00 : f32
    %401 = vector.broadcast %cst_75 : f32 to vector<32x1xf32>
    %402 = arith.divf %400, %401 : vector<32x1xf32>
    %403 = vector.broadcast %402 : vector<32x1xf32> to vector<32x8xf32>
    %404 = arith.subf %375, %403 : vector<32x8xf32>
    %405 = arith.mulf %404, %404 : vector<32x8xf32>
    %cst_76 = arith.constant dense<0.000000e+00> : vector<32xf32>
    %406 = vector.multi_reduction <add>, %405, %cst_76 [1] : vector<32x8xf32> to vector<32xf32>
    %407 = vector.shape_cast %406 : vector<32xf32> to vector<32x1xf32>
    %cst_77 = arith.constant 8.000000e+00 : f32
    %408 = vector.broadcast %cst_77 : f32 to vector<32x1xf32>
    %409 = arith.divf %407, %408 : vector<32x1xf32>
    %410 = vector.broadcast %402 : vector<32x1xf32> to vector<32x8xf32>
    %411 = arith.subf %375, %410 : vector<32x8xf32>
    %cst_78 = arith.constant 9.99999974E-6 : f32
    %412 = vector.broadcast %cst_78 : f32 to vector<32x1xf32>
    %413 = arith.addf %409, %412 : vector<32x1xf32>
    %414 = math.rsqrt %413 : vector<32x1xf32>
    %415 = vector.broadcast %414 : vector<32x1xf32> to vector<32x8xf32>
    %416 = arith.mulf %411, %415 : vector<32x8xf32>
    %417 = vector.broadcast %13 : vector<1x8xf32> to vector<32x8xf32>
    %418 = arith.mulf %416, %417 : vector<32x8xf32>
    %419 = vector.broadcast %14 : vector<1x8xf32> to vector<32x8xf32>
    %420 = arith.addf %418, %419 : vector<32x8xf32>
    "tpu.trace_start"() <{level = 10 : i32, message = "qd,kd->qk"}> : () -> ()
    %cst_79 = arith.constant dense<0.000000e+00> : vector<32x32xf32>
    %421 = tpu.matmul %398, %420, %cst_79 {dimension_numbers = #tpu.dot_dimension_numbers<[1], [1], [0], [0], [0, 0, 1, 0], [], []>} : vector<32x8xf32>, vector<32x8xf32>, vector<32x32xf32> -> vector<32x32xf32>
    "tpu.trace_stop"() : () -> ()
    %cst_80 = arith.constant 0.353553385 : f32
    %422 = vector.broadcast %cst_80 : f32 to vector<32x32xf32>
    %423 = arith.mulf %421, %422 : vector<32x32xf32>
    %424 = arith.addf %423, %183 : vector<32x32xf32>
    %425 = arith.addf %424, %3 : vector<32x32xf32>
    %cst_81 = arith.constant dense<0xFF800000> : vector<32xf32>
    %426 = vector.multi_reduction <maximumf>, %425, %cst_81 [1] : vector<32x32xf32> to vector<32xf32>
    %427 = vector.shape_cast %426 : vector<32xf32> to vector<32x1xf32>
    %428 = vector.broadcast %427 : vector<32x1xf32> to vector<32x32xf32>
    %429 = arith.subf %425, %428 : vector<32x32xf32>
    %430 = math.exp %429 : vector<32x32xf32>
    %cst_82 = arith.constant dense<0.000000e+00> : vector<32xf32>
    %431 = vector.multi_reduction <add>, %430, %cst_82 [1] : vector<32x32xf32> to vector<32xf32>
    %432 = vector.shape_cast %431 : vector<32xf32> to vector<32x1xf32>
    %433 = tpu.reciprocal %432 {approx = true} : vector<32x1xf32> -> vector<32x1xf32>
    %434 = vector.broadcast %433 : vector<32x1xf32> to vector<32x32xf32>
    %435 = arith.mulf %430, %434 : vector<32x32xf32>
    %cst_83 = arith.constant dense<0.000000e+00> : vector<32x8xf32>
    %436 = tpu.matmul %435, %376, %cst_83 {dimension_numbers = #tpu.dot_dimension_numbers<[1], [0], [0], [1], [0, 0, 1, 1], [], []>} : vector<32x32xf32>, vector<32x8xf32>, vector<32x8xf32> -> vector<32x8xf32>
    %c8_84 = arith.constant 8 : index
    %c128_85 = arith.constant 128 : index
    %437 = vector.load %arg7[%c8_84, %c128_85] : memref<32x512xf32, #tpu.memory_space<vmem>>, vector<8x32xf32>
    %cst_86 = arith.constant dense<0.000000e+00> : vector<32x32xf32>
    %438 = tpu.matmul %436, %437, %cst_86 {dimension_numbers = #tpu.dot_dimension_numbers<[1], [0], [0], [1], [0, 0, 1, 1], [], []>} : vector<32x8xf32>, vector<8x32xf32>, vector<32x32xf32> -> vector<32x32xf32>
    %439 = arith.addf %373, %438 : vector<32x32xf32>
    %440 = vector.extract_strided_slice %308 {offsets = [0, 16], sizes = [32, 8], strides = [1, 1]} : vector<32x96xf32> to vector<32x8xf32>
    %441 = vector.extract_strided_slice %308 {offsets = [0, 48], sizes = [32, 8], strides = [1, 1]} : vector<32x96xf32> to vector<32x8xf32>
    %442 = vector.extract_strided_slice %308 {offsets = [0, 80], sizes = [32, 8], strides = [1, 1]} : vector<32x96xf32> to vector<32x8xf32>
    %cst_87 = arith.constant dense<0.000000e+00> : vector<32xf32>
    %443 = vector.multi_reduction <add>, %440, %cst_87 [1] : vector<32x8xf32> to vector<32xf32>
    %444 = vector.shape_cast %443 : vector<32xf32> to vector<32x1xf32>
    %cst_88 = arith.constant 8.000000e+00 : f32
    %445 = vector.broadcast %cst_88 : f32 to vector<32x1xf32>
    %446 = arith.divf %444, %445 : vector<32x1xf32>
    %447 = vector.broadcast %446 : vector<32x1xf32> to vector<32x8xf32>
    %448 = arith.subf %440, %447 : vector<32x8xf32>
    %449 = arith.mulf %448, %448 : vector<32x8xf32>
    %cst_89 = arith.constant dense<0.000000e+00> : vector<32xf32>
    %450 = vector.multi_reduction <add>, %449, %cst_89 [1] : vector<32x8xf32> to vector<32xf32>
    %451 = vector.shape_cast %450 : vector<32xf32> to vector<32x1xf32>
    %cst_90 = arith.constant 8.000000e+00 : f32
    %452 = vector.broadcast %cst_90 : f32 to vector<32x1xf32>
    %453 = arith.divf %451, %452 : vector<32x1xf32>
    %454 = vector.broadcast %446 : vector<32x1xf32> to vector<32x8xf32>
    %455 = arith.subf %440, %454 : vector<32x8xf32>
    %cst_91 = arith.constant 9.99999974E-6 : f32
    %456 = vector.broadcast %cst_91 : f32 to vector<32x1xf32>
    %457 = arith.addf %453, %456 : vector<32x1xf32>
    %458 = math.rsqrt %457 : vector<32x1xf32>
    %459 = vector.broadcast %458 : vector<32x1xf32> to vector<32x8xf32>
    %460 = arith.mulf %455, %459 : vector<32x8xf32>
    %461 = vector.broadcast %11 : vector<1x8xf32> to vector<32x8xf32>
    %462 = arith.mulf %460, %461 : vector<32x8xf32>
    %463 = vector.broadcast %12 : vector<1x8xf32> to vector<32x8xf32>
    %464 = arith.addf %462, %463 : vector<32x8xf32>
    %cst_92 = arith.constant dense<0.000000e+00> : vector<32xf32>
    %465 = vector.multi_reduction <add>, %441, %cst_92 [1] : vector<32x8xf32> to vector<32xf32>
    %466 = vector.shape_cast %465 : vector<32xf32> to vector<32x1xf32>
    %cst_93 = arith.constant 8.000000e+00 : f32
    %467 = vector.broadcast %cst_93 : f32 to vector<32x1xf32>
    %468 = arith.divf %466, %467 : vector<32x1xf32>
    %469 = vector.broadcast %468 : vector<32x1xf32> to vector<32x8xf32>
    %470 = arith.subf %441, %469 : vector<32x8xf32>
    %471 = arith.mulf %470, %470 : vector<32x8xf32>
    %cst_94 = arith.constant dense<0.000000e+00> : vector<32xf32>
    %472 = vector.multi_reduction <add>, %471, %cst_94 [1] : vector<32x8xf32> to vector<32xf32>
    %473 = vector.shape_cast %472 : vector<32xf32> to vector<32x1xf32>
    %cst_95 = arith.constant 8.000000e+00 : f32
    %474 = vector.broadcast %cst_95 : f32 to vector<32x1xf32>
    %475 = arith.divf %473, %474 : vector<32x1xf32>
    %476 = vector.broadcast %468 : vector<32x1xf32> to vector<32x8xf32>
    %477 = arith.subf %441, %476 : vector<32x8xf32>
    %cst_96 = arith.constant 9.99999974E-6 : f32
    %478 = vector.broadcast %cst_96 : f32 to vector<32x1xf32>
    %479 = arith.addf %475, %478 : vector<32x1xf32>
    %480 = math.rsqrt %479 : vector<32x1xf32>
    %481 = vector.broadcast %480 : vector<32x1xf32> to vector<32x8xf32>
    %482 = arith.mulf %477, %481 : vector<32x8xf32>
    %483 = vector.broadcast %13 : vector<1x8xf32> to vector<32x8xf32>
    %484 = arith.mulf %482, %483 : vector<32x8xf32>
    %485 = vector.broadcast %14 : vector<1x8xf32> to vector<32x8xf32>
    %486 = arith.addf %484, %485 : vector<32x8xf32>
    "tpu.trace_start"() <{level = 10 : i32, message = "qd,kd->qk"}> : () -> ()
    %cst_97 = arith.constant dense<0.000000e+00> : vector<32x32xf32>
    %487 = tpu.matmul %464, %486, %cst_97 {dimension_numbers = #tpu.dot_dimension_numbers<[1], [1], [0], [0], [0, 0, 1, 0], [], []>} : vector<32x8xf32>, vector<32x8xf32>, vector<32x32xf32> -> vector<32x32xf32>
    "tpu.trace_stop"() : () -> ()
    %cst_98 = arith.constant 0.353553385 : f32
    %488 = vector.broadcast %cst_98 : f32 to vector<32x32xf32>
    %489 = arith.mulf %487, %488 : vector<32x32xf32>
    %490 = arith.addf %489, %233 : vector<32x32xf32>
    %491 = arith.addf %490, %3 : vector<32x32xf32>
    %cst_99 = arith.constant dense<0xFF800000> : vector<32xf32>
    %492 = vector.multi_reduction <maximumf>, %491, %cst_99 [1] : vector<32x32xf32> to vector<32xf32>
    %493 = vector.shape_cast %492 : vector<32xf32> to vector<32x1xf32>
    %494 = vector.broadcast %493 : vector<32x1xf32> to vector<32x32xf32>
    %495 = arith.subf %491, %494 : vector<32x32xf32>
    %496 = math.exp %495 : vector<32x32xf32>
    %cst_100 = arith.constant dense<0.000000e+00> : vector<32xf32>
    %497 = vector.multi_reduction <add>, %496, %cst_100 [1] : vector<32x32xf32> to vector<32xf32>
    %498 = vector.shape_cast %497 : vector<32xf32> to vector<32x1xf32>
    %499 = tpu.reciprocal %498 {approx = true} : vector<32x1xf32> -> vector<32x1xf32>
    %500 = vector.broadcast %499 : vector<32x1xf32> to vector<32x32xf32>
    %501 = arith.mulf %496, %500 : vector<32x32xf32>
    %cst_101 = arith.constant dense<0.000000e+00> : vector<32x8xf32>
    %502 = tpu.matmul %501, %442, %cst_101 {dimension_numbers = #tpu.dot_dimension_numbers<[1], [0], [0], [1], [0, 0, 1, 1], [], []>} : vector<32x32xf32>, vector<32x8xf32>, vector<32x8xf32> -> vector<32x8xf32>
    %c16_102 = arith.constant 16 : index
    %c128_103 = arith.constant 128 : index
    %503 = vector.load %arg7[%c16_102, %c128_103] : memref<32x512xf32, #tpu.memory_space<vmem>>, vector<8x32xf32>
    %cst_104 = arith.constant dense<0.000000e+00> : vector<32x32xf32>
    %504 = tpu.matmul %502, %503, %cst_104 {dimension_numbers = #tpu.dot_dimension_numbers<[1], [0], [0], [1], [0, 0, 1, 1], [], []>} : vector<32x8xf32>, vector<8x32xf32>, vector<32x32xf32> -> vector<32x32xf32>
    %505 = arith.addf %439, %504 : vector<32x32xf32>
    %506 = vector.extract_strided_slice %308 {offsets = [0, 24], sizes = [32, 8], strides = [1, 1]} : vector<32x96xf32> to vector<32x8xf32>
    %507 = vector.extract_strided_slice %308 {offsets = [0, 56], sizes = [32, 8], strides = [1, 1]} : vector<32x96xf32> to vector<32x8xf32>
    %508 = vector.extract_strided_slice %308 {offsets = [0, 88], sizes = [32, 8], strides = [1, 1]} : vector<32x96xf32> to vector<32x8xf32>
    %cst_105 = arith.constant dense<0.000000e+00> : vector<32xf32>
    %509 = vector.multi_reduction <add>, %506, %cst_105 [1] : vector<32x8xf32> to vector<32xf32>
    %510 = vector.shape_cast %509 : vector<32xf32> to vector<32x1xf32>
    %cst_106 = arith.constant 8.000000e+00 : f32
    %511 = vector.broadcast %cst_106 : f32 to vector<32x1xf32>
    %512 = arith.divf %510, %511 : vector<32x1xf32>
    %513 = vector.broadcast %512 : vector<32x1xf32> to vector<32x8xf32>
    %514 = arith.subf %506, %513 : vector<32x8xf32>
    %515 = arith.mulf %514, %514 : vector<32x8xf32>
    %cst_107 = arith.constant dense<0.000000e+00> : vector<32xf32>
    %516 = vector.multi_reduction <add>, %515, %cst_107 [1] : vector<32x8xf32> to vector<32xf32>
    %517 = vector.shape_cast %516 : vector<32xf32> to vector<32x1xf32>
    %cst_108 = arith.constant 8.000000e+00 : f32
    %518 = vector.broadcast %cst_108 : f32 to vector<32x1xf32>
    %519 = arith.divf %517, %518 : vector<32x1xf32>
    %520 = vector.broadcast %512 : vector<32x1xf32> to vector<32x8xf32>
    %521 = arith.subf %506, %520 : vector<32x8xf32>
    %cst_109 = arith.constant 9.99999974E-6 : f32
    %522 = vector.broadcast %cst_109 : f32 to vector<32x1xf32>
    %523 = arith.addf %519, %522 : vector<32x1xf32>
    %524 = math.rsqrt %523 : vector<32x1xf32>
    %525 = vector.broadcast %524 : vector<32x1xf32> to vector<32x8xf32>
    %526 = arith.mulf %521, %525 : vector<32x8xf32>
    %527 = vector.broadcast %11 : vector<1x8xf32> to vector<32x8xf32>
    %528 = arith.mulf %526, %527 : vector<32x8xf32>
    %529 = vector.broadcast %12 : vector<1x8xf32> to vector<32x8xf32>
    %530 = arith.addf %528, %529 : vector<32x8xf32>
    %cst_110 = arith.constant dense<0.000000e+00> : vector<32xf32>
    %531 = vector.multi_reduction <add>, %507, %cst_110 [1] : vector<32x8xf32> to vector<32xf32>
    %532 = vector.shape_cast %531 : vector<32xf32> to vector<32x1xf32>
    %cst_111 = arith.constant 8.000000e+00 : f32
    %533 = vector.broadcast %cst_111 : f32 to vector<32x1xf32>
    %534 = arith.divf %532, %533 : vector<32x1xf32>
    %535 = vector.broadcast %534 : vector<32x1xf32> to vector<32x8xf32>
    %536 = arith.subf %507, %535 : vector<32x8xf32>
    %537 = arith.mulf %536, %536 : vector<32x8xf32>
    %cst_112 = arith.constant dense<0.000000e+00> : vector<32xf32>
    %538 = vector.multi_reduction <add>, %537, %cst_112 [1] : vector<32x8xf32> to vector<32xf32>
    %539 = vector.shape_cast %538 : vector<32xf32> to vector<32x1xf32>
    %cst_113 = arith.constant 8.000000e+00 : f32
    %540 = vector.broadcast %cst_113 : f32 to vector<32x1xf32>
    %541 = arith.divf %539, %540 : vector<32x1xf32>
    %542 = vector.broadcast %534 : vector<32x1xf32> to vector<32x8xf32>
    %543 = arith.subf %507, %542 : vector<32x8xf32>
    %cst_114 = arith.constant 9.99999974E-6 : f32
    %544 = vector.broadcast %cst_114 : f32 to vector<32x1xf32>
    %545 = arith.addf %541, %544 : vector<32x1xf32>
    %546 = math.rsqrt %545 : vector<32x1xf32>
    %547 = vector.broadcast %546 : vector<32x1xf32> to vector<32x8xf32>
    %548 = arith.mulf %543, %547 : vector<32x8xf32>
    %549 = vector.broadcast %13 : vector<1x8xf32> to vector<32x8xf32>
    %550 = arith.mulf %548, %549 : vector<32x8xf32>
    %551 = vector.broadcast %14 : vector<1x8xf32> to vector<32x8xf32>
    %552 = arith.addf %550, %551 : vector<32x8xf32>
    "tpu.trace_start"() <{level = 10 : i32, message = "qd,kd->qk"}> : () -> ()
    %cst_115 = arith.constant dense<0.000000e+00> : vector<32x32xf32>
    %553 = tpu.matmul %530, %552, %cst_115 {dimension_numbers = #tpu.dot_dimension_numbers<[1], [1], [0], [0], [0, 0, 1, 0], [], []>} : vector<32x8xf32>, vector<32x8xf32>, vector<32x32xf32> -> vector<32x32xf32>
    "tpu.trace_stop"() : () -> ()
    %cst_116 = arith.constant 0.353553385 : f32
    %554 = vector.broadcast %cst_116 : f32 to vector<32x32xf32>
    %555 = arith.mulf %553, %554 : vector<32x32xf32>
    %556 = arith.addf %555, %283 : vector<32x32xf32>
    %557 = arith.addf %556, %3 : vector<32x32xf32>
    %cst_117 = arith.constant dense<0xFF800000> : vector<32xf32>
    %558 = vector.multi_reduction <maximumf>, %557, %cst_117 [1] : vector<32x32xf32> to vector<32xf32>
    %559 = vector.shape_cast %558 : vector<32xf32> to vector<32x1xf32>
    %560 = vector.broadcast %559 : vector<32x1xf32> to vector<32x32xf32>
    %561 = arith.subf %557, %560 : vector<32x32xf32>
    %562 = math.exp %561 : vector<32x32xf32>
    %cst_118 = arith.constant dense<0.000000e+00> : vector<32xf32>
    %563 = vector.multi_reduction <add>, %562, %cst_118 [1] : vector<32x32xf32> to vector<32xf32>
    %564 = vector.shape_cast %563 : vector<32xf32> to vector<32x1xf32>
    %565 = tpu.reciprocal %564 {approx = true} : vector<32x1xf32> -> vector<32x1xf32>
    %566 = vector.broadcast %565 : vector<32x1xf32> to vector<32x32xf32>
    %567 = arith.mulf %562, %566 : vector<32x32xf32>
    %cst_119 = arith.constant dense<0.000000e+00> : vector<32x8xf32>
    %568 = tpu.matmul %567, %508, %cst_119 {dimension_numbers = #tpu.dot_dimension_numbers<[1], [0], [0], [1], [0, 0, 1, 1], [], []>} : vector<32x32xf32>, vector<32x8xf32>, vector<32x8xf32> -> vector<32x8xf32>
    %c24_120 = arith.constant 24 : index
    %c128_121 = arith.constant 128 : index
    %569 = vector.load %arg7[%c24_120, %c128_121] : memref<32x512xf32, #tpu.memory_space<vmem>>, vector<8x32xf32>
    %cst_122 = arith.constant dense<0.000000e+00> : vector<32x32xf32>
    %570 = tpu.matmul %568, %569, %cst_122 {dimension_numbers = #tpu.dot_dimension_numbers<[1], [0], [0], [1], [0, 0, 1, 1], [], []>} : vector<32x8xf32>, vector<8x32xf32>, vector<32x32xf32> -> vector<32x32xf32>
    %571 = arith.addf %505, %570 : vector<32x32xf32>
    %572 = vector.broadcast %10 : vector<1x32xf32> to vector<32x32xf32>
    %573 = arith.addf %571, %572 : vector<32x32xf32>
    %574 = arith.mulf %573, %59 : vector<32x32xf32>
    %575 = vector.broadcast %4 : vector<32x1xf32> to vector<32x32xf32>
    %576 = arith.mulf %574, %575 : vector<32x32xf32>
    %577 = arith.addf %576, %16 : vector<32x32xf32>
    %578 = vector.broadcast %4 : vector<32x1xf32> to vector<32x32xf32>
    %579 = arith.mulf %577, %578 : vector<32x32xf32>
    %cst_123 = arith.constant dense<0.000000e+00> : vector<32xf32>
    %580 = vector.multi_reduction <add>, %579, %cst_123 [1] : vector<32x32xf32> to vector<32xf32>
    %581 = vector.shape_cast %580 : vector<32xf32> to vector<32x1xf32>
    %cst_124 = arith.constant 3.200000e+01 : f32
    %582 = vector.broadcast %cst_124 : f32 to vector<32x1xf32>
    %583 = arith.divf %581, %582 : vector<32x1xf32>
    %584 = vector.broadcast %583 : vector<32x1xf32> to vector<32x32xf32>
    %585 = arith.subf %579, %584 : vector<32x32xf32>
    %586 = arith.mulf %585, %585 : vector<32x32xf32>
    %cst_125 = arith.constant dense<0.000000e+00> : vector<32xf32>
    %587 = vector.multi_reduction <add>, %586, %cst_125 [1] : vector<32x32xf32> to vector<32xf32>
    %588 = vector.shape_cast %587 : vector<32xf32> to vector<32x1xf32>
    %cst_126 = arith.constant 3.200000e+01 : f32
    %589 = vector.broadcast %cst_126 : f32 to vector<32x1xf32>
    %590 = arith.divf %588, %589 : vector<32x1xf32>
    %591 = vector.broadcast %583 : vector<32x1xf32> to vector<32x32xf32>
    %592 = arith.subf %579, %591 : vector<32x32xf32>
    %cst_127 = arith.constant 9.99999974E-6 : f32
    %593 = vector.broadcast %cst_127 : f32 to vector<32x1xf32>
    %594 = arith.addf %590, %593 : vector<32x1xf32>
    %595 = math.rsqrt %594 : vector<32x1xf32>
    %596 = vector.broadcast %595 : vector<32x1xf32> to vector<32x32xf32>
    %597 = arith.mulf %592, %596 : vector<32x32xf32>
    %598 = arith.mulf %597, %52 : vector<32x32xf32>
    %599 = arith.addf %598, %53 : vector<32x32xf32>
    %600 = vector.broadcast %4 : vector<32x1xf32> to vector<32x32xf32>
    %601 = arith.mulf %599, %600 : vector<32x32xf32>
    %cst_128 = arith.constant dense<0.000000e+00> : vector<32x256xf32>
    %602 = tpu.matmul %601, %6, %cst_128 {dimension_numbers = #tpu.dot_dimension_numbers<[1], [0], [0], [1], [0, 0, 1, 1], [], []>} : vector<32x32xf32>, vector<32x256xf32>, vector<32x256xf32> -> vector<32x256xf32>
    %603 = vector.extract_strided_slice %602 {offsets = [0, 0], sizes = [32, 128], strides = [1, 1]} : vector<32x256xf32> to vector<32x128xf32>
    %604 = vector.extract_strided_slice %602 {offsets = [0, 128], sizes = [32, 128], strides = [1, 1]} : vector<32x256xf32> to vector<32x128xf32>
    %605 = arith.negf %604 : vector<32x128xf32>
    %606 = math.exp %605 : vector<32x128xf32>
    %cst_129 = arith.constant 1.000000e+00 : f32
    %607 = vector.broadcast %cst_129 : f32 to vector<32x128xf32>
    %608 = arith.addf %607, %606 : vector<32x128xf32>
    %609 = arith.divf %607, %608 : vector<32x128xf32>
    %610 = arith.mulf %604, %609 : vector<32x128xf32>
    %611 = arith.mulf %610, %603 : vector<32x128xf32>
    %cst_130 = arith.constant dense<0.000000e+00> : vector<32x32xf32>
    %612 = tpu.matmul %611, %7, %cst_130 {dimension_numbers = #tpu.dot_dimension_numbers<[1], [0], [0], [1], [0, 0, 1, 1], [], []>} : vector<32x128xf32>, vector<128x32xf32>, vector<32x32xf32> -> vector<32x32xf32>
    %613 = vector.broadcast %4 : vector<32x1xf32> to vector<32x32xf32>
    %614 = arith.mulf %612, %613 : vector<32x32xf32>
    %615 = arith.mulf %614, %65 : vector<32x32xf32>
    %616 = vector.broadcast %4 : vector<32x1xf32> to vector<32x32xf32>
    %617 = arith.mulf %615, %616 : vector<32x32xf32>
    %618 = arith.addf %617, %579 : vector<32x32xf32>
    %619 = vector.broadcast %4 : vector<32x1xf32> to vector<32x32xf32>
    %620 = arith.mulf %618, %619 : vector<32x32xf32>
    %621 = vector.broadcast %4 : vector<32x1xf32> to vector<32x32xf32>
    %622 = arith.mulf %620, %621 : vector<32x32xf32>
    %c0_131 = arith.constant 0 : index
    %c0_132 = arith.constant 0 : index
    %623 = vector.load %arg11[%c0_131, %c0_132] : memref<32x32xf32, #tpu.memory_space<vmem>>, vector<32x32xf32>
    tpu.vector_store %arg11[%c0_131, %c0_132], %622 {strides = array<i32>} : memref<32x32xf32, #tpu.memory_space<vmem>>, vector<32x32xf32>,
    return
  }
  func.func @transform_0(%arg0: i32) -> (i32, i32) {
    %c0_i32 = arith.constant 0 : i32
    %c0_i32_0 = arith.constant 0 : i32
    %c0_i32_1 = arith.constant 0 : i32
    return %c0_i32, %c0_i32_0 : i32, i32
  }
  func.func @transform_1(%arg0: i32) -> (i32, i32) {
    %c0_i32 = arith.constant 0 : i32
    %c0_i32_0 = arith.constant 0 : i32
    %c0_i32_1 = arith.constant 0 : i32
    return %c0_i32, %c0_i32_0 : i32, i32
  }
  func.func @transform_2(%arg0: i32) -> (i32, i32, i32) {
    %c0_i32 = arith.constant 0 : i32
    %c0_i32_0 = arith.constant 0 : i32
    %c0_i32_1 = arith.constant 0 : i32
    %c0_i32_2 = arith.constant 0 : i32
    return %c0_i32, %c0_i32_0, %c0_i32_1 : i32, i32, i32
  }
  func.func @transform_3(%arg0: i32) -> (i32, i32) {
    %c0_i32 = arith.constant 0 : i32
    %c0_i32_0 = arith.constant 0 : i32
    %c0_i32_1 = arith.constant 0 : i32
    return %c0_i32, %c0_i32_0 : i32, i32
  }
  func.func @transform_4(%arg0: i32) -> (i32, i32) {
    %c0_i32 = arith.constant 0 : i32
    %c0_i32_0 = arith.constant 0 : i32
    %c0_i32_1 = arith.constant 0 : i32
    return %c0_i32, %c0_i32_0 : i32, i32
  }
  func.func @transform_5(%arg0: i32) -> (i32, i32) {
    %c0_i32 = arith.constant 0 : i32
    %c0_i32_0 = arith.constant 0 : i32
    %c0_i32_1 = arith.constant 0 : i32
    return %c0_i32, %c0_i32_0 : i32, i32
  }
  func.func @transform_6(%arg0: i32) -> (i32, i32) {
    %c0_i32 = arith.constant 0 : i32
    %c0_i32_0 = arith.constant 0 : i32
    %c0_i32_1 = arith.constant 0 : i32
    return %c0_i32, %c0_i32_0 : i32, i32
  }
  func.func @transform_7(%arg0: i32) -> (i32, i32) {
    %c0_i32 = arith.constant 0 : i32
    %c0_i32_0 = arith.constant 0 : i32
    %c0_i32_1 = arith.constant 0 : i32
    return %c0_i32, %c0_i32_0 : i32, i32
  }
  func.func @transform_8(%arg0: i32) -> (i32, i32) {
    %c0_i32 = arith.constant 0 : i32
    %c0_i32_0 = arith.constant 0 : i32
    %c0_i32_1 = arith.constant 0 : i32
    return %c0_i32, %c0_i32_0 : i32, i32
  }
  func.func @transform_9(%arg0: i32) -> i32 {
    %c0_i32 = arith.constant 0 : i32
    %c0_i32_0 = arith.constant 0 : i32
    return %c0_i32 : i32
  }
  func.func @transform_10(%arg0: i32) -> (i32, i32) {
    %c0_i32 = arith.constant 0 : i32
    %c0_i32_0 = arith.constant 0 : i32
    %c0_i32_1 = arith.constant 0 : i32
    return %c0_i32, %c0_i32_0 : i32, i32
  }
}

</mosaic_0001>

<llo_original>
// kernel: tpu_custom_call.1
$region0: #{tpu_custom_call.1}
  #allocation0 [shape = 'u32[]', space=smem, size = 0x4, offset = 0x4, fixed_abs, tag = 'smem constant byte address 0x4 - core index']
  #allocation1 [shape = 'u32[72,128]{1,0:T(1,128)}', space=vmem, size = 0x9000, scoped, tag = 'internal scratch']
  %s0 = inlined_call_operand.hbm [shape: f32[32,32], index: 0, kind: input, shape index: {}]
  %s1 = inlined_call_operand.vmem [shape: f32[32,16], index: 1, kind: input, shape index: {}]
  %s2 = inlined_call_operand.hbm [shape: f32[8,32,32], index: 2, kind: input, shape index: {}]
  %s3 = inlined_call_operand.hbm [shape: f32[32,32], index: 3, kind: input, shape index: {}]
  %s4 = inlined_call_operand.vmem [shape: f32[32,1], index: 4, kind: input, shape index: {}]
  %s5 = inlined_call_operand.vmem [shape: f32[32,192], index: 5, kind: input, shape index: {}]
  %s6 = inlined_call_operand.vmem [shape: f32[32,512], index: 6, kind: input, shape index: {}]
  %s7 = inlined_call_operand.vmem [shape: f32[128,32], index: 7, kind: input, shape index: {}]
  %s8 = inlined_call_operand.vmem [shape: f32[8,256], index: 8, kind: input, shape index: {}]
  %s9 = inlined_call_operand.vmem [shape: f32[40], index: 9, kind: input, shape index: {}]
  %s10 = inlined_call_operand.hbm [shape: f32[32,32], index: 10, kind: output, shape index: {}]
  %s11 = sld [smem:[#allocation0]]
  $region66: #{tpu_custom_call.1} parent=0
    _
  %s13 = ssub.s32 1, %s11
  %s14 = scalar_select 0, %s13, %s11
  $region1: #{tpu_custom_call.1} parent=0
    #allocation2 [shape = 'u8[16384]{0}', space=vmem, size = 0x4000, scoped, tag = 'input window, operand 0, single buffered']
    #allocation3 [shape = 's32[1]{0}', space=sflag, size = 0x4, scoped, tag = 'scoped memory for tpu_custom_call.1']
    #allocation4 [shape = 's32[1]{0}', space=sflag, size = 0x4, scoped, tag = 'scoped memory for tpu_custom_call.1']
    #allocation5 [shape = 's32[1]{0}', space=sflag, size = 0x4, scoped, tag = 'scoped memory for tpu_custom_call.1']
    #allocation6 [shape = 'u8[131072]{0}', space=vmem, size = 0x20000, scoped, tag = 'input window, operand 2, single buffered']
    #allocation7 [shape = 's32[1]{0}', space=sflag, size = 0x4, scoped, tag = 'scoped memory for tpu_custom_call.1']
    #allocation8 [shape = 'u8[16384]{0}', space=vmem, size = 0x4000, scoped, tag = 'input window, operand 3, single buffered']
    #allocation9 [shape = 'u8[512]{0}', space=smem, size = 0x200, scoped, tag = 'input window, operand 9, single buffered']
    #allocation10 [shape = 'u8[16384]{0}', space=vmem, size = 0x4000, scoped, tag = 'output window, operand 0, single buffered']
    %15 = vsyncpa [#allocation3], 0
    %16 = vsyncpa [#allocation7], 0
    %17 = vsyncpa [#allocation5], 0
    %18 = vsyncpa [#allocation4], 0
    // Predicated region
    $region2: #{tpu_custom_call.1} parent=1 // pred_check
      _
    $region3: #{tpu_custom_call.1} parent=1 // pred_check_branch
      %20 = sbr.rel (0) target = $region5
    $region4: #{tpu_custom_call.1} parent=1 // pred_region
      %22 = vsyncadd [#allocation3], 0
      %s23 = sshll.u32 %s0, 4
      %s24 = int_to_ptr.hbm [resolvable:$true] %s23
      %s25 = sshll.u32 [#allocation2], 4
      %s26 = int_to_ptr.vmem [resolvable:$true] %s25
      %31 = dma.hbm_to_vmem [thread:$0]  %s24, 512, %s26, [#allocation3], 128, 128, 8
    $region5: #{tpu_custom_call.1} parent=1 // pred_fallthru
      _
    // Predicated region
    $region6: #{tpu_custom_call.1} parent=1 // pred_check
      _
    $region7: #{tpu_custom_call.1} parent=1 // pred_check_branch
      %33 = sbr.rel (0) target = $region9
    $region8: #{tpu_custom_call.1} parent=1 // pred_region
      _
    $region9: #{tpu_custom_call.1} parent=1 // pred_fallthru
      _
    // Predicated region
    $region10: #{tpu_custom_call.1} parent=1 // pred_check
      _
    $region11: #{tpu_custom_call.1} parent=1 // pred_check_branch
      %35 = sbr.rel (0) target = $region13
    $region12: #{tpu_custom_call.1} parent=1 // pred_region
      %37 = vsyncadd [#allocation7], 0
      %s38 = sshll.u32 %s2, 4
      %s39 = int_to_ptr.hbm [resolvable:$true] %s38
      %s40 = sshll.u32 [#allocation6], 4
      %s41 = int_to_ptr.vmem [resolvable:$true] %s40
      %46 = dma.hbm_to_vmem [thread:$0]  %s39, 4096, %s41, [#allocation7], 128, 128, 8
    $region13: #{tpu_custom_call.1} parent=1 // pred_fallthru
      _
    // Predicated region
    $region14: #{tpu_custom_call.1} parent=1 // pred_check
      _
    $region15: #{tpu_custom_call.1} parent=1 // pred_check_branch
      %48 = sbr.rel (0) target = $region17
    $region16: #{tpu_custom_call.1} parent=1 // pred_region
      %50 = vsyncadd [#allocation7], 0
      %s51 = sshll.u32 %s3, 4
      %s52 = int_to_ptr.hbm [resolvable:$true] %s51
      %s53 = sshll.u32 [#allocation8], 4
      %s54 = int_to_ptr.vmem [resolvable:$true] %s53
      %59 = dma.hbm_to_vmem [thread:$0]  %s52, 512, %s54, [#allocation7], 128, 128, 8
    $region17: #{tpu_custom_call.1} parent=1 // pred_fallthru
      _
    // Predicated region
    $region18: #{tpu_custom_call.1} parent=1 // pred_check
      _
    $region19: #{tpu_custom_call.1} parent=1 // pred_check_branch
      %61 = sbr.rel (0) target = $region21
    $region20: #{tpu_custom_call.1} parent=1 // pred_region
      _
    $region21: #{tpu_custom_call.1} parent=1 // pred_fallthru
      _
    // Predicated region
    $region22: #{tpu_custom_call.1} parent=1 // pred_check
      _
    $region23: #{tpu_custom_call.1} parent=1 // pred_check_branch
      %63 = sbr.rel (0) target = $region25
    $region24: #{tpu_custom_call.1} parent=1 // pred_region
      _
    $region25: #{tpu_custom_call.1} parent=1 // pred_fallthru
      _
    // Predicated region
    $region26: #{tpu_custom_call.1} parent=1 // pred_check
      _
    $region27: #{tpu_custom_call.1} parent=1 // pred_check_branch
      %65 = sbr.rel (0) target = $region29
    $region28: #{tpu_custom_call.1} parent=1 // pred_region
      _
    $region29: #{tpu_custom_call.1} parent=1 // pred_fallthru
      _
    // Predicated region
    $region30: #{tpu_custom_call.1} parent=1 // pred_check
      _
    $region31: #{tpu_custom_call.1} parent=1 // pred_check_branch
      %67 = sbr.rel (0) target = $region33
    $region32: #{tpu_custom_call.1} parent=1 // pred_region
      _
    $region33: #{tpu_custom_call.1} parent=1 // pred_fallthru
      _
    // Predicated region
    $region34: #{tpu_custom_call.1} parent=1 // pred_check
      _
    $region35: #{tpu_custom_call.1} parent=1 // pred_check_branch
      %69 = sbr.rel (0) target = $region37
    $region36: #{tpu_custom_call.1} parent=1 // pred_region
      _
    $region37: #{tpu_custom_call.1} parent=1 // pred_fallthru
      _
    // Predicated region
    $region38: #{tpu_custom_call.1} parent=1 // pred_check
      _
    $region39: #{tpu_custom_call.1} parent=1 // pred_check_branch
      %71 = sbr.rel (0) target = $region41
    $region40: #{tpu_custom_call.1} parent=1 // pred_region
      %73 = vsyncadd [#allocation5], 0
      %s75 = sshll.u32 %s9, 4
      %s76 = int_to_ptr.vmem [resolvable:$true] %s75
      %78 = dma.vmem_to_smem %s76, 16, [#allocation9], [#allocation5]
    $region41: #{tpu_custom_call.1} parent=1 // pred_fallthru
      _
    // Predicated region
    $region42: #{tpu_custom_call.1} parent=1 // pred_check
      _
    $region43: #{tpu_custom_call.1} parent=1 // pred_check_branch
      %80 = sbr.rel (0) target = $region45
    $region44: #{tpu_custom_call.1} parent=1 // pred_region
      %82 = dma.done [#allocation3], 512
    $region45: #{tpu_custom_call.1} parent=1 // pred_fallthru
      _
    // Predicated region
    $region46: #{tpu_custom_call.1} parent=1 // pred_check
      _
    $region47: #{tpu_custom_call.1} parent=1 // pred_check_branch
      %84 = sbr.rel (0) target = $region49
    $region48: #{tpu_custom_call.1} parent=1 // pred_region
      %86 = dma.done [#allocation7], 4096
    $region49: #{tpu_custom_call.1} parent=1 // pred_fallthru
      _
    // Predicated region
    $region50: #{tpu_custom_call.1} parent=1 // pred_check
      _
    $region51: #{tpu_custom_call.1} parent=1 // pred_check_branch
      %88 = sbr.rel (0) target = $region53
    $region52: #{tpu_custom_call.1} parent=1 // pred_region
      %90 = dma.done [#allocation7], 512
    $region53: #{tpu_custom_call.1} parent=1 // pred_fallthru
      _
    // Predicated region
    $region54: #{tpu_custom_call.1} parent=1 // pred_check
      _
    $region55: #{tpu_custom_call.1} parent=1 // pred_check_branch
      %92 = sbr.rel (0) target = $region57
    $region56: #{tpu_custom_call.1} parent=1 // pred_region
      %94 = dma.done [#allocation5], 16
    $region57: #{tpu_custom_call.1} parent=1 // pred_fallthru
      _
    %95 = sfence
    %v96 = vld [vmem:[#allocation2] sm:$0xff]
    %v97 = vld [vmem:[#allocation2 + $0x8] sm:$0xff]
    %v98 = vld [vmem:[#allocation2 + $0x10] sm:$0xff]
    %v99 = vld [vmem:[#allocation2 + $0x18] sm:$0xff]
    %v100 = vld [vmem:[%s1] sm:$0xff]
    %v101 = vld [vmem:[%s1 + $0x8] sm:$0xff]
    %v102 = vld [vmem:[%s1 + $0x10] sm:$0xff]
    %v103 = vld [vmem:[%s1 + $0x18] sm:$0xff]
    %v104 = vld [vmem:[#allocation6] sm:$0xff]
    %v105 = vld [vmem:[#allocation6 + $0x8] sm:$0xff]
    %v106 = vld [vmem:[#allocation6 + $0x10] sm:$0xff]
    %v107 = vld [vmem:[#allocation6 + $0x18] sm:$0xff]
    %v108 = vld [vmem:[#allocation6 + $0x20] sm:$0xff]
    %v109 = vld [vmem:[#allocation6 + $0x28] sm:$0xff]
    %v110 = vld [vmem:[#allocation6 + $0x30] sm:$0xff]
    %v111 = vld [vmem:[#allocation6 + $0x38] sm:$0xff]
    %v112 = vld [vmem:[#allocation6 + $0x40] sm:$0xff]
    %v113 = vld [vmem:[#allocation6 + $0x48] sm:$0xff]
    %v114 = vld [vmem:[#allocation6 + $0x50] sm:$0xff]
    %v115 = vld [vmem:[#allocation6 + $0x58] sm:$0xff]
    %v116 = vld [vmem:[#allocation6 + $0x60] sm:$0xff]
    %v117 = vld [vmem:[#allocation6 + $0x68] sm:$0xff]
    %v118 = vld [vmem:[#allocation6 + $0x70] sm:$0xff]
    %v119 = vld [vmem:[#allocation6 + $0x78] sm:$0xff]
    %v120 = vld [vmem:[#allocation6 + $0x80] sm:$0xff]
    %v121 = vld [vmem:[#allocation6 + $0x88] sm:$0xff]
    %v122 = vld [vmem:[#allocation6 + $0x90] sm:$0xff]
    %v123 = vld [vmem:[#allocation6 + $0x98] sm:$0xff]
    %v124 = vld [vmem:[#allocation6 + $0xa0] sm:$0xff]
    %v125 = vld [vmem:[#allocation6 + $0xa8] sm:$0xff]
    %v126 = vld [vmem:[#allocation6 + $0xb0] sm:$0xff]
    %v127 = vld [vmem:[#allocation6 + $0xb8] sm:$0xff]
    %v128 = vld [vmem:[#allocation6 + $0xc0] sm:$0xff]
    %v129 = vld [vmem:[#allocation6 + $0xc8] sm:$0xff]
    %v130 = vld [vmem:[#allocation6 + $0xd0] sm:$0xff]
    %v131 = vld [vmem:[#allocation6 + $0xd8] sm:$0xff]
    %v132 = vld [vmem:[#allocation6 + $0xe0] sm:$0xff]
    %v133 = vld [vmem:[#allocation6 + $0xe8] sm:$0xff]
    %v134 = vld [vmem:[#allocation6 + $0xf0] sm:$0xff]
    %v135 = vld [vmem:[#allocation6 + $0xf8] sm:$0xff]
    %v136 = vld [vmem:[#allocation8] sm:$0xff]
    %v137 = vld [vmem:[#allocation8 + $0x8] sm:$0xff]
    %v138 = vld [vmem:[#allocation8 + $0x10] sm:$0xff]
    %v139 = vld [vmem:[#allocation8 + $0x18] sm:$0xff]
    %v140 = vld [vmem:[%s4] sm:$0xff]
    %v141 = vld [vmem:[%s4 + $0x8] sm:$0xff]
    %v142 = vld [vmem:[%s4 + $0x10] sm:$0xff]
    %v143 = vld [vmem:[%s4 + $0x18] sm:$0xff]
    %v144 = vld [vmem:[%s6] sm:$0xff]
    %v145 = vld [vmem:[%s6 + $0x20] sm:$0xff]
    %v146 = vld [vmem:[%s6 + $0x40] sm:$0xff]
    %v147 = vld [vmem:[%s6 + $0x60] sm:$0xff]
    %v148 = vld [vmem:[%s6 + $0x10] sm:$0xff]
    %v149 = vld [vmem:[%s6 + $0x18] sm:$0xff]
    %v150 = vld [vmem:[%s6 + $0x30] sm:$0xff]
    %v151 = vld [vmem:[%s6 + $0x38] sm:$0xff]
    %v152 = vld [vmem:[%s6 + $0x50] sm:$0xff]
    %v153 = vld [vmem:[%s6 + $0x58] sm:$0xff]
    %v154 = vld [vmem:[%s6 + $0x70] sm:$0xff]
    %v155 = vld [vmem:[%s6 + $0x78] sm:$0xff]
    %v156 = vld [vmem:[%s7] sm:$0xff]
    %v157 = vld [vmem:[%s7 + $0x8] sm:$0xff]
    %v158 = vld [vmem:[%s7 + $0x10] sm:$0xff]
    %v159 = vld [vmem:[%s7 + $0x18] sm:$0xff]
    %v160 = vld [vmem:[%s7 + $0x20] sm:$0xff]
    %v161 = vld [vmem:[%s7 + $0x28] sm:$0xff]
    %v162 = vld [vmem:[%s7 + $0x30] sm:$0xff]
    %v163 = vld [vmem:[%s7 + $0x38] sm:$0xff]
    %v164 = vld [vmem:[%s7 + $0x40] sm:$0xff]
    %v165 = vld [vmem:[%s7 + $0x48] sm:$0xff]
    %v166 = vld [vmem:[%s7 + $0x50] sm:$0xff]
    %v167 = vld [vmem:[%s7 + $0x58] sm:$0xff]
    %v168 = vld [vmem:[%s7 + $0x60] sm:$0xff]
    %v169 = vld [vmem:[%s7 + $0x68] sm:$0xff]
    %v170 = vld [vmem:[%s7 + $0x70] sm:$0xff]
    %v171 = vld [vmem:[%s7 + $0x78] sm:$0xff]
    %v172 = vld [vmem:[%s8] ss:$8 sm:$0x3]
    %v173 = vld [vmem:[%s8 + $0x1] ss:$0 sm:$0xff]
    %v174 = vld [vmem:[%s8 + $0x2] ss:$0 sm:$0xff]
    %v175 = vld [vmem:[%s8 + $0x3] ss:$0 sm:$0xff]
    %v176 = vld [vmem:[%s8 + $0x4] ss:$0 sm:$0xff]
    %v177 = vld [vmem:[%s8 + $0x5] ss:$0 sm:$0xff]
    %v178 = vld [vmem:[%s8 + $0x6] ss:$0 sm:$0xff]
    %180 = vset.pattern.permute.xlu0 0
    %181 = vperm.xlu0 %180, %v140
    %v182 = vpop.permute.xlu0 %181
    %185 = vset.pattern.permute.xlu0 0
    %186 = vperm.xlu0 %185, %v141
    %v187 = vpop.permute.xlu0 %186
    %190 = vset.pattern.permute.xlu0 0
    %191 = vperm.xlu0 %190, %v142
    %v192 = vpop.permute.xlu0 %191
    %195 = vset.pattern.permute.xlu0 0
    %196 = vperm.xlu0 %195, %v143
    %v197 = vpop.permute.xlu0 %196
    %v199 = vmul.f32 %v96, %v182
    %v200 = vmul.f32 %v97, %v187
    %v201 = vmul.f32 %v98, %v192
    %v202 = vmul.f32 %v99, %v197
    %vm203 = vcmask 130048
    %v204 = vsel %vm203, %v100, 0.0
    %205 = vadd.xlane.f32.xlu0 %v204
    %v206 = vpop.xlane.xlu0 %205
    %v207 = vsel %vm203, %v101, 0.0
    %208 = vadd.xlane.f32.xlu0 %v207
    %v209 = vpop.xlane.xlu0 %208
    %v210 = vsel %vm203, %v102, 0.0
    %211 = vadd.xlane.f32.xlu0 %v210
    %v212 = vpop.xlane.xlu0 %211
    %v213 = vsel %vm203, %v103, 0.0
    %214 = vadd.xlane.f32.xlu0 %v213
    %v215 = vpop.xlane.xlu0 %214
    %v216 = vrcp.pop 16.0
    %v217 = vmul.f32 16.0, %v216
    %v218 = vsub.f32 1.0, %v217
    %v219 = vmul.f32 %v216, %v218
    %v220 = vadd.f32 %v216, %v219
    %vm221 = vweird.f32 %v216
    %v222 = vsel %vm221, %v216, %v220
    %v223 = vmul.f32 %v206, %v222
    %v224 = vmul.f32 %v209, %v222
    %v225 = vmul.f32 %v212, %v222
    %v226 = vmul.f32 %v215, %v222
    %v227 = vsub.f32 %v100, %v223
    %v228 = vsub.f32 %v101, %v224
    %v229 = vsub.f32 %v102, %v225
    %v230 = vsub.f32 %v103, %v226
    %v231 = vmul.f32 %v227, %v227
    %v232 = vmul.f32 %v228, %v228
    %v233 = vmul.f32 %v229, %v229
    %v234 = vmul.f32 %v230, %v230
    %v235 = vsel %vm203, %v231, 0.0
    %236 = vadd.xlane.f32.xlu0 %v235
    %v237 = vpop.xlane.xlu0 %236
    %v238 = vsel %vm203, %v232, 0.0
    %239 = vadd.xlane.f32.xlu0 %v238
    %v240 = vpop.xlane.xlu0 %239
    %v241 = vsel %vm203, %v233, 0.0
    %242 = vadd.xlane.f32.xlu0 %v241
    %v243 = vpop.xlane.xlu0 %242
    %v244 = vsel %vm203, %v234, 0.0
    %245 = vadd.xlane.f32.xlu0 %v244
    %v246 = vpop.xlane.xlu0 %245
    %v247 = vmul.f32 %v237, %v222
    %v248 = vmul.f32 %v240, %v222
    %v249 = vmul.f32 %v243, %v222
    %v250 = vmul.f32 %v246, %v222
    %v251 = vadd.f32 %v247, 1e-05
    %v252 = vadd.f32 %v248, 1e-05
    %v253 = vadd.f32 %v249, 1e-05
    %v254 = vadd.f32 %v250, 1e-05
    %v255 = vrsqrt.pop %v251
    %v256 = vmul.f32 %v255, %v251
    %v257 = vmul.f32 %v256, %v255
    %v258 = vmul.f32 0.5, %v257
    %v259 = vsub.f32 1.5, %v258
    %v260 = vmul.f32 %v255, %v259
    %vm261 = vweird.f32 %v251
    %vm262 = vweird.f32 %v255
    %vm263 = vmor %vm261, %vm262
    %v264 = vsel %vm263, %v255, %v260
    %v265 = vrsqrt.pop %v252
    %v266 = vmul.f32 %v265, %v252
    %v267 = vmul.f32 %v266, %v265
    %v268 = vmul.f32 0.5, %v267
    %v269 = vsub.f32 1.5, %v268
    %v270 = vmul.f32 %v265, %v269
    %vm271 = vweird.f32 %v252
    %vm272 = vweird.f32 %v265
    %vm273 = vmor %vm271, %vm272
    %v274 = vsel %vm273, %v265, %v270
    %v275 = vrsqrt.pop %v253
    %v276 = vmul.f32 %v275, %v253
    %v277 = vmul.f32 %v276, %v275
    %v278 = vmul.f32 0.5, %v277
    %v279 = vsub.f32 1.5, %v278
    %v280 = vmul.f32 %v275, %v279
    %vm281 = vweird.f32 %v253
    %vm282 = vweird.f32 %v275
    %vm283 = vmor %vm281, %vm282
    %v284 = vsel %vm283, %v275, %v280
    %v285 = vrsqrt.pop %v254
    %v286 = vmul.f32 %v285, %v254
    %v287 = vmul.f32 %v286, %v285
    %v288 = vmul.f32 0.5, %v287
    %v289 = vsub.f32 1.5, %v288
    %v290 = vmul.f32 %v285, %v289
    %vm291 = vweird.f32 %v254
    %vm292 = vweird.f32 %v285
    %vm293 = vmor %vm291, %vm292
    %v294 = vsel %vm293, %v285, %v290
    %v295 = vmul.f32 %v227, %v264
    %v296 = vmul.f32 %v228, %v274
    %v297 = vmul.f32 %v229, %v284
    %v298 = vmul.f32 %v230, %v294
    %303 = vrot.lane.b32.xlu0 %v100, 16
    %v304 = vpop.permute.xlu0 %303
    %305 = vrot.lane.b32.xlu0 %v101, 16
    %v306 = vpop.permute.xlu0 %305
    %307 = vrot.lane.b32.xlu0 %v102, 16
    %v308 = vpop.permute.xlu0 %307
    %309 = vrot.lane.b32.xlu0 %v103, 16
    %v310 = vpop.permute.xlu0 %309
    %v315 = vsel %vm203, %v295, %v304
    %v316 = vsel %vm203, %v296, %v306
    %v317 = vsel %vm203, %v297, %v308
    %v318 = vsel %vm203, %v298, %v310
    %v319 = vld [vmem:[%s5] sm:$0xff]
    %v320 = vld [vmem:[%s5 + $0x8] sm:$0xff]
    %v321 = vld [vmem:[%s5 + $0x10] sm:$0xff]
    %v322 = vld [vmem:[%s5 + $0x18] sm:$0xff]
    %v323 = vld [vmem:[%s5 + $0x20] sm:$0xff]
    %v324 = vld [vmem:[%s5 + $0x28] sm:$0xff]
    %v325 = vld [vmem:[%s5 + $0x30] sm:$0xff]
    %v326 = vld [vmem:[%s5 + $0x38] sm:$0xff]
    %v328 = vperm.slane %v172, 0
    %v329 = vperm.slane %v172, 1
    %vm332 = vcmask 261120
    %v334 = vsel %vm332, %v315, 0
    %v337 = vsel %vm332, %v316, 0
    %v340 = vsel %vm332, %v317, 0
    %v343 = vsel %vm332, %v318, 0
    %345 = vmatpush.msra.mxu0 0.0
    %346 = vmatpush.msra.mxu0 0.0
    %347 = vmatpush.msra.mxu0 0.0
    %348 = vmatpush.msra.mxu0 0.0
    %349 = vmatpush.msra.mxu0 0.0
    %350 = vmatpush.msra.mxu0 0.0
    %351 = vmatpush.msra.mxu0 0.0
    %352 = vmatpush.msra.mxu0 0.0
    %353 = vmatpush.msra.mxu0 0.0
    %354 = vmatpush.msra.mxu0 0.0
    %355 = vmatpush.msra.mxu0 0.0
    %356 = vmatpush.msra.mxu0 0.0
    %357 = vmatpush.msra.mxu0 %v325
    %358 = vmatpush.msra.mxu0 %v323
    %359 = vmatpush.msra.mxu0 %v321
    %360 = vmatpush.msra.mxu0 %v319
    %361 = vmatmul.f32.gmra.mxu0 %v334
    %v362 = vpop.f32.mrf.mxu0
    %v363 = vadd.f32 %v328, %v362
    %364 = vmatmul.f32.gmra.mxu0 %v337
    %v365 = vpop.f32.mrf.mxu0
    %v366 = vadd.f32 %v328, %v365
    %367 = vmatmul.f32.gmra.mxu0 %v340
    %v368 = vpop.f32.mrf.mxu0
    %v369 = vadd.f32 %v328, %v368
    %370 = vmatmul.f32.gmra.mxu0 %v343
    %v371 = vpop.f32.mrf.mxu0
    %v372 = vadd.f32 %v328, %v371
    %373 = vdwg.mxu0
    %374 = vmatpush.msra.mxu0 0.0
    %375 = vmatpush.msra.mxu0 0.0
    %376 = vmatpush.msra.mxu0 0.0
    %377 = vmatpush.msra.mxu0 0.0
    %378 = vmatpush.msra.mxu0 0.0
    %379 = vmatpush.msra.mxu0 0.0
    %380 = vmatpush.msra.mxu0 0.0
    %381 = vmatpush.msra.mxu0 0.0
    %382 = vmatpush.msra.mxu0 0.0
    %383 = vmatpush.msra.mxu0 0.0
    %384 = vmatpush.msra.mxu0 0.0
    %385 = vmatpush.msra.mxu0 0.0
    %386 = vmatpush.msra.mxu0 %v326
    %387 = vmatpush.msra.mxu0 %v324
    %388 = vmatpush.msra.mxu0 %v322
    %389 = vmatpush.msra.mxu0 %v320
    %390 = vmatmul.f32.gmra.mxu0 %v334
    %v391 = vpop.f32.mrf.mxu0
    %v392 = vadd.f32 %v329, %v391
    %393 = vmatmul.f32.gmra.mxu0 %v337
    %v394 = vpop.f32.mrf.mxu0
    %v395 = vadd.f32 %v329, %v394
    %396 = vmatmul.f32.gmra.mxu0 %v340
    %v397 = vpop.f32.mrf.mxu0
    %v398 = vadd.f32 %v329, %v397
    %399 = vmatmul.f32.gmra.mxu0 %v343
    %v400 = vpop.f32.mrf.mxu0
    %v401 = vadd.f32 %v329, %v400
    %402 = vdwg.mxu0
    %v403 = vxor.u32 %v363, 2147483648
    %v404 = vxor.u32 %v366, 2147483648
    %v405 = vxor.u32 %v369, 2147483648
    %v406 = vxor.u32 %v372, 2147483648
    %v407 = vmul.f32 %v403, 1.442695
    %v408 = vpow.pop %v407
    %v409 = vmul.f32 %v404, 1.442695
    %v410 = vpow.pop %v409
    %v411 = vmul.f32 %v405, 1.442695
    %v412 = vpow.pop %v411
    %v413 = vmul.f32 %v406, 1.442695
    %v414 = vpow.pop %v413
    %v415 = vadd.f32 %v408, 1.0
    %v416 = vadd.f32 %v410, 1.0
    %v417 = vadd.f32 %v412, 1.0
    %v418 = vadd.f32 %v414, 1.0
    %v419 = vrcp.pop %v415
    %v420 = vmul.f32 %v415, %v419
    %v421 = vsub.f32 1.0, %v420
    %v422 = vmul.f32 %v419, %v421
    %v423 = vadd.f32 %v419, %v422
    %vm424 = vweird.f32 %v415
    %vm425 = vweird.f32 %v419
    %vm426 = vmor %vm424, %vm425
    %v427 = vsel %vm426, %v419, %v423
    %v428 = vand.u32 2147483647, %v415
    %vm429 = vcmp.eq.f32.partialorder %v428, 8.507059e+37
    %v430 = vand.u32 %v415, 2147483648
    %v431 = vor.u32 1.1754944e-38, %v430
    %v432 = vsel %vm429, %v431, %v427
    %v433 = vmul.f32 1.0, %v432
    %v434 = vrcp.pop %v416
    %v435 = vmul.f32 %v416, %v434
    %v436 = vsub.f32 1.0, %v435
    %v437 = vmul.f32 %v434, %v436
    %v438 = vadd.f32 %v434, %v437
    %vm439 = vweird.f32 %v416
    %vm440 = vweird.f32 %v434
    %vm441 = vmor %vm439, %vm440
    %v442 = vsel %vm441, %v434, %v438
    %v443 = vand.u32 2147483647, %v416
    %vm444 = vcmp.eq.f32.partialorder %v443, 8.507059e+37
    %v445 = vand.u32 %v416, 2147483648
    %v446 = vor.u32 1.1754944e-38, %v445
    %v447 = vsel %vm444, %v446, %v442
    %v448 = vmul.f32 1.0, %v447
    %v449 = vrcp.pop %v417
    %v450 = vmul.f32 %v417, %v449
    %v451 = vsub.f32 1.0, %v450
    %v452 = vmul.f32 %v449, %v451
    %v453 = vadd.f32 %v449, %v452
    %vm454 = vweird.f32 %v417
    %vm455 = vweird.f32 %v449
    %vm456 = vmor %vm454, %vm455
    %v457 = vsel %vm456, %v449, %v453
    %v458 = vand.u32 2147483647, %v417
    %vm459 = vcmp.eq.f32.partialorder %v458, 8.507059e+37
    %v460 = vand.u32 %v417, 2147483648
    %v461 = vor.u32 1.1754944e-38, %v460
    %v462 = vsel %vm459, %v461, %v457
    %v463 = vmul.f32 1.0, %v462
    %v464 = vrcp.pop %v418
    %v465 = vmul.f32 %v418, %v464
    %v466 = vsub.f32 1.0, %v465
    %v467 = vmul.f32 %v464, %v466
    %v468 = vadd.f32 %v464, %v467
    %vm469 = vweird.f32 %v418
    %vm470 = vweird.f32 %v464
    %vm471 = vmor %vm469, %vm470
    %v472 = vsel %vm471, %v464, %v468
    %v473 = vand.u32 2147483647, %v418
    %vm474 = vcmp.eq.f32.partialorder %v473, 8.507059e+37
    %v475 = vand.u32 %v418, 2147483648
    %v476 = vor.u32 1.1754944e-38, %v475
    %v477 = vsel %vm474, %v476, %v472
    %v478 = vmul.f32 1.0, %v477
    %v479 = vxor.u32 %v392, 2147483648
    %v480 = vxor.u32 %v395, 2147483648
    %v481 = vxor.u32 %v398, 2147483648
    %v482 = vxor.u32 %v401, 2147483648
    %v483 = vmul.f32 %v479, 1.442695
    %v484 = vpow.pop %v483
    %v485 = vmul.f32 %v480, 1.442695
    %v486 = vpow.pop %v485
    %v487 = vmul.f32 %v481, 1.442695
    %v488 = vpow.pop %v487
    %v489 = vmul.f32 %v482, 1.442695
    %v490 = vpow.pop %v489
    %v491 = vadd.f32 %v484, 1.0
    %v492 = vadd.f32 %v486, 1.0
    %v493 = vadd.f32 %v488, 1.0
    %v494 = vadd.f32 %v490, 1.0
    %v495 = vrcp.pop %v491
    %v496 = vmul.f32 %v491, %v495
    %v497 = vsub.f32 1.0, %v496
    %v498 = vmul.f32 %v495, %v497
    %v499 = vadd.f32 %v495, %v498
    %vm500 = vweird.f32 %v491
    %vm501 = vweird.f32 %v495
    %vm502 = vmor %vm500, %vm501
    %v503 = vsel %vm502, %v495, %v499
    %v504 = vand.u32 2147483647, %v491
    %vm505 = vcmp.eq.f32.partialorder %v504, 8.507059e+37
    %v506 = vand.u32 %v491, 2147483648
    %v507 = vor.u32 1.1754944e-38, %v506
    %v508 = vsel %vm505, %v507, %v503
    %v509 = vmul.f32 1.0, %v508
    %v510 = vrcp.pop %v492
    %v511 = vmul.f32 %v492, %v510
    %v512 = vsub.f32 1.0, %v511
    %v513 = vmul.f32 %v510, %v512
    %v514 = vadd.f32 %v510, %v513
    %vm515 = vweird.f32 %v492
    %vm516 = vweird.f32 %v510
    %vm517 = vmor %vm515, %vm516
    %v518 = vsel %vm517, %v510, %v514
    %v519 = vand.u32 2147483647, %v492
    %vm520 = vcmp.eq.f32.partialorder %v519, 8.507059e+37
    %v521 = vand.u32 %v492, 2147483648
    %v522 = vor.u32 1.1754944e-38, %v521
    %v523 = vsel %vm520, %v522, %v518
    %v524 = vmul.f32 1.0, %v523
    %v525 = vrcp.pop %v493
    %v526 = vmul.f32 %v493, %v525
    %v527 = vsub.f32 1.0, %v526
    %v528 = vmul.f32 %v525, %v527
    %v529 = vadd.f32 %v525, %v528
    %vm530 = vweird.f32 %v493
    %vm531 = vweird.f32 %v525
    %vm532 = vmor %vm530, %vm531
    %v533 = vsel %vm532, %v525, %v529
    %v534 = vand.u32 2147483647, %v493
    %vm535 = vcmp.eq.f32.partialorder %v534, 8.507059e+37
    %v536 = vand.u32 %v493, 2147483648
    %v537 = vor.u32 1.1754944e-38, %v536
    %v538 = vsel %vm535, %v537, %v533
    %v539 = vmul.f32 1.0, %v538
    %v540 = vrcp.pop %v494
    %v541 = vmul.f32 %v494, %v540
    %v542 = vsub.f32 1.0, %v541
    %v543 = vmul.f32 %v540, %v542
    %v544 = vadd.f32 %v540, %v543
    %vm545 = vweird.f32 %v494
    %vm546 = vweird.f32 %v540
    %vm547 = vmor %vm545, %vm546
    %v548 = vsel %vm547, %v540, %v544
    %v549 = vand.u32 2147483647, %v494
    %vm550 = vcmp.eq.f32.partialorder %v549, 8.507059e+37
    %v551 = vand.u32 %v494, 2147483648
    %v552 = vor.u32 1.1754944e-38, %v551
    %v553 = vsel %vm550, %v552, %v548
    %v554 = vmul.f32 1.0, %v553
    %v555 = vsel %vm332, %v104, 0.0
    %v556 = vsel %vm332, %v108, 0.0
    %v557 = vadd.f32 %v555, %v556
    %v558 = vsel %vm332, %v112, 0.0
    %v559 = vadd.f32 %v557, %v558
    %v560 = vsel %vm332, %v116, 0.0
    %v561 = vadd.f32 %v559, %v560
    %v562 = vsel %vm332, %v120, 0.0
    %v563 = vadd.f32 %v561, %v562
    %v564 = vsel %vm332, %v124, 0.0
    %v565 = vadd.f32 %v563, %v564
    %v566 = vsel %vm332, %v128, 0.0
    %v567 = vadd.f32 %v565, %v566
    %v568 = vsel %vm332, %v132, 0.0
    %v569 = vadd.f32 %v567, %v568
    %v570 = vsel %vm332, %v105, 0.0
    %v571 = vsel %vm332, %v109, 0.0
    %v572 = vadd.f32 %v570, %v571
    %v573 = vsel %vm332, %v113, 0.0
    %v574 = vadd.f32 %v572, %v573
    %v575 = vsel %vm332, %v117, 0.0
    %v576 = vadd.f32 %v574, %v575
    %v577 = vsel %vm332, %v121, 0.0
    %v578 = vadd.f32 %v576, %v577
    %v579 = vsel %vm332, %v125, 0.0
    %v580 = vadd.f32 %v578, %v579
    %v581 = vsel %vm332, %v129, 0.0
    %v582 = vadd.f32 %v580, %v581
    %v583 = vsel %vm332, %v133, 0.0
    %v584 = vadd.f32 %v582, %v583
    %v585 = vsel %vm332, %v106, 0.0
    %v586 = vsel %vm332, %v110, 0.0
    %v587 = vadd.f32 %v585, %v586
    %v588 = vsel %vm332, %v114, 0.0
    %v589 = vadd.f32 %v587, %v588
    %v590 = vsel %vm332, %v118, 0.0
    %v591 = vadd.f32 %v589, %v590
    %v592 = vsel %vm332, %v122, 0.0
    %v593 = vadd.f32 %v591, %v592
    %v594 = vsel %vm332, %v126, 0.0
    %v595 = vadd.f32 %v593, %v594
    %v596 = vsel %vm332, %v130, 0.0
    %v597 = vadd.f32 %v595, %v596
    %v598 = vsel %vm332, %v134, 0.0
    %v599 = vadd.f32 %v597, %v598
    %v600 = vsel %vm332, %v107, 0.0
    %v601 = vsel %vm332, %v111, 0.0
    %v602 = vadd.f32 %v600, %v601
    %v603 = vsel %vm332, %v115, 0.0
    %v604 = vadd.f32 %v602, %v603
    %v605 = vsel %vm332, %v119, 0.0
    %v606 = vadd.f32 %v604, %v605
    %v607 = vsel %vm332, %v123, 0.0
    %v608 = vadd.f32 %v606, %v607
    %v609 = vsel %vm332, %v127, 0.0
    %v610 = vadd.f32 %v608, %v609
    %v611 = vsel %vm332, %v131, 0.0
    %v612 = vadd.f32 %v610, %v611
    %v613 = vsel %vm332, %v135, 0.0
    %v614 = vadd.f32 %v612, %v613
    %v615 = vrcp.pop 8.0
    %v616 = vmul.f32 8.0, %v615
    %v617 = vsub.f32 1.0, %v616
    %v618 = vmul.f32 %v615, %v617
    %v619 = vadd.f32 %v615, %v618
    %vm620 = vweird.f32 %v615
    %v621 = vsel %vm620, %v615, %v619
    %v622 = vmul.f32 %v569, %v621
    %v623 = vmul.f32 %v584, %v621
    %v624 = vmul.f32 %v599, %v621
    %v625 = vmul.f32 %v614, %v621
    %v626 = vsub.f32 %v104, %v622
    %v627 = vsub.f32 %v105, %v623
    %v628 = vsub.f32 %v106, %v624
    %v629 = vsub.f32 %v107, %v625
    %v630 = vsub.f32 %v108, %v622
    %v631 = vsub.f32 %v109, %v623
    %v632 = vsub.f32 %v110, %v624
    %v633 = vsub.f32 %v111, %v625
    %v634 = vsub.f32 %v112, %v622
    %v635 = vsub.f32 %v113, %v623
    %v636 = vsub.f32 %v114, %v624
    %v637 = vsub.f32 %v115, %v625
    %v638 = vsub.f32 %v116, %v622
    %v639 = vsub.f32 %v117, %v623
    %v640 = vsub.f32 %v118, %v624
    %v641 = vsub.f32 %v119, %v625
    %v642 = vsub.f32 %v120, %v622
    %v643 = vsub.f32 %v121, %v623
    %v644 = vsub.f32 %v122, %v624
    %v645 = vsub.f32 %v123, %v625
    %v646 = vsub.f32 %v124, %v622
    %v647 = vsub.f32 %v125, %v623
    %v648 = vsub.f32 %v126, %v624
    %v649 = vsub.f32 %v127, %v625
    %v650 = vsub.f32 %v128, %v622
    %v651 = vsub.f32 %v129, %v623
    %v652 = vsub.f32 %v130, %v624
    %v653 = vsub.f32 %v131, %v625
    %v654 = vsub.f32 %v132, %v622
    %v655 = vsub.f32 %v133, %v623
    %v656 = vsub.f32 %v134, %v624
    %v657 = vsub.f32 %v135, %v625
    %v658 = vmul.f32 %v626, %v626
    %v659 = vmul.f32 %v627, %v627
    %v660 = vmul.f32 %v628, %v628
    %v661 = vmul.f32 %v629, %v629
    %v662 = vmul.f32 %v630, %v630
    %v663 = vmul.f32 %v631, %v631
    %v664 = vmul.f32 %v632, %v632
    %v665 = vmul.f32 %v633, %v633
    %v666 = vmul.f32 %v634, %v634
    %v667 = vmul.f32 %v635, %v635
    %v668 = vmul.f32 %v636, %v636
    %v669 = vmul.f32 %v637, %v637
    %v670 = vmul.f32 %v638, %v638
    %v671 = vmul.f32 %v639, %v639
    %v672 = vmul.f32 %v640, %v640
    %v673 = vmul.f32 %v641, %v641
    %v674 = vmul.f32 %v642, %v642
    %v675 = vmul.f32 %v643, %v643
    %v676 = vmul.f32 %v644, %v644
    %v677 = vmul.f32 %v645, %v645
    %v678 = vmul.f32 %v646, %v646
    %v679 = vmul.f32 %v647, %v647
    %v680 = vmul.f32 %v648, %v648
    %v681 = vmul.f32 %v649, %v649
    %v682 = vmul.f32 %v650, %v650
    %v683 = vmul.f32 %v651, %v651
    %v684 = vmul.f32 %v652, %v652
    %v685 = vmul.f32 %v653, %v653
    %v686 = vmul.f32 %v654, %v654
    %v687 = vmul.f32 %v655, %v655
    %v688 = vmul.f32 %v656, %v656
    %v689 = vmul.f32 %v657, %v657
    %v690 = vsel %vm332, %v658, 0.0
    %v691 = vsel %vm332, %v662, 0.0
    %v692 = vadd.f32 %v690, %v691
    %v693 = vsel %vm332, %v666, 0.0
    %v694 = vadd.f32 %v692, %v693
    %v695 = vsel %vm332, %v670, 0.0
    %v696 = vadd.f32 %v694, %v695
    %v697 = vsel %vm332, %v674, 0.0
    %v698 = vadd.f32 %v696, %v697
    %v699 = vsel %vm332, %v678, 0.0
    %v700 = vadd.f32 %v698, %v699
    %v701 = vsel %vm332, %v682, 0.0
    %v702 = vadd.f32 %v700, %v701
    %v703 = vsel %vm332, %v686, 0.0
    %v704 = vadd.f32 %v702, %v703
    %v705 = vsel %vm332, %v659, 0.0
    %v706 = vsel %vm332, %v663, 0.0
    %v707 = vadd.f32 %v705, %v706
    %v708 = vsel %vm332, %v667, 0.0
    %v709 = vadd.f32 %v707, %v708
    %v710 = vsel %vm332, %v671, 0.0
    %v711 = vadd.f32 %v709, %v710
    %v712 = vsel %vm332, %v675, 0.0
    %v713 = vadd.f32 %v711, %v712
    %v714 = vsel %vm332, %v679, 0.0
    %v715 = vadd.f32 %v713, %v714
    %v716 = vsel %vm332, %v683, 0.0
    %v717 = vadd.f32 %v715, %v716
    %v718 = vsel %vm332, %v687, 0.0
    %v719 = vadd.f32 %v717, %v718
    %v720 = vsel %vm332, %v660, 0.0
    %v721 = vsel %vm332, %v664, 0.0
    %v722 = vadd.f32 %v720, %v721
    %v723 = vsel %vm332, %v668, 0.0
    %v724 = vadd.f32 %v722, %v723
    %v725 = vsel %vm332, %v672, 0.0
    %v726 = vadd.f32 %v724, %v725
    %v727 = vsel %vm332, %v676, 0.0
    %v728 = vadd.f32 %v726, %v727
    %v729 = vsel %vm332, %v680, 0.0
    %v730 = vadd.f32 %v728, %v729
    %v731 = vsel %vm332, %v684, 0.0
    %v732 = vadd.f32 %v730, %v731
    %v733 = vsel %vm332, %v688, 0.0
    %v734 = vadd.f32 %v732, %v733
    %v735 = vsel %vm332, %v661, 0.0
    %v736 = vsel %vm332, %v665, 0.0
    %v737 = vadd.f32 %v735, %v736
    %v738 = vsel %vm332, %v669, 0.0
    %v739 = vadd.f32 %v737, %v738
    %v740 = vsel %vm332, %v673, 0.0
    %v741 = vadd.f32 %v739, %v740
    %v742 = vsel %vm332, %v677, 0.0
    %v743 = vadd.f32 %v741, %v742
    %v744 = vsel %vm332, %v681, 0.0
    %v745 = vadd.f32 %v743, %v744
    %v746 = vsel %vm332, %v685, 0.0
    %v747 = vadd.f32 %v745, %v746
    %v748 = vsel %vm332, %v689, 0.0
    %v749 = vadd.f32 %v747, %v748
    %v750 = vmul.f32 %v704, %v621
    %v751 = vmul.f32 %v719, %v621
    %v752 = vmul.f32 %v734, %v621
    %v753 = vmul.f32 %v749, %v621
    %v754 = vadd.f32 %v750, 1e-05
    %v755 = vadd.f32 %v751, 1e-05
    %v756 = vadd.f32 %v752, 1e-05
    %v757 = vadd.f32 %v753, 1e-05
    %v758 = vrsqrt.pop %v754
    %v759 = vmul.f32 %v758, %v754
    %v760 = vmul.f32 %v759, %v758
    %v761 = vmul.f32 0.5, %v760
    %v762 = vsub.f32 1.5, %v761
    %v763 = vmul.f32 %v758, %v762
    %vm764 = vweird.f32 %v754
    %vm765 = vweird.f32 %v758
    %vm766 = vmor %vm764, %vm765
    %v767 = vsel %vm766, %v758, %v763
    %v768 = vrsqrt.pop %v755
    %v769 = vmul.f32 %v768, %v755
    %v770 = vmul.f32 %v769, %v768
    %v771 = vmul.f32 0.5, %v770
    %v772 = vsub.f32 1.5, %v771
    %v773 = vmul.f32 %v768, %v772
    %vm774 = vweird.f32 %v755
    %vm775 = vweird.f32 %v768
    %vm776 = vmor %vm774, %vm775
    %v777 = vsel %vm776, %v768, %v773
    %v778 = vrsqrt.pop %v756
    %v779 = vmul.f32 %v778, %v756
    %v780 = vmul.f32 %v779, %v778
    %v781 = vmul.f32 0.5, %v780
    %v782 = vsub.f32 1.5, %v781
    %v783 = vmul.f32 %v778, %v782
    %vm784 = vweird.f32 %v756
    %vm785 = vweird.f32 %v778
    %vm786 = vmor %vm784, %vm785
    %v787 = vsel %vm786, %v778, %v783
    %v788 = vrsqrt.pop %v757
    %v789 = vmul.f32 %v788, %v757
    %v790 = vmul.f32 %v789, %v788
    %v791 = vmul.f32 0.5, %v790
    %v792 = vsub.f32 1.5, %v791
    %v793 = vmul.f32 %v788, %v792
    %vm794 = vweird.f32 %v757
    %vm795 = vweird.f32 %v788
    %vm796 = vmor %vm794, %vm795
    %v797 = vsel %vm796, %v788, %v793
    %v798 = vmul.f32 %v626, %v767
    %v799 = vmul.f32 %v627, %v777
    %v800 = vmul.f32 %v628, %v787
    %v801 = vmul.f32 %v629, %v797
    %v802 = vmul.f32 %v630, %v767
    %v803 = vmul.f32 %v631, %v777
    %v804 = vmul.f32 %v632, %v787
    %v805 = vmul.f32 %v633, %v797
    %v806 = vmul.f32 %v634, %v767
    %v807 = vmul.f32 %v635, %v777
    %v808 = vmul.f32 %v636, %v787
    %v809 = vmul.f32 %v637, %v797
    %v810 = vmul.f32 %v638, %v767
    %v811 = vmul.f32 %v639, %v777
    %v812 = vmul.f32 %v640, %v787
    %v813 = vmul.f32 %v641, %v797
    %v814 = vmul.f32 %v642, %v767
    %v815 = vmul.f32 %v643, %v777
    %v816 = vmul.f32 %v644, %v787
    %v817 = vmul.f32 %v645, %v797
    %v818 = vmul.f32 %v646, %v767
    %v819 = vmul.f32 %v647, %v777
    %v820 = vmul.f32 %v648, %v787
    %v821 = vmul.f32 %v649, %v797
    %v822 = vmul.f32 %v650, %v767
    %v823 = vmul.f32 %v651, %v777
    %v824 = vmul.f32 %v652, %v787
    %v825 = vmul.f32 %v653, %v797
    %v826 = vmul.f32 %v654, %v767
    %v827 = vmul.f32 %v655, %v777
    %v828 = vmul.f32 %v656, %v787
    %v829 = vmul.f32 %v657, %v797
    %s830 = sld [smem:[#allocation9]]
    %v831 = vstv %s830
    %v832 = vmul.f32 %v798, %v831
    %v833 = vmul.f32 %v799, %v831
    %v834 = vmul.f32 %v800, %v831
    %v835 = vmul.f32 %v801, %v831
    %s836 = sld [smem:[#allocation9 + $0x4]]
    %v837 = vstv %s836
    %v838 = vmul.f32 %v802, %v837
    %v839 = vmul.f32 %v803, %v837
    %v840 = vmul.f32 %v804, %v837
    %v841 = vmul.f32 %v805, %v837
    %v842 = vadd.f32 %v832, %v838
    %v843 = vadd.f32 %v833, %v839
    %v844 = vadd.f32 %v834, %v840
    %v845 = vadd.f32 %v835, %v841
    %s846 = sld [smem:[#allocation9 + $0x8]]
    %v847 = vstv %s846
    %v848 = vmul.f32 %v806, %v847
    %v849 = vmul.f32 %v807, %v847
    %v850 = vmul.f32 %v808, %v847
    %v851 = vmul.f32 %v809, %v847
    %v852 = vadd.f32 %v842, %v848
    %v853 = vadd.f32 %v843, %v849
    %v854 = vadd.f32 %v844, %v850
    %v855 = vadd.f32 %v845, %v851
    %s856 = sld [smem:[#allocation9 + $0xc]]
    %v857 = vstv %s856
    %v858 = vmul.f32 %v810, %v857
    %v859 = vmul.f32 %v811, %v857
    %v860 = vmul.f32 %v812, %v857
    %v861 = vmul.f32 %v813, %v857
    %v862 = vadd.f32 %v852, %v858
    %v863 = vadd.f32 %v853, %v859
    %v864 = vadd.f32 %v854, %v860
    %v865 = vadd.f32 %v855, %v861
    %s866 = sld [smem:[#allocation9 + $0x10]]
    %v867 = vstv %s866
    %v868 = vmul.f32 %v814, %v867
    %v869 = vmul.f32 %v815, %v867
    %v870 = vmul.f32 %v816, %v867
    %v871 = vmul.f32 %v817, %v867
    %v872 = vadd.f32 %v862, %v868
    %v873 = vadd.f32 %v863, %v869
    %v874 = vadd.f32 %v864, %v870
    %v875 = vadd.f32 %v865, %v871
    %s876 = sld [smem:[#allocation9 + $0x14]]
    %v877 = vstv %s876
    %v878 = vmul.f32 %v818, %v877
    %v879 = vmul.f32 %v819, %v877
    %v880 = vmul.f32 %v820, %v877
    %v881 = vmul.f32 %v821, %v877
    %v882 = vadd.f32 %v872, %v878
    %v883 = vadd.f32 %v873, %v879
    %v884 = vadd.f32 %v874, %v880
    %v885 = vadd.f32 %v875, %v881
    %s886 = sld [smem:[#allocation9 + $0x18]]
    %v887 = vstv %s886
    %v888 = vmul.f32 %v822, %v887
    %v889 = vmul.f32 %v823, %v887
    %v890 = vmul.f32 %v824, %v887
    %v891 = vmul.f32 %v825, %v887
    %v892 = vadd.f32 %v882, %v888
    %v893 = vadd.f32 %v883, %v889
    %v894 = vadd.f32 %v884, %v890
    %v895 = vadd.f32 %v885, %v891
    %s896 = sld [smem:[#allocation9 + $0x1c]]
    %v897 = vstv %s896
    %v898 = vmul.f32 %v826, %v897
    %v899 = vmul.f32 %v827, %v897
    %v900 = vmul.f32 %v828, %v897
    %v901 = vmul.f32 %v829, %v897
    %v902 = vadd.f32 %v892, %v898
    %v903 = vadd.f32 %v893, %v899
    %v904 = vadd.f32 %v894, %v900
    %v905 = vadd.f32 %v895, %v901
    %s906 = sld [smem:[#allocation9 + $0x20]]
    %v907 = vstv %s906
    %v908 = vadd.f32 %v902, %v907
    %v909 = vadd.f32 %v903, %v907
    %v910 = vadd.f32 %v904, %v907
    %v911 = vadd.f32 %v905, %v907
    %s912 = sld [smem:[#allocation9 + $0x1]]
    %v913 = vstv %s912
    %v914 = vmul.f32 %v798, %v913
    %v915 = vmul.f32 %v799, %v913
    %v916 = vmul.f32 %v800, %v913
    %v917 = vmul.f32 %v801, %v913
    %s918 = sld [smem:[#allocation9 + $0x5]]
    %v919 = vstv %s918
    %v920 = vmul.f32 %v802, %v919
    %v921 = vmul.f32 %v803, %v919
    %v922 = vmul.f32 %v804, %v919
    %v923 = vmul.f32 %v805, %v919
    %v924 = vadd.f32 %v914, %v920
    %v925 = vadd.f32 %v915, %v921
    %v926 = vadd.f32 %v916, %v922
    %v927 = vadd.f32 %v917, %v923
    %s928 = sld [smem:[#allocation9 + $0x9]]
    %v929 = vstv %s928
    %v930 = vmul.f32 %v806, %v929
    %v931 = vmul.f32 %v807, %v929
    %v932 = vmul.f32 %v808, %v929
    %v933 = vmul.f32 %v809, %v929
    %v934 = vadd.f32 %v924, %v930
    %v935 = vadd.f32 %v925, %v931
    %v936 = vadd.f32 %v926, %v932
    %v937 = vadd.f32 %v927, %v933
    %s938 = sld [smem:[#allocation9 + $0xd]]
    %v939 = vstv %s938
    %v940 = vmul.f32 %v810, %v939
    %v941 = vmul.f32 %v811, %v939
    %v942 = vmul.f32 %v812, %v939
    %v943 = vmul.f32 %v813, %v939
    %v944 = vadd.f32 %v934, %v940
    %v945 = vadd.f32 %v935, %v941
    %v946 = vadd.f32 %v936, %v942
    %v947 = vadd.f32 %v937, %v943
    %s948 = sld [smem:[#allocation9 + $0x11]]
    %v949 = vstv %s948
    %v950 = vmul.f32 %v814, %v949
    %v951 = vmul.f32 %v815, %v949
    %v952 = vmul.f32 %v816, %v949
    %v953 = vmul.f32 %v817, %v949
    %v954 = vadd.f32 %v944, %v950
    %v955 = vadd.f32 %v945, %v951
    %v956 = vadd.f32 %v946, %v952
    %v957 = vadd.f32 %v947, %v953
    %s958 = sld [smem:[#allocation9 + $0x15]]
    %v959 = vstv %s958
    %v960 = vmul.f32 %v818, %v959
    %v961 = vmul.f32 %v819, %v959
    %v962 = vmul.f32 %v820, %v959
    %v963 = vmul.f32 %v821, %v959
    %v964 = vadd.f32 %v954, %v960
    %v965 = vadd.f32 %v955, %v961
    %v966 = vadd.f32 %v956, %v962
    %v967 = vadd.f32 %v957, %v963
    %s968 = sld [smem:[#allocation9 + $0x19]]
    %v969 = vstv %s968
    %v970 = vmul.f32 %v822, %v969
    %v971 = vmul.f32 %v823, %v969
    %v972 = vmul.f32 %v824, %v969
    %v973 = vmul.f32 %v825, %v969
    %v974 = vadd.f32 %v964, %v970
    %v975 = vadd.f32 %v965, %v971
    %v976 = vadd.f32 %v966, %v972
    %v977 = vadd.f32 %v967, %v973
    %s978 = sld [smem:[#allocation9 + $0x1d]]
    %v979 = vstv %s978
    %v980 = vmul.f32 %v826, %v979
    %v981 = vmul.f32 %v827, %v979
    %v982 = vmul.f32 %v828, %v979
    %v983 = vmul.f32 %v829, %v979
    %v984 = vadd.f32 %v974, %v980
    %v985 = vadd.f32 %v975, %v981
    %v986 = vadd.f32 %v976, %v982
    %v987 = vadd.f32 %v977, %v983
    %s988 = sld [smem:[#allocation9 + $0x21]]
    %v989 = vstv %s988
    %v990 = vadd.f32 %v984, %v989
    %v991 = vadd.f32 %v985, %v989
    %v992 = vadd.f32 %v986, %v989
    %v993 = vadd.f32 %v987, %v989
    %s994 = sld [smem:[#allocation9 + $0x2]]
    %v995 = vstv %s994
    %v996 = vmul.f32 %v798, %v995
    %v997 = vmul.f32 %v799, %v995
    %v998 = vmul.f32 %v800, %v995
    %v999 = vmul.f32 %v801, %v995
    %s1000 = sld [smem:[#allocation9 + $0x6]]
    %v1001 = vstv %s1000
    %v1002 = vmul.f32 %v802, %v1001
    %v1003 = vmul.f32 %v803, %v1001
    %v1004 = vmul.f32 %v804, %v1001
    %v1005 = vmul.f32 %v805, %v1001
    %v1006 = vadd.f32 %v996, %v1002
    %v1007 = vadd.f32 %v997, %v1003
    %v1008 = vadd.f32 %v998, %v1004
    %v1009 = vadd.f32 %v999, %v1005
    %s1010 = sld [smem:[#allocation9 + $0xa]]
    %v1011 = vstv %s1010
    %v1012 = vmul.f32 %v806, %v1011
    %v1013 = vmul.f32 %v807, %v1011
    %v1014 = vmul.f32 %v808, %v1011
    %v1015 = vmul.f32 %v809, %v1011
    %v1016 = vadd.f32 %v1006, %v1012
    %v1017 = vadd.f32 %v1007, %v1013
    %v1018 = vadd.f32 %v1008, %v1014
    %v1019 = vadd.f32 %v1009, %v1015
    %s1020 = sld [smem:[#allocation9 + $0xe]]
    %v1021 = vstv %s1020
    %v1022 = vmul.f32 %v810, %v1021
    %v1023 = vmul.f32 %v811, %v1021
    %v1024 = vmul.f32 %v812, %v1021
    %v1025 = vmul.f32 %v813, %v1021
    %v1026 = vadd.f32 %v1016, %v1022
    %v1027 = vadd.f32 %v1017, %v1023
    %v1028 = vadd.f32 %v1018, %v1024
    %v1029 = vadd.f32 %v1019, %v1025
    %s1030 = sld [smem:[#allocation9 + $0x12]]
    %v1031 = vstv %s1030
    %v1032 = vmul.f32 %v814, %v1031
    %v1033 = vmul.f32 %v815, %v1031
    %v1034 = vmul.f32 %v816, %v1031
    %v1035 = vmul.f32 %v817, %v1031
    %v1036 = vadd.f32 %v1026, %v1032
    %v1037 = vadd.f32 %v1027, %v1033
    %v1038 = vadd.f32 %v1028, %v1034
    %v1039 = vadd.f32 %v1029, %v1035
    %s1040 = sld [smem:[#allocation9 + $0x16]]
    %v1041 = vstv %s1040
    %v1042 = vmul.f32 %v818, %v1041
    %v1043 = vmul.f32 %v819, %v1041
    %v1044 = vmul.f32 %v820, %v1041
    %v1045 = vmul.f32 %v821, %v1041
    %v1046 = vadd.f32 %v1036, %v1042
    %v1047 = vadd.f32 %v1037, %v1043
    %v1048 = vadd.f32 %v1038, %v1044
    %v1049 = vadd.f32 %v1039, %v1045
    %s1050 = sld [smem:[#allocation9 + $0x1a]]
    %v1051 = vstv %s1050
    %v1052 = vmul.f32 %v822, %v1051
    %v1053 = vmul.f32 %v823, %v1051
    %v1054 = vmul.f32 %v824, %v1051
    %v1055 = vmul.f32 %v825, %v1051
    %v1056 = vadd.f32 %v1046, %v1052
    %v1057 = vadd.f32 %v1047, %v1053
    %v1058 = vadd.f32 %v1048, %v1054
    %v1059 = vadd.f32 %v1049, %v1055
    %s1060 = sld [smem:[#allocation9 + $0x1e]]
    %v1061 = vstv %s1060
    %v1062 = vmul.f32 %v826, %v1061
    %v1063 = vmul.f32 %v827, %v1061
    %v1064 = vmul.f32 %v828, %v1061
    %v1065 = vmul.f32 %v829, %v1061
    %v1066 = vadd.f32 %v1056, %v1062
    %v1067 = vadd.f32 %v1057, %v1063
    %v1068 = vadd.f32 %v1058, %v1064
    %v1069 = vadd.f32 %v1059, %v1065
    %s1070 = sld [smem:[#allocation9 + $0x22]]
    %v1071 = vstv %s1070
    %v1072 = vadd.f32 %v1066, %v1071
    %v1073 = vadd.f32 %v1067, %v1071
    %v1074 = vadd.f32 %v1068, %v1071
    %v1075 = vadd.f32 %v1069, %v1071
    %s1076 = sld [smem:[#allocation9 + $0x3]]
    %v1077 = vstv %s1076
    %v1078 = vmul.f32 %v798, %v1077
    %v1079 = vmul.f32 %v799, %v1077
    %v1080 = vmul.f32 %v800, %v1077
    %v1081 = vmul.f32 %v801, %v1077
    %s1082 = sld [smem:[#allocation9 + $0x7]]
    %v1083 = vstv %s1082
    %v1084 = vmul.f32 %v802, %v1083
    %v1085 = vmul.f32 %v803, %v1083
    %v1086 = vmul.f32 %v804, %v1083
    %v1087 = vmul.f32 %v805, %v1083
    %v1088 = vadd.f32 %v1078, %v1084
    %v1089 = vadd.f32 %v1079, %v1085
    %v1090 = vadd.f32 %v1080, %v1086
    %v1091 = vadd.f32 %v1081, %v1087
    %s1092 = sld [smem:[#allocation9 + $0xb]]
    %v1093 = vstv %s1092
    %v1094 = vmul.f32 %v806, %v1093
    %v1095 = vmul.f32 %v807, %v1093
    %v1096 = vmul.f32 %v808, %v1093
    %v1097 = vmul.f32 %v809, %v1093
    %v1098 = vadd.f32 %v1088, %v1094
    %v1099 = vadd.f32 %v1089, %v1095
    %v1100 = vadd.f32 %v1090, %v1096
    %v1101 = vadd.f32 %v1091, %v1097
    %s1102 = sld [smem:[#allocation9 + $0xf]]
    %v1103 = vstv %s1102
    %v1104 = vmul.f32 %v810, %v1103
    %v1105 = vmul.f32 %v811, %v1103
    %v1106 = vmul.f32 %v812, %v1103
    %v1107 = vmul.f32 %v813, %v1103
    %v1108 = vadd.f32 %v1098, %v1104
    %v1109 = vadd.f32 %v1099, %v1105
    %v1110 = vadd.f32 %v1100, %v1106
    %v1111 = vadd.f32 %v1101, %v1107
    %s1112 = sld [smem:[#allocation9 + $0x13]]
    %v1113 = vstv %s1112
    %v1114 = vmul.f32 %v814, %v1113
    %v1115 = vmul.f32 %v815, %v1113
    %v1116 = vmul.f32 %v816, %v1113
    %v1117 = vmul.f32 %v817, %v1113
    %v1118 = vadd.f32 %v1108, %v1114
    %v1119 = vadd.f32 %v1109, %v1115
    %v1120 = vadd.f32 %v1110, %v1116
    %v1121 = vadd.f32 %v1111, %v1117
    %s1122 = sld [smem:[#allocation9 + $0x17]]
    %v1123 = vstv %s1122
    %v1124 = vmul.f32 %v818, %v1123
    %v1125 = vmul.f32 %v819, %v1123
    %v1126 = vmul.f32 %v820, %v1123
    %v1127 = vmul.f32 %v821, %v1123
    %v1128 = vadd.f32 %v1118, %v1124
    %v1129 = vadd.f32 %v1119, %v1125
    %v1130 = vadd.f32 %v1120, %v1126
    %v1131 = vadd.f32 %v1121, %v1127
    %s1132 = sld [smem:[#allocation9 + $0x1b]]
    %v1133 = vstv %s1132
    %v1134 = vmul.f32 %v822, %v1133
    %v1135 = vmul.f32 %v823, %v1133
    %v1136 = vmul.f32 %v824, %v1133
    %v1137 = vmul.f32 %v825, %v1133
    %v1138 = vadd.f32 %v1128, %v1134
    %v1139 = vadd.f32 %v1129, %v1135
    %v1140 = vadd.f32 %v1130, %v1136
    %v1141 = vadd.f32 %v1131, %v1137
    %s1142 = sld [smem:[#allocation9 + $0x1f]]
    %v1143 = vstv %s1142
    %v1144 = vmul.f32 %v826, %v1143
    %v1145 = vmul.f32 %v827, %v1143
    %v1146 = vmul.f32 %v828, %v1143
    %v1147 = vmul.f32 %v829, %v1143
    %v1148 = vadd.f32 %v1138, %v1144
    %v1149 = vadd.f32 %v1139, %v1145
    %v1150 = vadd.f32 %v1140, %v1146
    %v1151 = vadd.f32 %v1141, %v1147
    %s1152 = sld [smem:[#allocation9 + $0x23]]
    %v1153 = vstv %s1152
    %v1154 = vadd.f32 %v1148, %v1153
    %v1155 = vadd.f32 %v1149, %v1153
    %v1156 = vadd.f32 %v1150, %v1153
    %v1157 = vadd.f32 %v1151, %v1153
    %v1158 = vsel %vm332, %v199, 0.0
    %1159 = vadd.xlane.f32.xlu0 %v1158
    %v1160 = vpop.xlane.xlu0 %1159
    %v1161 = vsel %vm332, %v200, 0.0
    %1162 = vadd.xlane.f32.xlu0 %v1161
    %v1163 = vpop.xlane.xlu0 %1162
    %v1164 = vsel %vm332, %v201, 0.0
    %1165 = vadd.xlane.f32.xlu0 %v1164
    %v1166 = vpop.xlane.xlu0 %1165
    %v1167 = vsel %vm332, %v202, 0.0
    %1168 = vadd.xlane.f32.xlu0 %v1167
    %v1169 = vpop.xlane.xlu0 %1168
    %v1170 = vrcp.pop 32.0
    %v1171 = vmul.f32 32.0, %v1170
    %v1172 = vsub.f32 1.0, %v1171
    %v1173 = vmul.f32 %v1170, %v1172
    %v1174 = vadd.f32 %v1170, %v1173
    %vm1175 = vweird.f32 %v1170
    %v1176 = vsel %vm1175, %v1170, %v1174
    %v1177 = vmul.f32 %v1160, %v1176
    %v1178 = vmul.f32 %v1163, %v1176
    %v1179 = vmul.f32 %v1166, %v1176
    %v1180 = vmul.f32 %v1169, %v1176
    %v1181 = vsub.f32 %v199, %v1177
    %v1182 = vsub.f32 %v200, %v1178
    %v1183 = vsub.f32 %v201, %v1179
    %v1184 = vsub.f32 %v202, %v1180
    %v1185 = vmul.f32 %v1181, %v1181
    %v1186 = vmul.f32 %v1182, %v1182
    %v1187 = vmul.f32 %v1183, %v1183
    %v1188 = vmul.f32 %v1184, %v1184
    %v1189 = vsel %vm332, %v1185, 0.0
    %1190 = vadd.xlane.f32.xlu0 %v1189
    %v1191 = vpop.xlane.xlu0 %1190
    %v1192 = vsel %vm332, %v1186, 0.0
    %1193 = vadd.xlane.f32.xlu0 %v1192
    %v1194 = vpop.xlane.xlu0 %1193
    %v1195 = vsel %vm332, %v1187, 0.0
    %1196 = vadd.xlane.f32.xlu0 %v1195
    %v1197 = vpop.xlane.xlu0 %1196
    %v1198 = vsel %vm332, %v1188, 0.0
    %1199 = vadd.xlane.f32.xlu0 %v1198
    %v1200 = vpop.xlane.xlu0 %1199
    %v1201 = vmul.f32 %v1191, %v1176
    %v1202 = vmul.f32 %v1194, %v1176
    %v1203 = vmul.f32 %v1197, %v1176
    %v1204 = vmul.f32 %v1200, %v1176
    %v1205 = vadd.f32 %v1201, 1e-05
    %v1206 = vadd.f32 %v1202, 1e-05
    %v1207 = vadd.f32 %v1203, 1e-05
    %v1208 = vadd.f32 %v1204, 1e-05
    %v1209 = vrsqrt.pop %v1205
    %v1210 = vmul.f32 %v1209, %v1205
    %v1211 = vmul.f32 %v1210, %v1209
    %v1212 = vmul.f32 0.5, %v1211
    %v1213 = vsub.f32 1.5, %v1212
    %v1214 = vmul.f32 %v1209, %v1213
    %vm1215 = vweird.f32 %v1205
    %vm1216 = vweird.f32 %v1209
    %vm1217 = vmor %vm1215, %vm1216
    %v1218 = vsel %vm1217, %v1209, %v1214
    %v1219 = vrsqrt.pop %v1206
    %v1220 = vmul.f32 %v1219, %v1206
    %v1221 = vmul.f32 %v1220, %v1219
    %v1222 = vmul.f32 0.5, %v1221
    %v1223 = vsub.f32 1.5, %v1222
    %v1224 = vmul.f32 %v1219, %v1223
    %vm1225 = vweird.f32 %v1206
    %vm1226 = vweird.f32 %v1219
    %vm1227 = vmor %vm1225, %vm1226
    %v1228 = vsel %vm1227, %v1219, %v1224
    %v1229 = vrsqrt.pop %v1207
    %v1230 = vmul.f32 %v1229, %v1207
    %v1231 = vmul.f32 %v1230, %v1229
    %v1232 = vmul.f32 0.5, %v1231
    %v1233 = vsub.f32 1.5, %v1232
    %v1234 = vmul.f32 %v1229, %v1233
    %vm1235 = vweird.f32 %v1207
    %vm1236 = vweird.f32 %v1229
    %vm1237 = vmor %vm1235, %vm1236
    %v1238 = vsel %vm1237, %v1229, %v1234
    %v1239 = vrsqrt.pop %v1208
    %v1240 = vmul.f32 %v1239, %v1208
    %v1241 = vmul.f32 %v1240, %v1239
    %v1242 = vmul.f32 0.5, %v1241
    %v1243 = vsub.f32 1.5, %v1242
    %v1244 = vmul.f32 %v1239, %v1243
    %vm1245 = vweird.f32 %v1208
    %vm1246 = vweird.f32 %v1239
    %vm1247 = vmor %vm1245, %vm1246
    %v1248 = vsel %vm1247, %v1239, %v1244
    %v1249 = vmul.f32 %v1181, %v1218
    %v1250 = vmul.f32 %v1182, %v1228
    %v1251 = vmul.f32 %v1183, %v1238
    %v1252 = vmul.f32 %v1184, %v1248
    %v1253 = vmul.f32 %v1249, %v433
    %v1254 = vmul.f32 %v1250, %v448
    %v1255 = vmul.f32 %v1251, %v463
    %v1256 = vmul.f32 %v1252, %v478
    %1261 = vrot.lane.b32.xlu0 %v363, 96
    %v1262 = vpop.permute.xlu0 %1261
    %1263 = vrot.lane.b32.xlu0 %v366, 96
    %v1264 = vpop.permute.xlu0 %1263
    %1265 = vrot.lane.b32.xlu0 %v369, 96
    %v1266 = vpop.permute.xlu0 %1265
    %1267 = vrot.lane.b32.xlu0 %v372, 96
    %v1268 = vpop.permute.xlu0 %1267
    %v1273 = vadd.f32 %v1253, %v1262
    %v1274 = vadd.f32 %v1254, %v1264
    %v1275 = vadd.f32 %v1255, %v1266
    %v1276 = vadd.f32 %v1256, %v1268
    %v1277 = vmul.f32 %v1273, %v182
    %v1278 = vmul.f32 %v1274, %v187
    %v1279 = vmul.f32 %v1275, %v192
    %v1280 = vmul.f32 %v1276, %v197
    %v1282 = vsel %vm332, %v1277, 0
    %v1285 = vsel %vm332, %v1278, 0
    %v1288 = vsel %vm332, %v1279, 0
    %v1291 = vsel %vm332, %v1280, 0
    %1293 = vmatpush.msra.mxu0 0.0
    %1294 = vmatpush.msra.mxu0 0.0
    %1295 = vmatpush.msra.mxu0 0.0
    %1296 = vmatpush.msra.mxu0 0.0
    %1297 = vmatpush.msra.mxu0 0.0
    %1298 = vmatpush.msra.mxu0 0.0
    %1299 = vmatpush.msra.mxu0 0.0
    %1300 = vmatpush.msra.mxu0 0.0
    %1301 = vmatpush.msra.mxu0 0.0
    %1302 = vmatpush.msra.mxu0 0.0
    %1303 = vmatpush.msra.mxu0 0.0
    %1304 = vmatpush.msra.mxu0 0.0
    %1305 = vmatpush.msra.mxu0 %v147
    %1306 = vmatpush.msra.mxu0 %v146
    %1307 = vmatpush.msra.mxu0 %v145
    %1308 = vmatpush.msra.mxu0 %v144
    %1309 = vmatmul.f32.gmra.mxu0 %v1282
    %v1310 = vpop.f32.mrf.mxu0
    %v1311 = vadd.f32 %v173, %v1310
    %1312 = vmatmul.f32.gmra.mxu0 %v1285
    %v1313 = vpop.f32.mrf.mxu0
    %v1314 = vadd.f32 %v173, %v1313
    %1315 = vmatmul.f32.gmra.mxu0 %v1288
    %v1316 = vpop.f32.mrf.mxu0
    %v1317 = vadd.f32 %v173, %v1316
    %1318 = vmatmul.f32.gmra.mxu0 %v1291
    %v1319 = vpop.f32.mrf.mxu0
    %v1320 = vadd.f32 %v173, %v1319
    %1321 = vdwg.mxu0
    %vm1322 = vcmask 64512
    %v1323 = vsel %vm1322, %v1311, 0.0
    %1324 = vadd.xlane.f32.xlu0 %v1323
    %v1325 = vpop.xlane.xlu0 %1324
    %v1326 = vsel %vm1322, %v1314, 0.0
    %1327 = vadd.xlane.f32.xlu0 %v1326
    %v1328 = vpop.xlane.xlu0 %1327
    %v1329 = vsel %vm1322, %v1317, 0.0
    %1330 = vadd.xlane.f32.xlu0 %v1329
    %v1331 = vpop.xlane.xlu0 %1330
    %v1332 = vsel %vm1322, %v1320, 0.0
    %1333 = vadd.xlane.f32.xlu0 %v1332
    %v1334 = vpop.xlane.xlu0 %1333
    %v1335 = vmul.f32 %v1325, %v621
    %v1336 = vmul.f32 %v1328, %v621
    %v1337 = vmul.f32 %v1331, %v621
    %v1338 = vmul.f32 %v1334, %v621
    %v1339 = vsub.f32 %v1311, %v1335
    %v1340 = vsub.f32 %v1314, %v1336
    %v1341 = vsub.f32 %v1317, %v1337
    %v1342 = vsub.f32 %v1320, %v1338
    %v1343 = vmul.f32 %v1339, %v1339
    %v1344 = vmul.f32 %v1340, %v1340
    %v1345 = vmul.f32 %v1341, %v1341
    %v1346 = vmul.f32 %v1342, %v1342
    %v1347 = vsel %vm1322, %v1343, 0.0
    %1348 = vadd.xlane.f32.xlu0 %v1347
    %v1349 = vpop.xlane.xlu0 %1348
    %v1350 = vsel %vm1322, %v1344, 0.0
    %1351 = vadd.xlane.f32.xlu0 %v1350
    %v1352 = vpop.xlane.xlu0 %1351
    %v1353 = vsel %vm1322, %v1345, 0.0
    %1354 = vadd.xlane.f32.xlu0 %v1353
    %v1355 = vpop.xlane.xlu0 %1354
    %v1356 = vsel %vm1322, %v1346, 0.0
    %1357 = vadd.xlane.f32.xlu0 %v1356
    %v1358 = vpop.xlane.xlu0 %1357
    %v1359 = vmul.f32 %v1349, %v621
    %v1360 = vmul.f32 %v1352, %v621
    %v1361 = vmul.f32 %v1355, %v621
    %v1362 = vmul.f32 %v1358, %v621
    %v1363 = vadd.f32 %v1359, 1e-05
    %v1364 = vadd.f32 %v1360, 1e-05
    %v1365 = vadd.f32 %v1361, 1e-05
    %v1366 = vadd.f32 %v1362, 1e-05
    %v1367 = vrsqrt.pop %v1363
    %v1368 = vmul.f32 %v1367, %v1363
    %v1369 = vmul.f32 %v1368, %v1367
    %v1370 = vmul.f32 0.5, %v1369
    %v1371 = vsub.f32 1.5, %v1370
    %v1372 = vmul.f32 %v1367, %v1371
    %vm1373 = vweird.f32 %v1363
    %vm1374 = vweird.f32 %v1367
    %vm1375 = vmor %vm1373, %vm1374
    %v1376 = vsel %vm1375, %v1367, %v1372
    %v1377 = vrsqrt.pop %v1364
    %v1378 = vmul.f32 %v1377, %v1364
    %v1379 = vmul.f32 %v1378, %v1377
    %v1380 = vmul.f32 0.5, %v1379
    %v1381 = vsub.f32 1.5, %v1380
    %v1382 = vmul.f32 %v1377, %v1381
    %vm1383 = vweird.f32 %v1364
    %vm1384 = vweird.f32 %v1377
    %vm1385 = vmor %vm1383, %vm1384
    %v1386 = vsel %vm1385, %v1377, %v1382
    %v1387 = vrsqrt.pop %v1365
    %v1388 = vmul.f32 %v1387, %v1365
    %v1389 = vmul.f32 %v1388, %v1387
    %v1390 = vmul.f32 0.5, %v1389
    %v1391 = vsub.f32 1.5, %v1390
    %v1392 = vmul.f32 %v1387, %v1391
    %vm1393 = vweird.f32 %v1365
    %vm1394 = vweird.f32 %v1387
    %vm1395 = vmor %vm1393, %vm1394
    %v1396 = vsel %vm1395, %v1387, %v1392
    %v1397 = vrsqrt.pop %v1366
    %v1398 = vmul.f32 %v1397, %v1366
    %v1399 = vmul.f32 %v1398, %v1397
    %v1400 = vmul.f32 0.5, %v1399
    %v1401 = vsub.f32 1.5, %v1400
    %v1402 = vmul.f32 %v1397, %v1401
    %vm1403 = vweird.f32 %v1366
    %vm1404 = vweird.f32 %v1397
    %vm1405 = vmor %vm1403, %vm1404
    %v1406 = vsel %vm1405, %v1397, %v1402
    %v1407 = vmul.f32 %v1339, %v1376
    %v1408 = vmul.f32 %v1340, %v1386
    %v1409 = vmul.f32 %v1341, %v1396
    %v1410 = vmul.f32 %v1342, %v1406
    %v1411 = vmul.f32 %v1407, %v175
    %v1412 = vmul.f32 %v1408, %v175
    %v1413 = vmul.f32 %v1409, %v175
    %v1414 = vmul.f32 %v1410, %v175
    %v1415 = vadd.f32 %v1411, %v176
    %v1416 = vadd.f32 %v1412, %v176
    %v1417 = vadd.f32 %v1413, %v176
    %v1418 = vadd.f32 %v1414, %v176
    %1423 = vrot.lane.b32.xlu0 %v1311, 96
    %v1424 = vpop.permute.xlu0 %1423
    %1425 = vrot.lane.b32.xlu0 %v1314, 96
    %v1426 = vpop.permute.xlu0 %1425
    %1427 = vrot.lane.b32.xlu0 %v1317, 96
    %v1428 = vpop.permute.xlu0 %1427
    %1429 = vrot.lane.b32.xlu0 %v1320, 96
    %v1430 = vpop.permute.xlu0 %1429
    %v1435 = vsel %vm1322, %v1424, 0.0
    %1436 = vadd.xlane.f32.xlu0 %v1435
    %v1437 = vpop.xlane.xlu0 %1436
    %v1438 = vsel %vm1322, %v1426, 0.0
    %1439 = vadd.xlane.f32.xlu0 %v1438
    %v1440 = vpop.xlane.xlu0 %1439
    %v1441 = vsel %vm1322, %v1428, 0.0
    %1442 = vadd.xlane.f32.xlu0 %v1441
    %v1443 = vpop.xlane.xlu0 %1442
    %v1444 = vsel %vm1322, %v1430, 0.0
    %1445 = vadd.xlane.f32.xlu0 %v1444
    %v1446 = vpop.xlane.xlu0 %1445
    %v1447 = vmul.f32 %v1437, %v621
    %v1448 = vmul.f32 %v1440, %v621
    %v1449 = vmul.f32 %v1443, %v621
    %v1450 = vmul.f32 %v1446, %v621
    %v1451 = vsub.f32 %v1311, %v1447
    %v1452 = vsub.f32 %v1314, %v1448
    %v1453 = vsub.f32 %v1317, %v1449
    %v1454 = vsub.f32 %v1320, %v1450
    %v1455 = vmul.f32 %v1451, %v1451
    %v1456 = vmul.f32 %v1452, %v1452
    %v1457 = vmul.f32 %v1453, %v1453
    %v1458 = vmul.f32 %v1454, %v1454
    %1463 = vrot.lane.b32.xlu0 %v1455, 96
    %v1464 = vpop.permute.xlu0 %1463
    %1465 = vrot.lane.b32.xlu0 %v1456, 96
    %v1466 = vpop.permute.xlu0 %1465
    %1467 = vrot.lane.b32.xlu0 %v1457, 96
    %v1468 = vpop.permute.xlu0 %1467
    %1469 = vrot.lane.b32.xlu0 %v1458, 96
    %v1470 = vpop.permute.xlu0 %1469
    %v1475 = vsel %vm1322, %v1464, 0.0
    %1476 = vadd.xlane.f32.xlu0 %v1475
    %v1477 = vpop.xlane.xlu0 %1476
    %v1478 = vsel %vm1322, %v1466, 0.0
    %1479 = vadd.xlane.f32.xlu0 %v1478
    %v1480 = vpop.xlane.xlu0 %1479
    %v1481 = vsel %vm1322, %v1468, 0.0
    %1482 = vadd.xlane.f32.xlu0 %v1481
    %v1483 = vpop.xlane.xlu0 %1482
    %v1484 = vsel %vm1322, %v1470, 0.0
    %1485 = vadd.xlane.f32.xlu0 %v1484
    %v1486 = vpop.xlane.xlu0 %1485
    %v1487 = vmul.f32 %v1477, %v621
    %v1488 = vmul.f32 %v1480, %v621
    %v1489 = vmul.f32 %v1483, %v621
    %v1490 = vmul.f32 %v1486, %v621
    %v1491 = vadd.f32 %v1487, 1e-05
    %v1492 = vadd.f32 %v1488, 1e-05
    %v1493 = vadd.f32 %v1489, 1e-05
    %v1494 = vadd.f32 %v1490, 1e-05
    %v1495 = vrsqrt.pop %v1491
    %v1496 = vmul.f32 %v1495, %v1491
    %v1497 = vmul.f32 %v1496, %v1495
    %v1498 = vmul.f32 0.5, %v1497
    %v1499 = vsub.f32 1.5, %v1498
    %v1500 = vmul.f32 %v1495, %v1499
    %vm1501 = vweird.f32 %v1491
    %vm1502 = vweird.f32 %v1495
    %vm1503 = vmor %vm1501, %vm1502
    %v1504 = vsel %vm1503, %v1495, %v1500
    %v1505 = vrsqrt.pop %v1492
    %v1506 = vmul.f32 %v1505, %v1492
    %v1507 = vmul.f32 %v1506, %v1505
    %v1508 = vmul.f32 0.5, %v1507
    %v1509 = vsub.f32 1.5, %v1508
    %v1510 = vmul.f32 %v1505, %v1509
    %vm1511 = vweird.f32 %v1492
    %vm1512 = vweird.f32 %v1505
    %vm1513 = vmor %vm1511, %vm1512
    %v1514 = vsel %vm1513, %v1505, %v1510
    %v1515 = vrsqrt.pop %v1493
    %v1516 = vmul.f32 %v1515, %v1493
    %v1517 = vmul.f32 %v1516, %v1515
    %v1518 = vmul.f32 0.5, %v1517
    %v1519 = vsub.f32 1.5, %v1518
    %v1520 = vmul.f32 %v1515, %v1519
    %vm1521 = vweird.f32 %v1493
    %vm1522 = vweird.f32 %v1515
    %vm1523 = vmor %vm1521, %vm1522
    %v1524 = vsel %vm1523, %v1515, %v1520
    %v1525 = vrsqrt.pop %v1494
    %v1526 = vmul.f32 %v1525, %v1494
    %v1527 = vmul.f32 %v1526, %v1525
    %v1528 = vmul.f32 0.5, %v1527
    %v1529 = vsub.f32 1.5, %v1528
    %v1530 = vmul.f32 %v1525, %v1529
    %vm1531 = vweird.f32 %v1494
    %vm1532 = vweird.f32 %v1525
    %vm1533 = vmor %vm1531, %vm1532
    %v1534 = vsel %vm1533, %v1525, %v1530
    %v1535 = vmul.f32 %v1451, %v1504
    %v1536 = vmul.f32 %v1452, %v1514
    %v1537 = vmul.f32 %v1453, %v1524
    %v1538 = vmul.f32 %v1454, %v1534
    %1540 = vrot.lane.b32.xlu0 %v177, 32
    %v1541 = vpop.permute.xlu0 %1540
    %v1543 = vmul.f32 %v1535, %v1541
    %v1544 = vmul.f32 %v1536, %v1541
    %v1545 = vmul.f32 %v1537, %v1541
    %v1546 = vmul.f32 %v1538, %v1541
    %1548 = vrot.lane.b32.xlu0 %v178, 32
    %v1549 = vpop.permute.xlu0 %1548
    %v1551 = vadd.f32 %v1543, %v1549
    %v1552 = vadd.f32 %v1544, %v1549
    %v1553 = vadd.f32 %v1545, %v1549
    %v1554 = vadd.f32 %v1546, %v1549
    %1559 = vrot.lane.b32.xlu0 %v1551, 96
    %v1560 = vpop.permute.xlu0 %1559
    %1561 = vrot.lane.b32.xlu0 %v1552, 96
    %v1562 = vpop.permute.xlu0 %1561
    %1563 = vrot.lane.b32.xlu0 %v1553, 96
    %v1564 = vpop.permute.xlu0 %1563
    %1565 = vrot.lane.b32.xlu0 %v1554, 96
    %v1566 = vpop.permute.xlu0 %1565
    %v1568 = vsel %vm1322, %v1415, 0
    %v1571 = vsel %vm1322, %v1416, 0
    %v1574 = vsel %vm1322, %v1417, 0
    %v1577 = vsel %vm1322, %v1418, 0
    %v1579 = vsel %vm1322, %v1560, 0
    %v1581 = vsel %vm1322, %v1562, 0
    %v1583 = vsel %vm1322, %v1564, 0
    %v1585 = vsel %vm1322, %v1566, 0
    %1587 = vmatpush.xpose.msra.mxu0 0.0
    %1588 = vmatpush.xpose.msra.mxu0 0.0
    %1589 = vmatpush.xpose.msra.mxu0 0.0
    %1590 = vmatpush.xpose.msra.mxu0 0.0
    %1591 = vmatpush.xpose.msra.mxu0 0.0
    %1592 = vmatpush.xpose.msra.mxu0 0.0
    %1593 = vmatpush.xpose.msra.mxu0 0.0
    %1594 = vmatpush.xpose.msra.mxu0 0.0
    %1595 = vmatpush.xpose.msra.mxu0 0.0
    %1596 = vmatpush.xpose.msra.mxu0 0.0
    %1597 = vmatpush.xpose.msra.mxu0 0.0
    %1598 = vmatpush.xpose.msra.mxu0 0.0
    %1599 = vmatpush.xpose.msra.mxu0 %v1585
    %1600 = vmatpush.xpose.msra.mxu0 %v1583
    %1601 = vmatpush.xpose.msra.mxu0 %v1581
    %1602 = vmatpush.xpose.msra.mxu0 %v1579
    %1603 = vmatmul.f32.gmra.mxu0 %v1568
    %v1604 = vpop.f32.mrf.mxu0
    %v1605 = vadd.f32 0.0, %v1604
    %1606 = vmatmul.f32.gmra.mxu0 %v1571
    %v1607 = vpop.f32.mrf.mxu0
    %v1608 = vadd.f32 0.0, %v1607
    %1609 = vmatmul.f32.gmra.mxu0 %v1574
    %v1610 = vpop.f32.mrf.mxu0
    %v1611 = vadd.f32 0.0, %v1610
    %1612 = vmatmul.f32.gmra.mxu0 %v1577
    %v1613 = vpop.f32.mrf.mxu0
    %v1614 = vadd.f32 0.0, %v1613
    %1615 = vdwg.mxu0
    %v1616 = vmul.f32 %v1605, 0.35355338
    %v1617 = vmul.f32 %v1608, 0.35355338
    %v1618 = vmul.f32 %v1611, 0.35355338
    %v1619 = vmul.f32 %v1614, 0.35355338
    %v1620 = vadd.f32 %v1616, %v908
    %v1621 = vadd.f32 %v1617, %v909
    %v1622 = vadd.f32 %v1618, %v910
    %v1623 = vadd.f32 %v1619, %v911
    %v1624 = vadd.f32 %v1620, %v136
    %v1625 = vadd.f32 %v1621, %v137
    %v1626 = vadd.f32 %v1622, %v138
    %v1627 = vadd.f32 %v1623, %v139
    %v1628 = vsel %vm332, %v1624, -inf
    %1629 = vmax.xlane.f32.xlu0 %v1628
    %v1630 = vpop.xlane.xlu0 %1629
    %v1631 = vsel %vm332, %v1625, -inf
    %1632 = vmax.xlane.f32.xlu0 %v1631
    %v1633 = vpop.xlane.xlu0 %1632
    %v1634 = vsel %vm332, %v1626, -inf
    %1635 = vmax.xlane.f32.xlu0 %v1634
    %v1636 = vpop.xlane.xlu0 %1635
    %v1637 = vsel %vm332, %v1627, -inf
    %1638 = vmax.xlane.f32.xlu0 %v1637
    %v1639 = vpop.xlane.xlu0 %1638
    %v1640 = vsub.f32 %v1624, %v1630
    %v1641 = vsub.f32 %v1625, %v1633
    %v1642 = vsub.f32 %v1626, %v1636
    %v1643 = vsub.f32 %v1627, %v1639
    %v1644 = vmul.f32 %v1640, 1.442695
    %v1645 = vpow.pop %v1644
    %v1646 = vmul.f32 %v1641, 1.442695
    %v1647 = vpow.pop %v1646
    %v1648 = vmul.f32 %v1642, 1.442695
    %v1649 = vpow.pop %v1648
    %v1650 = vmul.f32 %v1643, 1.442695
    %v1651 = vpow.pop %v1650
    %v1652 = vsel %vm332, %v1645, 0.0
    %1653 = vadd.xlane.f32.xlu0 %v1652
    %v1654 = vpop.xlane.xlu0 %1653
    %v1655 = vsel %vm332, %v1647, 0.0
    %1656 = vadd.xlane.f32.xlu0 %v1655
    %v1657 = vpop.xlane.xlu0 %1656
    %v1658 = vsel %vm332, %v1649, 0.0
    %1659 = vadd.xlane.f32.xlu0 %v1658
    %v1660 = vpop.xlane.xlu0 %1659
    %v1661 = vsel %vm332, %v1651, 0.0
    %1662 = vadd.xlane.f32.xlu0 %v1661
    %v1663 = vpop.xlane.xlu0 %1662
    %v1664 = vrcp.pop %v1654
    %v1665 = vrcp.pop %v1657
    %v1666 = vrcp.pop %v1660
    %v1667 = vrcp.pop %v1663
    %v1668 = vmul.f32 %v1645, %v1664
    %v1669 = vmul.f32 %v1647, %v1665
    %v1670 = vmul.f32 %v1649, %v1666
    %v1671 = vmul.f32 %v1651, %v1667
    %1672 = vrot.lane.b32.xlu0 %v1311, 64
    %v1673 = vpop.permute.xlu0 %1672
    %1674 = vrot.lane.b32.xlu0 %v1314, 64
    %v1675 = vpop.permute.xlu0 %1674
    %1676 = vrot.lane.b32.xlu0 %v1317, 64
    %v1677 = vpop.permute.xlu0 %1676
    %1678 = vrot.lane.b32.xlu0 %v1320, 64
    %v1679 = vpop.permute.xlu0 %1678
    %v1685 = vsel %vm332, %v1668, 0
    %v1688 = vsel %vm332, %v1669, 0
    %v1691 = vsel %vm332, %v1670, 0
    %v1694 = vsel %vm332, %v1671, 0
    %1696 = vmatpush.msra.mxu0 0.0
    %1697 = vmatpush.msra.mxu0 0.0
    %1698 = vmatpush.msra.mxu0 0.0
    %1699 = vmatpush.msra.mxu0 0.0
    %1700 = vmatpush.msra.mxu0 0.0
    %1701 = vmatpush.msra.mxu0 0.0
    %1702 = vmatpush.msra.mxu0 0.0
    %1703 = vmatpush.msra.mxu0 0.0
    %1704 = vmatpush.msra.mxu0 0.0
    %1705 = vmatpush.msra.mxu0 0.0
    %1706 = vmatpush.msra.mxu0 0.0
    %1707 = vmatpush.msra.mxu0 0.0
    %1708 = vmatpush.msra.mxu0 %v1679
    %1709 = vmatpush.msra.mxu0 %v1677
    %1710 = vmatpush.msra.mxu0 %v1675
    %1711 = vmatpush.msra.mxu0 %v1673
    %1712 = vmatmul.f32.gmra.mxu0 %v1685
    %v1713 = vpop.f32.mrf.mxu0
    %v1714 = vadd.f32 0.0, %v1713
    %1715 = vmatmul.f32.gmra.mxu0 %v1688
    %v1716 = vpop.f32.mrf.mxu0
    %v1717 = vadd.f32 0.0, %v1716
    %1718 = vmatmul.f32.gmra.mxu0 %v1691
    %v1719 = vpop.f32.mrf.mxu0
    %v1720 = vadd.f32 0.0, %v1719
    %1721 = vmatmul.f32.gmra.mxu0 %v1694
    %v1722 = vpop.f32.mrf.mxu0
    %v1723 = vadd.f32 0.0, %v1722
    %1724 = vdwg.mxu0
    %v1725 = vld [vmem:[%s6 + $0x8] sm:$0xff]
    %1726 = vrot.lane.b32.xlu0 %v1311, 120
    %v1727 = vpop.permute.xlu0 %1726
    %1728 = vrot.lane.b32.xlu0 %v1314, 120
    %v1729 = vpop.permute.xlu0 %1728
    %1730 = vrot.lane.b32.xlu0 %v1317, 120
    %v1731 = vpop.permute.xlu0 %1730
    %1732 = vrot.lane.b32.xlu0 %v1320, 120
    %v1733 = vpop.permute.xlu0 %1732
    %v1738 = vsel %vm1322, %v1727, 0.0
    %1739 = vadd.xlane.f32.xlu0 %v1738
    %v1740 = vpop.xlane.xlu0 %1739
    %v1741 = vsel %vm1322, %v1729, 0.0
    %1742 = vadd.xlane.f32.xlu0 %v1741
    %v1743 = vpop.xlane.xlu0 %1742
    %v1744 = vsel %vm1322, %v1731, 0.0
    %1745 = vadd.xlane.f32.xlu0 %v1744
    %v1746 = vpop.xlane.xlu0 %1745
    %v1747 = vsel %vm1322, %v1733, 0.0
    %1748 = vadd.xlane.f32.xlu0 %v1747
    %v1749 = vpop.xlane.xlu0 %1748
    %v1750 = vmul.f32 %v1740, %v621
    %v1751 = vmul.f32 %v1743, %v621
    %v1752 = vmul.f32 %v1746, %v621
    %v1753 = vmul.f32 %v1749, %v621
    %v1754 = vsub.f32 %v1311, %v1750
    %v1755 = vsub.f32 %v1314, %v1751
    %v1756 = vsub.f32 %v1317, %v1752
    %v1757 = vsub.f32 %v1320, %v1753
    %v1758 = vmul.f32 %v1754, %v1754
    %v1759 = vmul.f32 %v1755, %v1755
    %v1760 = vmul.f32 %v1756, %v1756
    %v1761 = vmul.f32 %v1757, %v1757
    %1766 = vrot.lane.b32.xlu0 %v1758, 120
    %v1767 = vpop.permute.xlu0 %1766
    %1768 = vrot.lane.b32.xlu0 %v1759, 120
    %v1769 = vpop.permute.xlu0 %1768
    %1770 = vrot.lane.b32.xlu0 %v1760, 120
    %v1771 = vpop.permute.xlu0 %1770
    %1772 = vrot.lane.b32.xlu0 %v1761, 120
    %v1773 = vpop.permute.xlu0 %1772
    %v1778 = vsel %vm1322, %v1767, 0.0
    %1779 = vadd.xlane.f32.xlu0 %v1778
    %v1780 = vpop.xlane.xlu0 %1779
    %v1781 = vsel %vm1322, %v1769, 0.0
    %1782 = vadd.xlane.f32.xlu0 %v1781
    %v1783 = vpop.xlane.xlu0 %1782
    %v1784 = vsel %vm1322, %v1771, 0.0
    %1785 = vadd.xlane.f32.xlu0 %v1784
    %v1786 = vpop.xlane.xlu0 %1785
    %v1787 = vsel %vm1322, %v1773, 0.0
    %1788 = vadd.xlane.f32.xlu0 %v1787
    %v1789 = vpop.xlane.xlu0 %1788
    %v1790 = vmul.f32 %v1780, %v621
    %v1791 = vmul.f32 %v1783, %v621
    %v1792 = vmul.f32 %v1786, %v621
    %v1793 = vmul.f32 %v1789, %v621
    %v1794 = vadd.f32 %v1790, 1e-05
    %v1795 = vadd.f32 %v1791, 1e-05
    %v1796 = vadd.f32 %v1792, 1e-05
    %v1797 = vadd.f32 %v1793, 1e-05
    %v1798 = vrsqrt.pop %v1794
    %v1799 = vmul.f32 %v1798, %v1794
    %v1800 = vmul.f32 %v1799, %v1798
    %v1801 = vmul.f32 0.5, %v1800
    %v1802 = vsub.f32 1.5, %v1801
    %v1803 = vmul.f32 %v1798, %v1802
    %vm1804 = vweird.f32 %v1794
    %vm1805 = vweird.f32 %v1798
    %vm1806 = vmor %vm1804, %vm1805
    %v1807 = vsel %vm1806, %v1798, %v1803
    %v1808 = vrsqrt.pop %v1795
    %v1809 = vmul.f32 %v1808, %v1795
    %v1810 = vmul.f32 %v1809, %v1808
    %v1811 = vmul.f32 0.5, %v1810
    %v1812 = vsub.f32 1.5, %v1811
    %v1813 = vmul.f32 %v1808, %v1812
    %vm1814 = vweird.f32 %v1795
    %vm1815 = vweird.f32 %v1808
    %vm1816 = vmor %vm1814, %vm1815
    %v1817 = vsel %vm1816, %v1808, %v1813
    %v1818 = vrsqrt.pop %v1796
    %v1819 = vmul.f32 %v1818, %v1796
    %v1820 = vmul.f32 %v1819, %v1818
    %v1821 = vmul.f32 0.5, %v1820
    %v1822 = vsub.f32 1.5, %v1821
    %v1823 = vmul.f32 %v1818, %v1822
    %vm1824 = vweird.f32 %v1796
    %vm1825 = vweird.f32 %v1818
    %vm1826 = vmor %vm1824, %vm1825
    %v1827 = vsel %vm1826, %v1818, %v1823
    %v1828 = vrsqrt.pop %v1797
    %v1829 = vmul.f32 %v1828, %v1797
    %v1830 = vmul.f32 %v1829, %v1828
    %v1831 = vmul.f32 0.5, %v1830
    %v1832 = vsub.f32 1.5, %v1831
    %v1833 = vmul.f32 %v1828, %v1832
    %vm1834 = vweird.f32 %v1797
    %vm1835 = vweird.f32 %v1828
    %vm1836 = vmor %vm1834, %vm1835
    %v1837 = vsel %vm1836, %v1828, %v1833
    %v1838 = vmul.f32 %v1754, %v1807
    %v1839 = vmul.f32 %v1755, %v1817
    %v1840 = vmul.f32 %v1756, %v1827
    %v1841 = vmul.f32 %v1757, %v1837
    %1843 = vrot.lane.b32.xlu0 %v175, 8
    %v1844 = vpop.permute.xlu0 %1843
    %v1846 = vmul.f32 %v1838, %v1844
    %v1847 = vmul.f32 %v1839, %v1844
    %v1848 = vmul.f32 %v1840, %v1844
    %v1849 = vmul.f32 %v1841, %v1844
    %1851 = vrot.lane.b32.xlu0 %v176, 8
    %v1852 = vpop.permute.xlu0 %1851
    %v1854 = vadd.f32 %v1846, %v1852
    %v1855 = vadd.f32 %v1847, %v1852
    %v1856 = vadd.f32 %v1848, %v1852
    %v1857 = vadd.f32 %v1849, %v1852
    %1858 = vrot.lane.b32.xlu0 %v1311, 88
    %v1859 = vpop.permute.xlu0 %1858
    %1860 = vrot.lane.b32.xlu0 %v1314, 88
    %v1861 = vpop.permute.xlu0 %1860
    %1862 = vrot.lane.b32.xlu0 %v1317, 88
    %v1863 = vpop.permute.xlu0 %1862
    %1864 = vrot.lane.b32.xlu0 %v1320, 88
    %v1865 = vpop.permute.xlu0 %1864
    %v1870 = vsel %vm1322, %v1859, 0.0
    %1871 = vadd.xlane.f32.xlu0 %v1870
    %v1872 = vpop.xlane.xlu0 %1871
    %v1873 = vsel %vm1322, %v1861, 0.0
    %1874 = vadd.xlane.f32.xlu0 %v1873
    %v1875 = vpop.xlane.xlu0 %1874
    %v1876 = vsel %vm1322, %v1863, 0.0
    %1877 = vadd.xlane.f32.xlu0 %v1876
    %v1878 = vpop.xlane.xlu0 %1877
    %v1879 = vsel %vm1322, %v1865, 0.0
    %1880 = vadd.xlane.f32.xlu0 %v1879
    %v1881 = vpop.xlane.xlu0 %1880
    %v1882 = vmul.f32 %v1872, %v621
    %v1883 = vmul.f32 %v1875, %v621
    %v1884 = vmul.f32 %v1878, %v621
    %v1885 = vmul.f32 %v1881, %v621
    %v1886 = vsub.f32 %v1311, %v1882
    %v1887 = vsub.f32 %v1314, %v1883
    %v1888 = vsub.f32 %v1317, %v1884
    %v1889 = vsub.f32 %v1320, %v1885
    %v1890 = vmul.f32 %v1886, %v1886
    %v1891 = vmul.f32 %v1887, %v1887
    %v1892 = vmul.f32 %v1888, %v1888
    %v1893 = vmul.f32 %v1889, %v1889
    %1898 = vrot.lane.b32.xlu0 %v1890, 88
    %v1899 = vpop.permute.xlu0 %1898
    %1900 = vrot.lane.b32.xlu0 %v1891, 88
    %v1901 = vpop.permute.xlu0 %1900
    %1902 = vrot.lane.b32.xlu0 %v1892, 88
    %v1903 = vpop.permute.xlu0 %1902
    %1904 = vrot.lane.b32.xlu0 %v1893, 88
    %v1905 = vpop.permute.xlu0 %1904
    %v1910 = vsel %vm1322, %v1899, 0.0
    %1911 = vadd.xlane.f32.xlu0 %v1910
    %v1912 = vpop.xlane.xlu0 %1911
    %v1913 = vsel %vm1322, %v1901, 0.0
    %1914 = vadd.xlane.f32.xlu0 %v1913
    %v1915 = vpop.xlane.xlu0 %1914
    %v1916 = vsel %vm1322, %v1903, 0.0
    %1917 = vadd.xlane.f32.xlu0 %v1916
    %v1918 = vpop.xlane.xlu0 %1917
    %v1919 = vsel %vm1322, %v1905, 0.0
    %1920 = vadd.xlane.f32.xlu0 %v1919
    %v1921 = vpop.xlane.xlu0 %1920
    %v1922 = vmul.f32 %v1912, %v621
    %v1923 = vmul.f32 %v1915, %v621
    %v1924 = vmul.f32 %v1918, %v621
    %v1925 = vmul.f32 %v1921, %v621
    %v1926 = vadd.f32 %v1922, 1e-05
    %v1927 = vadd.f32 %v1923, 1e-05
    %v1928 = vadd.f32 %v1924, 1e-05
    %v1929 = vadd.f32 %v1925, 1e-05
    %v1930 = vrsqrt.pop %v1926
    %v1931 = vmul.f32 %v1930, %v1926
    %v1932 = vmul.f32 %v1931, %v1930
    %v1933 = vmul.f32 0.5, %v1932
    %v1934 = vsub.f32 1.5, %v1933
    %v1935 = vmul.f32 %v1930, %v1934
    %vm1936 = vweird.f32 %v1926
    %vm1937 = vweird.f32 %v1930
    %vm1938 = vmor %vm1936, %vm1937
    %v1939 = vsel %vm1938, %v1930, %v1935
    %v1940 = vrsqrt.pop %v1927
    %v1941 = vmul.f32 %v1940, %v1927
    %v1942 = vmul.f32 %v1941, %v1940
    %v1943 = vmul.f32 0.5, %v1942
    %v1944 = vsub.f32 1.5, %v1943
    %v1945 = vmul.f32 %v1940, %v1944
    %vm1946 = vweird.f32 %v1927
    %vm1947 = vweird.f32 %v1940
    %vm1948 = vmor %vm1946, %vm1947
    %v1949 = vsel %vm1948, %v1940, %v1945
    %v1950 = vrsqrt.pop %v1928
    %v1951 = vmul.f32 %v1950, %v1928
    %v1952 = vmul.f32 %v1951, %v1950
    %v1953 = vmul.f32 0.5, %v1952
    %v1954 = vsub.f32 1.5, %v1953
    %v1955 = vmul.f32 %v1950, %v1954
    %vm1956 = vweird.f32 %v1928
    %vm1957 = vweird.f32 %v1950
    %vm1958 = vmor %vm1956, %vm1957
    %v1959 = vsel %vm1958, %v1950, %v1955
    %v1960 = vrsqrt.pop %v1929
    %v1961 = vmul.f32 %v1960, %v1929
    %v1962 = vmul.f32 %v1961, %v1960
    %v1963 = vmul.f32 0.5, %v1962
    %v1964 = vsub.f32 1.5, %v1963
    %v1965 = vmul.f32 %v1960, %v1964
    %vm1966 = vweird.f32 %v1929
    %vm1967 = vweird.f32 %v1960
    %vm1968 = vmor %vm1966, %vm1967
    %v1969 = vsel %vm1968, %v1960, %v1965
    %v1970 = vmul.f32 %v1886, %v1939
    %v1971 = vmul.f32 %v1887, %v1949
    %v1972 = vmul.f32 %v1888, %v1959
    %v1973 = vmul.f32 %v1889, %v1969
    %1974 = vrot.lane.b32.xlu0 %v177, 40
    %v1975 = vpop.permute.xlu0 %1974
    %v1977 = vmul.f32 %v1970, %v1975
    %v1978 = vmul.f32 %v1971, %v1975
    %v1979 = vmul.f32 %v1972, %v1975
    %v1980 = vmul.f32 %v1973, %v1975
    %1981 = vrot.lane.b32.xlu0 %v178, 40
    %v1982 = vpop.permute.xlu0 %1981
    %v1984 = vadd.f32 %v1977, %v1982
    %v1985 = vadd.f32 %v1978, %v1982
    %v1986 = vadd.f32 %v1979, %v1982
    %v1987 = vadd.f32 %v1980, %v1982
    %1992 = vrot.lane.b32.xlu0 %v1854, 120
    %v1993 = vpop.permute.xlu0 %1992
    %1994 = vrot.lane.b32.xlu0 %v1855, 120
    %v1995 = vpop.permute.xlu0 %1994
    %1996 = vrot.lane.b32.xlu0 %v1856, 120
    %v1997 = vpop.permute.xlu0 %1996
    %1998 = vrot.lane.b32.xlu0 %v1857, 120
    %v1999 = vpop.permute.xlu0 %1998
    %2004 = vrot.lane.b32.xlu0 %v1984, 88
    %v2005 = vpop.permute.xlu0 %2004
    %2006 = vrot.lane.b32.xlu0 %v1985, 88
    %v2007 = vpop.permute.xlu0 %2006
    %2008 = vrot.lane.b32.xlu0 %v1986, 88
    %v2009 = vpop.permute.xlu0 %2008
    %2010 = vrot.lane.b32.xlu0 %v1987, 88
    %v2011 = vpop.permute.xlu0 %2010
    %v2012 = vsel %vm1322, %v1993, 0
    %v2014 = vsel %vm1322, %v1995, 0
    %v2016 = vsel %vm1322, %v1997, 0
    %v2018 = vsel %vm1322, %v1999, 0
    %v2020 = vsel %vm1322, %v2005, 0
    %v2022 = vsel %vm1322, %v2007, 0
    %v2024 = vsel %vm1322, %v2009, 0
    %v2026 = vsel %vm1322, %v2011, 0
    %2028 = vmatpush.xpose.msra.mxu0 0.0
    %2029 = vmatpush.xpose.msra.mxu0 0.0
    %2030 = vmatpush.xpose.msra.mxu0 0.0
    %2031 = vmatpush.xpose.msra.mxu0 0.0
    %2032 = vmatpush.xpose.msra.mxu0 0.0
    %2033 = vmatpush.xpose.msra.mxu0 0.0
    %2034 = vmatpush.xpose.msra.mxu0 0.0
    %2035 = vmatpush.xpose.msra.mxu0 0.0
    %2036 = vmatpush.xpose.msra.mxu0 0.0
    %2037 = vmatpush.xpose.msra.mxu0 0.0
    %2038 = vmatpush.xpose.msra.mxu0 0.0
    %2039 = vmatpush.xpose.msra.mxu0 0.0
    %2040 = vmatpush.xpose.msra.mxu0 %v2026
    %2041 = vmatpush.xpose.msra.mxu0 %v2024
    %2042 = vmatpush.xpose.msra.mxu0 %v2022
    %2043 = vmatpush.xpose.msra.mxu0 %v2020
    %2044 = vmatmul.f32.gmra.mxu0 %v2012
    %v2045 = vpop.f32.mrf.mxu0
    %v2046 = vadd.f32 0.0, %v2045
    %2047 = vmatmul.f32.gmra.mxu0 %v2014
    %v2048 = vpop.f32.mrf.mxu0
    %v2049 = vadd.f32 0.0, %v2048
    %2050 = vmatmul.f32.gmra.mxu0 %v2016
    %v2051 = vpop.f32.mrf.mxu0
    %v2052 = vadd.f32 0.0, %v2051
    %2053 = vmatmul.f32.gmra.mxu0 %v2018
    %v2054 = vpop.f32.mrf.mxu0
    %v2055 = vadd.f32 0.0, %v2054
    %2056 = vdwg.mxu0
    %v2057 = vmul.f32 %v2046, 0.35355338
    %v2058 = vmul.f32 %v2049, 0.35355338
    %v2059 = vmul.f32 %v2052, 0.35355338
    %v2060 = vmul.f32 %v2055, 0.35355338
    %v2061 = vadd.f32 %v2057, %v990
    %v2062 = vadd.f32 %v2058, %v991
    %v2063 = vadd.f32 %v2059, %v992
    %v2064 = vadd.f32 %v2060, %v993
    %v2065 = vadd.f32 %v2061, %v136
    %v2066 = vadd.f32 %v2062, %v137
    %v2067 = vadd.f32 %v2063, %v138
    %v2068 = vadd.f32 %v2064, %v139
    %v2069 = vsel %vm332, %v2065, -inf
    %2070 = vmax.xlane.f32.xlu0 %v2069
    %v2071 = vpop.xlane.xlu0 %2070
    %v2072 = vsel %vm332, %v2066, -inf
    %2073 = vmax.xlane.f32.xlu0 %v2072
    %v2074 = vpop.xlane.xlu0 %2073
    %v2075 = vsel %vm332, %v2067, -inf
    %2076 = vmax.xlane.f32.xlu0 %v2075
    %v2077 = vpop.xlane.xlu0 %2076
    %v2078 = vsel %vm332, %v2068, -inf
    %2079 = vmax.xlane.f32.xlu0 %v2078
    %v2080 = vpop.xlane.xlu0 %2079
    %v2081 = vsub.f32 %v2065, %v2071
    %v2082 = vsub.f32 %v2066, %v2074
    %v2083 = vsub.f32 %v2067, %v2077
    %v2084 = vsub.f32 %v2068, %v2080
    %v2085 = vmul.f32 %v2081, 1.442695
    %v2086 = vpow.pop %v2085
    %v2087 = vmul.f32 %v2082, 1.442695
    %v2088 = vpow.pop %v2087
    %v2089 = vmul.f32 %v2083, 1.442695
    %v2090 = vpow.pop %v2089
    %v2091 = vmul.f32 %v2084, 1.442695
    %v2092 = vpow.pop %v2091
    %v2093 = vsel %vm332, %v2086, 0.0
    %2094 = vadd.xlane.f32.xlu0 %v2093
    %v2095 = vpop.xlane.xlu0 %2094
    %v2096 = vsel %vm332, %v2088, 0.0
    %2097 = vadd.xlane.f32.xlu0 %v2096
    %v2098 = vpop.xlane.xlu0 %2097
    %v2099 = vsel %vm332, %v2090, 0.0
    %2100 = vadd.xlane.f32.xlu0 %v2099
    %v2101 = vpop.xlane.xlu0 %2100
    %v2102 = vsel %vm332, %v2092, 0.0
    %2103 = vadd.xlane.f32.xlu0 %v2102
    %v2104 = vpop.xlane.xlu0 %2103
    %v2105 = vrcp.pop %v2095
    %v2106 = vrcp.pop %v2098
    %v2107 = vrcp.pop %v2101
    %v2108 = vrcp.pop %v2104
    %v2109 = vmul.f32 %v2086, %v2105
    %v2110 = vmul.f32 %v2088, %v2106
    %v2111 = vmul.f32 %v2090, %v2107
    %v2112 = vmul.f32 %v2092, %v2108
    %2113 = vrot.lane.b32.xlu0 %v1311, 56
    %v2114 = vpop.permute.xlu0 %2113
    %2115 = vrot.lane.b32.xlu0 %v1314, 56
    %v2116 = vpop.permute.xlu0 %2115
    %2117 = vrot.lane.b32.xlu0 %v1317, 56
    %v2118 = vpop.permute.xlu0 %2117
    %2119 = vrot.lane.b32.xlu0 %v1320, 56
    %v2120 = vpop.permute.xlu0 %2119
    %v2126 = vsel %vm332, %v2109, 0
    %v2129 = vsel %vm332, %v2110, 0
    %v2132 = vsel %vm332, %v2111, 0
    %v2135 = vsel %vm332, %v2112, 0
    %2137 = vmatpush.msra.mxu0 0.0
    %2138 = vmatpush.msra.mxu0 0.0
    %2139 = vmatpush.msra.mxu0 0.0
    %2140 = vmatpush.msra.mxu0 0.0
    %2141 = vmatpush.msra.mxu0 0.0
    %2142 = vmatpush.msra.mxu0 0.0
    %2143 = vmatpush.msra.mxu0 0.0
    %2144 = vmatpush.msra.mxu0 0.0
    %2145 = vmatpush.msra.mxu0 0.0
    %2146 = vmatpush.msra.mxu0 0.0
    %2147 = vmatpush.msra.mxu0 0.0
    %2148 = vmatpush.msra.mxu0 0.0
    %2149 = vmatpush.msra.mxu0 %v2120
    %2150 = vmatpush.msra.mxu0 %v2118
    %2151 = vmatpush.msra.mxu0 %v2116
    %2152 = vmatpush.msra.mxu0 %v2114
    %2153 = vmatmul.f32.gmra.mxu0 %v2126
    %v2154 = vpop.f32.mrf.mxu0
    %v2155 = vadd.f32 0.0, %v2154
    %2156 = vmatmul.f32.gmra.mxu0 %v2129
    %v2157 = vpop.f32.mrf.mxu0
    %v2158 = vadd.f32 0.0, %v2157
    %2159 = vmatmul.f32.gmra.mxu0 %v2132
    %v2160 = vpop.f32.mrf.mxu0
    %v2161 = vadd.f32 0.0, %v2160
    %2162 = vmatmul.f32.gmra.mxu0 %v2135
    %v2163 = vpop.f32.mrf.mxu0
    %v2164 = vadd.f32 0.0, %v2163
    %2165 = vdwg.mxu0
    %v2166 = vld [vmem:[%s6 + $0x28] sm:$0xff]
    %v2168 = vsel %vm1322, %v2155, 0
    %v2171 = vsel %vm1322, %v2158, 0
    %v2174 = vsel %vm1322, %v2161, 0
    %v2177 = vsel %vm1322, %v2164, 0
    %2179 = vmatpush.msra.mxu0 0.0
    %2180 = vmatpush.msra.mxu0 0.0
    %2181 = vmatpush.msra.mxu0 0.0
    %2182 = vmatpush.msra.mxu0 0.0
    %2183 = vmatpush.msra.mxu0 0.0
    %2184 = vmatpush.msra.mxu0 0.0
    %2185 = vmatpush.msra.mxu0 0.0
    %2186 = vmatpush.msra.mxu0 0.0
    %2187 = vmatpush.msra.mxu0 0.0
    %2188 = vmatpush.msra.mxu0 0.0
    %2189 = vmatpush.msra.mxu0 0.0
    %2190 = vmatpush.msra.mxu0 0.0
    %2191 = vmatpush.msra.mxu0 0.0
    %2192 = vmatpush.msra.mxu0 0.0
    %2193 = vmatpush.msra.mxu0 0.0
    %2194 = vmatpush.msra.mxu0 %v2166
    %2195 = vmatmul.f32.gmra.mxu0 %v2168
    %v2196 = vpop.f32.mrf.mxu0
    %v2197 = vadd.f32 0.0, %v2196
    %2198 = vmatmul.f32.gmra.mxu0 %v2171
    %v2199 = vpop.f32.mrf.mxu0
    %v2200 = vadd.f32 0.0, %v2199
    %2201 = vmatmul.f32.gmra.mxu0 %v2174
    %v2202 = vpop.f32.mrf.mxu0
    %v2203 = vadd.f32 0.0, %v2202
    %2204 = vmatmul.f32.gmra.mxu0 %v2177
    %v2205 = vpop.f32.mrf.mxu0
    %v2206 = vadd.f32 0.0, %v2205
    %2207 = vdwg.mxu0
    %v2209 = vsel %vm1322, %v1714, 0
    %v2212 = vsel %vm1322, %v1717, 0
    %v2215 = vsel %vm1322, %v1720, 0
    %v2218 = vsel %vm1322, %v1723, 0
    %2220 = vmatpush.msra.mxu0 0.0
    %2221 = vmatpush.msra.mxu0 0.0
    %2222 = vmatpush.msra.mxu0 0.0
    %2223 = vmatpush.msra.mxu0 0.0
    %2224 = vmatpush.msra.mxu0 0.0
    %2225 = vmatpush.msra.mxu0 0.0
    %2226 = vmatpush.msra.mxu0 0.0
    %2227 = vmatpush.msra.mxu0 0.0
    %2228 = vmatpush.msra.mxu0 0.0
    %2229 = vmatpush.msra.mxu0 0.0
    %2230 = vmatpush.msra.mxu0 0.0
    %2231 = vmatpush.msra.mxu0 0.0
    %2232 = vmatpush.msra.mxu0 0.0
    %2233 = vmatpush.msra.mxu0 0.0
    %2234 = vmatpush.msra.mxu0 0.0
    %2235 = vmatpush.msra.mxu0 %v1725
    %2236 = vmatmul.f32.gmra.mxu0 %v2209
    %v2237 = vpop.f32.mrf.mxu0
    %v2238 = vadd.f32 %v2197, %v2237
    %2239 = vmatmul.f32.gmra.mxu0 %v2212
    %v2240 = vpop.f32.mrf.mxu0
    %v2241 = vadd.f32 %v2200, %v2240
    %2242 = vmatmul.f32.gmra.mxu0 %v2215
    %v2243 = vpop.f32.mrf.mxu0
    %v2244 = vadd.f32 %v2203, %v2243
    %2245 = vmatmul.f32.gmra.mxu0 %v2218
    %v2246 = vpop.f32.mrf.mxu0
    %v2247 = vadd.f32 %v2206, %v2246
    %2248 = vdwg.mxu0
    %2249 = vrot.lane.b32.xlu0 %v1311, 112
    %v2250 = vpop.permute.xlu0 %2249
    %2251 = vrot.lane.b32.xlu0 %v1314, 112
    %v2252 = vpop.permute.xlu0 %2251
    %2253 = vrot.lane.b32.xlu0 %v1317, 112
    %v2254 = vpop.permute.xlu0 %2253
    %2255 = vrot.lane.b32.xlu0 %v1320, 112
    %v2256 = vpop.permute.xlu0 %2255
    %v2261 = vsel %vm1322, %v2250, 0.0
    %2262 = vadd.xlane.f32.xlu0 %v2261
    %v2263 = vpop.xlane.xlu0 %2262
    %v2264 = vsel %vm1322, %v2252, 0.0
    %2265 = vadd.xlane.f32.xlu0 %v2264
    %v2266 = vpop.xlane.xlu0 %2265
    %v2267 = vsel %vm1322, %v2254, 0.0
    %2268 = vadd.xlane.f32.xlu0 %v2267
    %v2269 = vpop.xlane.xlu0 %2268
    %v2270 = vsel %vm1322, %v2256, 0.0
    %2271 = vadd.xlane.f32.xlu0 %v2270
    %v2272 = vpop.xlane.xlu0 %2271
    %v2273 = vmul.f32 %v2263, %v621
    %v2274 = vmul.f32 %v2266, %v621
    %v2275 = vmul.f32 %v2269, %v621
    %v2276 = vmul.f32 %v2272, %v621
    %v2277 = vsub.f32 %v1311, %v2273
    %v2278 = vsub.f32 %v1314, %v2274
    %v2279 = vsub.f32 %v1317, %v2275
    %v2280 = vsub.f32 %v1320, %v2276
    %v2281 = vmul.f32 %v2277, %v2277
    %v2282 = vmul.f32 %v2278, %v2278
    %v2283 = vmul.f32 %v2279, %v2279
    %v2284 = vmul.f32 %v2280, %v2280
    %2289 = vrot.lane.b32.xlu0 %v2281, 112
    %v2290 = vpop.permute.xlu0 %2289
    %2291 = vrot.lane.b32.xlu0 %v2282, 112
    %v2292 = vpop.permute.xlu0 %2291
    %2293 = vrot.lane.b32.xlu0 %v2283, 112
    %v2294 = vpop.permute.xlu0 %2293
    %2295 = vrot.lane.b32.xlu0 %v2284, 112
    %v2296 = vpop.permute.xlu0 %2295
    %v2301 = vsel %vm1322, %v2290, 0.0
    %2302 = vadd.xlane.f32.xlu0 %v2301
    %v2303 = vpop.xlane.xlu0 %2302
    %v2304 = vsel %vm1322, %v2292, 0.0
    %2305 = vadd.xlane.f32.xlu0 %v2304
    %v2306 = vpop.xlane.xlu0 %2305
    %v2307 = vsel %vm1322, %v2294, 0.0
    %2308 = vadd.xlane.f32.xlu0 %v2307
    %v2309 = vpop.xlane.xlu0 %2308
    %v2310 = vsel %vm1322, %v2296, 0.0
    %2311 = vadd.xlane.f32.xlu0 %v2310
    %v2312 = vpop.xlane.xlu0 %2311
    %v2313 = vmul.f32 %v2303, %v621
    %v2314 = vmul.f32 %v2306, %v621
    %v2315 = vmul.f32 %v2309, %v621
    %v2316 = vmul.f32 %v2312, %v621
    %v2317 = vadd.f32 %v2313, 1e-05
    %v2318 = vadd.f32 %v2314, 1e-05
    %v2319 = vadd.f32 %v2315, 1e-05
    %v2320 = vadd.f32 %v2316, 1e-05
    %v2321 = vrsqrt.pop %v2317
    %v2322 = vmul.f32 %v2321, %v2317
    %v2323 = vmul.f32 %v2322, %v2321
    %v2324 = vmul.f32 0.5, %v2323
    %v2325 = vsub.f32 1.5, %v2324
    %v2326 = vmul.f32 %v2321, %v2325
    %vm2327 = vweird.f32 %v2317
    %vm2328 = vweird.f32 %v2321
    %vm2329 = vmor %vm2327, %vm2328
    %v2330 = vsel %vm2329, %v2321, %v2326
    %v2331 = vrsqrt.pop %v2318
    %v2332 = vmul.f32 %v2331, %v2318
    %v2333 = vmul.f32 %v2332, %v2331
    %v2334 = vmul.f32 0.5, %v2333
    %v2335 = vsub.f32 1.5, %v2334
    %v2336 = vmul.f32 %v2331, %v2335
    %vm2337 = vweird.f32 %v2318
    %vm2338 = vweird.f32 %v2331
    %vm2339 = vmor %vm2337, %vm2338
    %v2340 = vsel %vm2339, %v2331, %v2336
    %v2341 = vrsqrt.pop %v2319
    %v2342 = vmul.f32 %v2341, %v2319
    %v2343 = vmul.f32 %v2342, %v2341
    %v2344 = vmul.f32 0.5, %v2343
    %v2345 = vsub.f32 1.5, %v2344
    %v2346 = vmul.f32 %v2341, %v2345
    %vm2347 = vweird.f32 %v2319
    %vm2348 = vweird.f32 %v2341
    %vm2349 = vmor %vm2347, %vm2348
    %v2350 = vsel %vm2349, %v2341, %v2346
    %v2351 = vrsqrt.pop %v2320
    %v2352 = vmul.f32 %v2351, %v2320
    %v2353 = vmul.f32 %v2352, %v2351
    %v2354 = vmul.f32 0.5, %v2353
    %v2355 = vsub.f32 1.5, %v2354
    %v2356 = vmul.f32 %v2351, %v2355
    %vm2357 = vweird.f32 %v2320
    %vm2358 = vweird.f32 %v2351
    %vm2359 = vmor %vm2357, %vm2358
    %v2360 = vsel %vm2359, %v2351, %v2356
    %v2361 = vmul.f32 %v2277, %v2330
    %v2362 = vmul.f32 %v2278, %v2340
    %v2363 = vmul.f32 %v2279, %v2350
    %v2364 = vmul.f32 %v2280, %v2360
    %2365 = vrot.lane.b32.xlu0 %v175, 16
    %v2366 = vpop.permute.xlu0 %2365
    %v2368 = vmul.f32 %v2361, %v2366
    %v2369 = vmul.f32 %v2362, %v2366
    %v2370 = vmul.f32 %v2363, %v2366
    %v2371 = vmul.f32 %v2364, %v2366
    %2372 = vrot.lane.b32.xlu0 %v176, 16
    %v2373 = vpop.permute.xlu0 %2372
    %v2375 = vadd.f32 %v2368, %v2373
    %v2376 = vadd.f32 %v2369, %v2373
    %v2377 = vadd.f32 %v2370, %v2373
    %v2378 = vadd.f32 %v2371, %v2373
    %2379 = vrot.lane.b32.xlu0 %v1311, 80
    %v2380 = vpop.permute.xlu0 %2379
    %2381 = vrot.lane.b32.xlu0 %v1314, 80
    %v2382 = vpop.permute.xlu0 %2381
    %2383 = vrot.lane.b32.xlu0 %v1317, 80
    %v2384 = vpop.permute.xlu0 %2383
    %2385 = vrot.lane.b32.xlu0 %v1320, 80
    %v2386 = vpop.permute.xlu0 %2385
    %v2391 = vsel %vm1322, %v2380, 0.0
    %2392 = vadd.xlane.f32.xlu0 %v2391
    %v2393 = vpop.xlane.xlu0 %2392
    %v2394 = vsel %vm1322, %v2382, 0.0
    %2395 = vadd.xlane.f32.xlu0 %v2394
    %v2396 = vpop.xlane.xlu0 %2395
    %v2397 = vsel %vm1322, %v2384, 0.0
    %2398 = vadd.xlane.f32.xlu0 %v2397
    %v2399 = vpop.xlane.xlu0 %2398
    %v2400 = vsel %vm1322, %v2386, 0.0
    %2401 = vadd.xlane.f32.xlu0 %v2400
    %v2402 = vpop.xlane.xlu0 %2401
    %v2403 = vmul.f32 %v2393, %v621
    %v2404 = vmul.f32 %v2396, %v621
    %v2405 = vmul.f32 %v2399, %v621
    %v2406 = vmul.f32 %v2402, %v621
    %v2407 = vsub.f32 %v1311, %v2403
    %v2408 = vsub.f32 %v1314, %v2404
    %v2409 = vsub.f32 %v1317, %v2405
    %v2410 = vsub.f32 %v1320, %v2406
    %v2411 = vmul.f32 %v2407, %v2407
    %v2412 = vmul.f32 %v2408, %v2408
    %v2413 = vmul.f32 %v2409, %v2409
    %v2414 = vmul.f32 %v2410, %v2410
    %2419 = vrot.lane.b32.xlu0 %v2411, 80
    %v2420 = vpop.permute.xlu0 %2419
    %2421 = vrot.lane.b32.xlu0 %v2412, 80
    %v2422 = vpop.permute.xlu0 %2421
    %2423 = vrot.lane.b32.xlu0 %v2413, 80
    %v2424 = vpop.permute.xlu0 %2423
    %2425 = vrot.lane.b32.xlu0 %v2414, 80
    %v2426 = vpop.permute.xlu0 %2425
    %v2431 = vsel %vm1322, %v2420, 0.0
    %2432 = vadd.xlane.f32.xlu0 %v2431
    %v2433 = vpop.xlane.xlu0 %2432
    %v2434 = vsel %vm1322, %v2422, 0.0
    %2435 = vadd.xlane.f32.xlu0 %v2434
    %v2436 = vpop.xlane.xlu0 %2435
    %v2437 = vsel %vm1322, %v2424, 0.0
    %2438 = vadd.xlane.f32.xlu0 %v2437
    %v2439 = vpop.xlane.xlu0 %2438
    %v2440 = vsel %vm1322, %v2426, 0.0
    %2441 = vadd.xlane.f32.xlu0 %v2440
    %v2442 = vpop.xlane.xlu0 %2441
    %v2443 = vmul.f32 %v2433, %v621
    %v2444 = vmul.f32 %v2436, %v621
    %v2445 = vmul.f32 %v2439, %v621
    %v2446 = vmul.f32 %v2442, %v621
    %v2447 = vadd.f32 %v2443, 1e-05
    %v2448 = vadd.f32 %v2444, 1e-05
    %v2449 = vadd.f32 %v2445, 1e-05
    %v2450 = vadd.f32 %v2446, 1e-05
    %v2451 = vrsqrt.pop %v2447
    %v2452 = vmul.f32 %v2451, %v2447
    %v2453 = vmul.f32 %v2452, %v2451
    %v2454 = vmul.f32 0.5, %v2453
    %v2455 = vsub.f32 1.5, %v2454
    %v2456 = vmul.f32 %v2451, %v2455
    %vm2457 = vweird.f32 %v2447
    %vm2458 = vweird.f32 %v2451
    %vm2459 = vmor %vm2457, %vm2458
    %v2460 = vsel %vm2459, %v2451, %v2456
    %v2461 = vrsqrt.pop %v2448
    %v2462 = vmul.f32 %v2461, %v2448
    %v2463 = vmul.f32 %v2462, %v2461
    %v2464 = vmul.f32 0.5, %v2463
    %v2465 = vsub.f32 1.5, %v2464
    %v2466 = vmul.f32 %v2461, %v2465
    %vm2467 = vweird.f32 %v2448
    %vm2468 = vweird.f32 %v2461
    %vm2469 = vmor %vm2467, %vm2468
    %v2470 = vsel %vm2469, %v2461, %v2466
    %v2471 = vrsqrt.pop %v2449
    %v2472 = vmul.f32 %v2471, %v2449
    %v2473 = vmul.f32 %v2472, %v2471
    %v2474 = vmul.f32 0.5, %v2473
    %v2475 = vsub.f32 1.5, %v2474
    %v2476 = vmul.f32 %v2471, %v2475
    %vm2477 = vweird.f32 %v2449
    %vm2478 = vweird.f32 %v2471
    %vm2479 = vmor %vm2477, %vm2478
    %v2480 = vsel %vm2479, %v2471, %v2476
    %v2481 = vrsqrt.pop %v2450
    %v2482 = vmul.f32 %v2481, %v2450
    %v2483 = vmul.f32 %v2482, %v2481
    %v2484 = vmul.f32 0.5, %v2483
    %v2485 = vsub.f32 1.5, %v2484
    %v2486 = vmul.f32 %v2481, %v2485
    %vm2487 = vweird.f32 %v2450
    %vm2488 = vweird.f32 %v2481
    %vm2489 = vmor %vm2487, %vm2488
    %v2490 = vsel %vm2489, %v2481, %v2486
    %v2491 = vmul.f32 %v2407, %v2460
    %v2492 = vmul.f32 %v2408, %v2470
    %v2493 = vmul.f32 %v2409, %v2480
    %v2494 = vmul.f32 %v2410, %v2490
    %2495 = vrot.lane.b32.xlu0 %v177, 48
    %v2496 = vpop.permute.xlu0 %2495
    %v2498 = vmul.f32 %v2491, %v2496
    %v2499 = vmul.f32 %v2492, %v2496
    %v2500 = vmul.f32 %v2493, %v2496
    %v2501 = vmul.f32 %v2494, %v2496
    %2502 = vrot.lane.b32.xlu0 %v178, 48
    %v2503 = vpop.permute.xlu0 %2502
    %v2505 = vadd.f32 %v2498, %v2503
    %v2506 = vadd.f32 %v2499, %v2503
    %v2507 = vadd.f32 %v2500, %v2503
    %v2508 = vadd.f32 %v2501, %v2503
    %2513 = vrot.lane.b32.xlu0 %v2375, 112
    %v2514 = vpop.permute.xlu0 %2513
    %2515 = vrot.lane.b32.xlu0 %v2376, 112
    %v2516 = vpop.permute.xlu0 %2515
    %2517 = vrot.lane.b32.xlu0 %v2377, 112
    %v2518 = vpop.permute.xlu0 %2517
    %2519 = vrot.lane.b32.xlu0 %v2378, 112
    %v2520 = vpop.permute.xlu0 %2519
    %2525 = vrot.lane.b32.xlu0 %v2505, 80
    %v2526 = vpop.permute.xlu0 %2525
    %2527 = vrot.lane.b32.xlu0 %v2506, 80
    %v2528 = vpop.permute.xlu0 %2527
    %2529 = vrot.lane.b32.xlu0 %v2507, 80
    %v2530 = vpop.permute.xlu0 %2529
    %2531 = vrot.lane.b32.xlu0 %v2508, 80
    %v2532 = vpop.permute.xlu0 %2531
    %v2533 = vsel %vm1322, %v2514, 0
    %v2535 = vsel %vm1322, %v2516, 0
    %v2537 = vsel %vm1322, %v2518, 0
    %v2539 = vsel %vm1322, %v2520, 0
    %v2541 = vsel %vm1322, %v2526, 0
    %v2543 = vsel %vm1322, %v2528, 0
    %v2545 = vsel %vm1322, %v2530, 0
    %v2547 = vsel %vm1322, %v2532, 0
    %2549 = vmatpush.xpose.msra.mxu0 0.0
    %2550 = vmatpush.xpose.msra.mxu0 0.0
    %2551 = vmatpush.xpose.msra.mxu0 0.0
    %2552 = vmatpush.xpose.msra.mxu0 0.0
    %2553 = vmatpush.xpose.msra.mxu0 0.0
    %2554 = vmatpush.xpose.msra.mxu0 0.0
    %2555 = vmatpush.xpose.msra.mxu0 0.0
    %2556 = vmatpush.xpose.msra.mxu0 0.0
    %2557 = vmatpush.xpose.msra.mxu0 0.0
    %2558 = vmatpush.xpose.msra.mxu0 0.0
    %2559 = vmatpush.xpose.msra.mxu0 0.0
    %2560 = vmatpush.xpose.msra.mxu0 0.0
    %2561 = vmatpush.xpose.msra.mxu0 %v2547
    %2562 = vmatpush.xpose.msra.mxu0 %v2545
    %2563 = vmatpush.xpose.msra.mxu0 %v2543
    %2564 = vmatpush.xpose.msra.mxu0 %v2541
    %2565 = vmatmul.f32.gmra.mxu0 %v2533
    %v2566 = vpop.f32.mrf.mxu0
    %v2567 = vadd.f32 0.0, %v2566
    %2568 = vmatmul.f32.gmra.mxu0 %v2535
    %v2569 = vpop.f32.mrf.mxu0
    %v2570 = vadd.f32 0.0, %v2569
    %2571 = vmatmul.f32.gmra.mxu0 %v2537
    %v2572 = vpop.f32.mrf.mxu0
    %v2573 = vadd.f32 0.0, %v2572
    %2574 = vmatmul.f32.gmra.mxu0 %v2539
    %v2575 = vpop.f32.mrf.mxu0
    %v2576 = vadd.f32 0.0, %v2575
    %2577 = vdwg.mxu0
    %v2578 = vmul.f32 %v2567, 0.35355338
    %v2579 = vmul.f32 %v2570, 0.35355338
    %v2580 = vmul.f32 %v2573, 0.35355338
    %v2581 = vmul.f32 %v2576, 0.35355338
    %v2582 = vadd.f32 %v2578, %v1072
    %v2583 = vadd.f32 %v2579, %v1073
    %v2584 = vadd.f32 %v2580, %v1074
    %v2585 = vadd.f32 %v2581, %v1075
    %v2586 = vadd.f32 %v2582, %v136
    %v2587 = vadd.f32 %v2583, %v137
    %v2588 = vadd.f32 %v2584, %v138
    %v2589 = vadd.f32 %v2585, %v139
    %v2590 = vsel %vm332, %v2586, -inf
    %2591 = vmax.xlane.f32.xlu0 %v2590
    %v2592 = vpop.xlane.xlu0 %2591
    %v2593 = vsel %vm332, %v2587, -inf
    %2594 = vmax.xlane.f32.xlu0 %v2593
    %v2595 = vpop.xlane.xlu0 %2594
    %v2596 = vsel %vm332, %v2588, -inf
    %2597 = vmax.xlane.f32.xlu0 %v2596
    %v2598 = vpop.xlane.xlu0 %2597
    %v2599 = vsel %vm332, %v2589, -inf
    %2600 = vmax.xlane.f32.xlu0 %v2599
    %v2601 = vpop.xlane.xlu0 %2600
    %v2602 = vsub.f32 %v2586, %v2592
    %v2603 = vsub.f32 %v2587, %v2595
    %v2604 = vsub.f32 %v2588, %v2598
    %v2605 = vsub.f32 %v2589, %v2601
    %v2606 = vmul.f32 %v2602, 1.442695
    %v2607 = vpow.pop %v2606
    %v2608 = vmul.f32 %v2603, 1.442695
    %v2609 = vpow.pop %v2608
    %v2610 = vmul.f32 %v2604, 1.442695
    %v2611 = vpow.pop %v2610
    %v2612 = vmul.f32 %v2605, 1.442695
    %v2613 = vpow.pop %v2612
    %v2614 = vsel %vm332, %v2607, 0.0
    %2615 = vadd.xlane.f32.xlu0 %v2614
    %v2616 = vpop.xlane.xlu0 %2615
    %v2617 = vsel %vm332, %v2609, 0.0
    %2618 = vadd.xlane.f32.xlu0 %v2617
    %v2619 = vpop.xlane.xlu0 %2618
    %v2620 = vsel %vm332, %v2611, 0.0
    %2621 = vadd.xlane.f32.xlu0 %v2620
    %v2622 = vpop.xlane.xlu0 %2621
    %v2623 = vsel %vm332, %v2613, 0.0
    %2624 = vadd.xlane.f32.xlu0 %v2623
    %v2625 = vpop.xlane.xlu0 %2624
    %v2626 = vrcp.pop %v2616
    %v2627 = vrcp.pop %v2619
    %v2628 = vrcp.pop %v2622
    %v2629 = vrcp.pop %v2625
    %v2630 = vmul.f32 %v2607, %v2626
    %v2631 = vmul.f32 %v2609, %v2627
    %v2632 = vmul.f32 %v2611, %v2628
    %v2633 = vmul.f32 %v2613, %v2629
    %2634 = vrot.lane.b32.xlu0 %v1311, 48
    %v2635 = vpop.permute.xlu0 %2634
    %2636 = vrot.lane.b32.xlu0 %v1314, 48
    %v2637 = vpop.permute.xlu0 %2636
    %2638 = vrot.lane.b32.xlu0 %v1317, 48
    %v2639 = vpop.permute.xlu0 %2638
    %2640 = vrot.lane.b32.xlu0 %v1320, 48
    %v2641 = vpop.permute.xlu0 %2640
    %v2647 = vsel %vm332, %v2630, 0
    %v2650 = vsel %vm332, %v2631, 0
    %v2653 = vsel %vm332, %v2632, 0
    %v2656 = vsel %vm332, %v2633, 0
    %2658 = vmatpush.msra.mxu0 0.0
    %2659 = vmatpush.msra.mxu0 0.0
    %2660 = vmatpush.msra.mxu0 0.0
    %2661 = vmatpush.msra.mxu0 0.0
    %2662 = vmatpush.msra.mxu0 0.0
    %2663 = vmatpush.msra.mxu0 0.0
    %2664 = vmatpush.msra.mxu0 0.0
    %2665 = vmatpush.msra.mxu0 0.0
    %2666 = vmatpush.msra.mxu0 0.0
    %2667 = vmatpush.msra.mxu0 0.0
    %2668 = vmatpush.msra.mxu0 0.0
    %2669 = vmatpush.msra.mxu0 0.0
    %2670 = vmatpush.msra.mxu0 %v2641
    %2671 = vmatpush.msra.mxu0 %v2639
    %2672 = vmatpush.msra.mxu0 %v2637
    %2673 = vmatpush.msra.mxu0 %v2635
    %2674 = vmatmul.f32.gmra.mxu0 %v2647
    %v2675 = vpop.f32.mrf.mxu0
    %v2676 = vadd.f32 0.0, %v2675
    %2677 = vmatmul.f32.gmra.mxu0 %v2650
    %v2678 = vpop.f32.mrf.mxu0
    %v2679 = vadd.f32 0.0, %v2678
    %2680 = vmatmul.f32.gmra.mxu0 %v2653
    %v2681 = vpop.f32.mrf.mxu0
    %v2682 = vadd.f32 0.0, %v2681
    %2683 = vmatmul.f32.gmra.mxu0 %v2656
    %v2684 = vpop.f32.mrf.mxu0
    %v2685 = vadd.f32 0.0, %v2684
    %2686 = vdwg.mxu0
    %v2687 = vld [vmem:[%s6 + $0x48] sm:$0xff]
    %v2689 = vsel %vm1322, %v2676, 0
    %v2692 = vsel %vm1322, %v2679, 0
    %v2695 = vsel %vm1322, %v2682, 0
    %v2698 = vsel %vm1322, %v2685, 0
    %2700 = vmatpush.msra.mxu0 0.0
    %2701 = vmatpush.msra.mxu0 0.0
    %2702 = vmatpush.msra.mxu0 0.0
    %2703 = vmatpush.msra.mxu0 0.0
    %2704 = vmatpush.msra.mxu0 0.0
    %2705 = vmatpush.msra.mxu0 0.0
    %2706 = vmatpush.msra.mxu0 0.0
    %2707 = vmatpush.msra.mxu0 0.0
    %2708 = vmatpush.msra.mxu0 0.0
    %2709 = vmatpush.msra.mxu0 0.0
    %2710 = vmatpush.msra.mxu0 0.0
    %2711 = vmatpush.msra.mxu0 0.0
    %2712 = vmatpush.msra.mxu0 0.0
    %2713 = vmatpush.msra.mxu0 0.0
    %2714 = vmatpush.msra.mxu0 0.0
    %2715 = vmatpush.msra.mxu0 %v2687
    %2716 = vmatmul.f32.gmra.mxu0 %v2689
    %v2717 = vpop.f32.mrf.mxu0
    %v2718 = vadd.f32 0.0, %v2717
    %2719 = vmatmul.f32.gmra.mxu0 %v2692
    %v2720 = vpop.f32.mrf.mxu0
    %v2721 = vadd.f32 0.0, %v2720
    %2722 = vmatmul.f32.gmra.mxu0 %v2695
    %v2723 = vpop.f32.mrf.mxu0
    %v2724 = vadd.f32 0.0, %v2723
    %2725 = vmatmul.f32.gmra.mxu0 %v2698
    %v2726 = vpop.f32.mrf.mxu0
    %v2727 = vadd.f32 0.0, %v2726
    %2728 = vdwg.mxu0
    %v2729 = vadd.f32 %v2238, %v2718
    %v2730 = vadd.f32 %v2241, %v2721
    %v2731 = vadd.f32 %v2244, %v2724
    %v2732 = vadd.f32 %v2247, %v2727
    %2733 = vrot.lane.b32.xlu0 %v1311, 104
    %v2734 = vpop.permute.xlu0 %2733
    %2735 = vrot.lane.b32.xlu0 %v1314, 104
    %v2736 = vpop.permute.xlu0 %2735
    %2737 = vrot.lane.b32.xlu0 %v1317, 104
    %v2738 = vpop.permute.xlu0 %2737
    %2739 = vrot.lane.b32.xlu0 %v1320, 104
    %v2740 = vpop.permute.xlu0 %2739
    %v2745 = vsel %vm1322, %v2734, 0.0
    %2746 = vadd.xlane.f32.xlu0 %v2745
    %v2747 = vpop.xlane.xlu0 %2746
    %v2748 = vsel %vm1322, %v2736, 0.0
    %2749 = vadd.xlane.f32.xlu0 %v2748
    %v2750 = vpop.xlane.xlu0 %2749
    %v2751 = vsel %vm1322, %v2738, 0.0
    %2752 = vadd.xlane.f32.xlu0 %v2751
    %v2753 = vpop.xlane.xlu0 %2752
    %v2754 = vsel %vm1322, %v2740, 0.0
    %2755 = vadd.xlane.f32.xlu0 %v2754
    %v2756 = vpop.xlane.xlu0 %2755
    %v2757 = vmul.f32 %v2747, %v621
    %v2758 = vmul.f32 %v2750, %v621
    %v2759 = vmul.f32 %v2753, %v621
    %v2760 = vmul.f32 %v2756, %v621
    %v2761 = vsub.f32 %v1311, %v2757
    %v2762 = vsub.f32 %v1314, %v2758
    %v2763 = vsub.f32 %v1317, %v2759
    %v2764 = vsub.f32 %v1320, %v2760
    %v2765 = vmul.f32 %v2761, %v2761
    %v2766 = vmul.f32 %v2762, %v2762
    %v2767 = vmul.f32 %v2763, %v2763
    %v2768 = vmul.f32 %v2764, %v2764
    %2773 = vrot.lane.b32.xlu0 %v2765, 104
    %v2774 = vpop.permute.xlu0 %2773
    %2775 = vrot.lane.b32.xlu0 %v2766, 104
    %v2776 = vpop.permute.xlu0 %2775
    %2777 = vrot.lane.b32.xlu0 %v2767, 104
    %v2778 = vpop.permute.xlu0 %2777
    %2779 = vrot.lane.b32.xlu0 %v2768, 104
    %v2780 = vpop.permute.xlu0 %2779
    %v2785 = vsel %vm1322, %v2774, 0.0
    %2786 = vadd.xlane.f32.xlu0 %v2785
    %v2787 = vpop.xlane.xlu0 %2786
    %v2788 = vsel %vm1322, %v2776, 0.0
    %2789 = vadd.xlane.f32.xlu0 %v2788
    %v2790 = vpop.xlane.xlu0 %2789
    %v2791 = vsel %vm1322, %v2778, 0.0
    %2792 = vadd.xlane.f32.xlu0 %v2791
    %v2793 = vpop.xlane.xlu0 %2792
    %v2794 = vsel %vm1322, %v2780, 0.0
    %2795 = vadd.xlane.f32.xlu0 %v2794
    %v2796 = vpop.xlane.xlu0 %2795
    %v2797 = vmul.f32 %v2787, %v621
    %v2798 = vmul.f32 %v2790, %v621
    %v2799 = vmul.f32 %v2793, %v621
    %v2800 = vmul.f32 %v2796, %v621
    %v2801 = vadd.f32 %v2797, 1e-05
    %v2802 = vadd.f32 %v2798, 1e-05
    %v2803 = vadd.f32 %v2799, 1e-05
    %v2804 = vadd.f32 %v2800, 1e-05
    %v2805 = vrsqrt.pop %v2801
    %v2806 = vmul.f32 %v2805, %v2801
    %v2807 = vmul.f32 %v2806, %v2805
    %v2808 = vmul.f32 0.5, %v2807
    %v2809 = vsub.f32 1.5, %v2808
    %v2810 = vmul.f32 %v2805, %v2809
    %vm2811 = vweird.f32 %v2801
    %vm2812 = vweird.f32 %v2805
    %vm2813 = vmor %vm2811, %vm2812
    %v2814 = vsel %vm2813, %v2805, %v2810
    %v2815 = vrsqrt.pop %v2802
    %v2816 = vmul.f32 %v2815, %v2802
    %v2817 = vmul.f32 %v2816, %v2815
    %v2818 = vmul.f32 0.5, %v2817
    %v2819 = vsub.f32 1.5, %v2818
    %v2820 = vmul.f32 %v2815, %v2819
    %vm2821 = vweird.f32 %v2802
    %vm2822 = vweird.f32 %v2815
    %vm2823 = vmor %vm2821, %vm2822
    %v2824 = vsel %vm2823, %v2815, %v2820
    %v2825 = vrsqrt.pop %v2803
    %v2826 = vmul.f32 %v2825, %v2803
    %v2827 = vmul.f32 %v2826, %v2825
    %v2828 = vmul.f32 0.5, %v2827
    %v2829 = vsub.f32 1.5, %v2828
    %v2830 = vmul.f32 %v2825, %v2829
    %vm2831 = vweird.f32 %v2803
    %vm2832 = vweird.f32 %v2825
    %vm2833 = vmor %vm2831, %vm2832
    %v2834 = vsel %vm2833, %v2825, %v2830
    %v2835 = vrsqrt.pop %v2804
    %v2836 = vmul.f32 %v2835, %v2804
    %v2837 = vmul.f32 %v2836, %v2835
    %v2838 = vmul.f32 0.5, %v2837
    %v2839 = vsub.f32 1.5, %v2838
    %v2840 = vmul.f32 %v2835, %v2839
    %vm2841 = vweird.f32 %v2804
    %vm2842 = vweird.f32 %v2835
    %vm2843 = vmor %vm2841, %vm2842
    %v2844 = vsel %vm2843, %v2835, %v2840
    %v2845 = vmul.f32 %v2761, %v2814
    %v2846 = vmul.f32 %v2762, %v2824
    %v2847 = vmul.f32 %v2763, %v2834
    %v2848 = vmul.f32 %v2764, %v2844
    %2849 = vrot.lane.b32.xlu0 %v175, 24
    %v2850 = vpop.permute.xlu0 %2849
    %v2852 = vmul.f32 %v2845, %v2850
    %v2853 = vmul.f32 %v2846, %v2850
    %v2854 = vmul.f32 %v2847, %v2850
    %v2855 = vmul.f32 %v2848, %v2850
    %2856 = vrot.lane.b32.xlu0 %v176, 24
    %v2857 = vpop.permute.xlu0 %2856
    %v2859 = vadd.f32 %v2852, %v2857
    %v2860 = vadd.f32 %v2853, %v2857
    %v2861 = vadd.f32 %v2854, %v2857
    %v2862 = vadd.f32 %v2855, %v2857
    %2863 = vrot.lane.b32.xlu0 %v1311, 72
    %v2864 = vpop.permute.xlu0 %2863
    %2865 = vrot.lane.b32.xlu0 %v1314, 72
    %v2866 = vpop.permute.xlu0 %2865
    %2867 = vrot.lane.b32.xlu0 %v1317, 72
    %v2868 = vpop.permute.xlu0 %2867
    %2869 = vrot.lane.b32.xlu0 %v1320, 72
    %v2870 = vpop.permute.xlu0 %2869
    %v2875 = vsel %vm1322, %v2864, 0.0
    %2876 = vadd.xlane.f32.xlu0 %v2875
    %v2877 = vpop.xlane.xlu0 %2876
    %v2878 = vsel %vm1322, %v2866, 0.0
    %2879 = vadd.xlane.f32.xlu0 %v2878
    %v2880 = vpop.xlane.xlu0 %2879
    %v2881 = vsel %vm1322, %v2868, 0.0
    %2882 = vadd.xlane.f32.xlu0 %v2881
    %v2883 = vpop.xlane.xlu0 %2882
    %v2884 = vsel %vm1322, %v2870, 0.0
    %2885 = vadd.xlane.f32.xlu0 %v2884
    %v2886 = vpop.xlane.xlu0 %2885
    %v2887 = vmul.f32 %v2877, %v621
    %v2888 = vmul.f32 %v2880, %v621
    %v2889 = vmul.f32 %v2883, %v621
    %v2890 = vmul.f32 %v2886, %v621
    %v2891 = vsub.f32 %v1311, %v2887
    %v2892 = vsub.f32 %v1314, %v2888
    %v2893 = vsub.f32 %v1317, %v2889
    %v2894 = vsub.f32 %v1320, %v2890
    %v2895 = vmul.f32 %v2891, %v2891
    %v2896 = vmul.f32 %v2892, %v2892
    %v2897 = vmul.f32 %v2893, %v2893
    %v2898 = vmul.f32 %v2894, %v2894
    %2903 = vrot.lane.b32.xlu0 %v2895, 72
    %v2904 = vpop.permute.xlu0 %2903
    %2905 = vrot.lane.b32.xlu0 %v2896, 72
    %v2906 = vpop.permute.xlu0 %2905
    %2907 = vrot.lane.b32.xlu0 %v2897, 72
    %v2908 = vpop.permute.xlu0 %2907
    %2909 = vrot.lane.b32.xlu0 %v2898, 72
    %v2910 = vpop.permute.xlu0 %2909
    %v2915 = vsel %vm1322, %v2904, 0.0
    %2916 = vadd.xlane.f32.xlu0 %v2915
    %v2917 = vpop.xlane.xlu0 %2916
    %v2918 = vsel %vm1322, %v2906, 0.0
    %2919 = vadd.xlane.f32.xlu0 %v2918
    %v2920 = vpop.xlane.xlu0 %2919
    %v2921 = vsel %vm1322, %v2908, 0.0
    %2922 = vadd.xlane.f32.xlu0 %v2921
    %v2923 = vpop.xlane.xlu0 %2922
    %v2924 = vsel %vm1322, %v2910, 0.0
    %2925 = vadd.xlane.f32.xlu0 %v2924
    %v2926 = vpop.xlane.xlu0 %2925
    %v2927 = vmul.f32 %v2917, %v621
    %v2928 = vmul.f32 %v2920, %v621
    %v2929 = vmul.f32 %v2923, %v621
    %v2930 = vmul.f32 %v2926, %v621
    %v2931 = vadd.f32 %v2927, 1e-05
    %v2932 = vadd.f32 %v2928, 1e-05
    %v2933 = vadd.f32 %v2929, 1e-05
    %v2934 = vadd.f32 %v2930, 1e-05
    %v2935 = vrsqrt.pop %v2931
    %v2936 = vmul.f32 %v2935, %v2931
    %v2937 = vmul.f32 %v2936, %v2935
    %v2938 = vmul.f32 0.5, %v2937
    %v2939 = vsub.f32 1.5, %v2938
    %v2940 = vmul.f32 %v2935, %v2939
    %vm2941 = vweird.f32 %v2931
    %vm2942 = vweird.f32 %v2935
    %vm2943 = vmor %vm2941, %vm2942
    %v2944 = vsel %vm2943, %v2935, %v2940
    %v2945 = vrsqrt.pop %v2932
    %v2946 = vmul.f32 %v2945, %v2932
    %v2947 = vmul.f32 %v2946, %v2945
    %v2948 = vmul.f32 0.5, %v2947
    %v2949 = vsub.f32 1.5, %v2948
    %v2950 = vmul.f32 %v2945, %v2949
    %vm2951 = vweird.f32 %v2932
    %vm2952 = vweird.f32 %v2945
    %vm2953 = vmor %vm2951, %vm2952
    %v2954 = vsel %vm2953, %v2945, %v2950
    %v2955 = vrsqrt.pop %v2933
    %v2956 = vmul.f32 %v2955, %v2933
    %v2957 = vmul.f32 %v2956, %v2955
    %v2958 = vmul.f32 0.5, %v2957
    %v2959 = vsub.f32 1.5, %v2958
    %v2960 = vmul.f32 %v2955, %v2959
    %vm2961 = vweird.f32 %v2933
    %vm2962 = vweird.f32 %v2955
    %vm2963 = vmor %vm2961, %vm2962
    %v2964 = vsel %vm2963, %v2955, %v2960
    %v2965 = vrsqrt.pop %v2934
    %v2966 = vmul.f32 %v2965, %v2934
    %v2967 = vmul.f32 %v2966, %v2965
    %v2968 = vmul.f32 0.5, %v2967
    %v2969 = vsub.f32 1.5, %v2968
    %v2970 = vmul.f32 %v2965, %v2969
    %vm2971 = vweird.f32 %v2934
    %vm2972 = vweird.f32 %v2965
    %vm2973 = vmor %vm2971, %vm2972
    %v2974 = vsel %vm2973, %v2965, %v2970
    %v2975 = vmul.f32 %v2891, %v2944
    %v2976 = vmul.f32 %v2892, %v2954
    %v2977 = vmul.f32 %v2893, %v2964
    %v2978 = vmul.f32 %v2894, %v2974
    %2979 = vrot.lane.b32.xlu0 %v177, 56
    %v2980 = vpop.permute.xlu0 %2979
    %v2982 = vmul.f32 %v2975, %v2980
    %v2983 = vmul.f32 %v2976, %v2980
    %v2984 = vmul.f32 %v2977, %v2980
    %v2985 = vmul.f32 %v2978, %v2980
    %2986 = vrot.lane.b32.xlu0 %v178, 56
    %v2987 = vpop.permute.xlu0 %2986
    %v2989 = vadd.f32 %v2982, %v2987
    %v2990 = vadd.f32 %v2983, %v2987
    %v2991 = vadd.f32 %v2984, %v2987
    %v2992 = vadd.f32 %v2985, %v2987
    %2997 = vrot.lane.b32.xlu0 %v2859, 104
    %v2998 = vpop.permute.xlu0 %2997
    %2999 = vrot.lane.b32.xlu0 %v2860, 104
    %v3000 = vpop.permute.xlu0 %2999
    %3001 = vrot.lane.b32.xlu0 %v2861, 104
    %v3002 = vpop.permute.xlu0 %3001
    %3003 = vrot.lane.b32.xlu0 %v2862, 104
    %v3004 = vpop.permute.xlu0 %3003
    %3009 = vrot.lane.b32.xlu0 %v2989, 72
    %v3010 = vpop.permute.xlu0 %3009
    %3011 = vrot.lane.b32.xlu0 %v2990, 72
    %v3012 = vpop.permute.xlu0 %3011
    %3013 = vrot.lane.b32.xlu0 %v2991, 72
    %v3014 = vpop.permute.xlu0 %3013
    %3015 = vrot.lane.b32.xlu0 %v2992, 72
    %v3016 = vpop.permute.xlu0 %3015
    %v3017 = vsel %vm1322, %v2998, 0
    %v3019 = vsel %vm1322, %v3000, 0
    %v3021 = vsel %vm1322, %v3002, 0
    %v3023 = vsel %vm1322, %v3004, 0
    %v3025 = vsel %vm1322, %v3010, 0
    %v3027 = vsel %vm1322, %v3012, 0
    %v3029 = vsel %vm1322, %v3014, 0
    %v3031 = vsel %vm1322, %v3016, 0
    %3033 = vmatpush.xpose.msra.mxu0 0.0
    %3034 = vmatpush.xpose.msra.mxu0 0.0
    %3035 = vmatpush.xpose.msra.mxu0 0.0
    %3036 = vmatpush.xpose.msra.mxu0 0.0
    %3037 = vmatpush.xpose.msra.mxu0 0.0
    %3038 = vmatpush.xpose.msra.mxu0 0.0
    %3039 = vmatpush.xpose.msra.mxu0 0.0
    %3040 = vmatpush.xpose.msra.mxu0 0.0
    %3041 = vmatpush.xpose.msra.mxu0 0.0
    %3042 = vmatpush.xpose.msra.mxu0 0.0
    %3043 = vmatpush.xpose.msra.mxu0 0.0
    %3044 = vmatpush.xpose.msra.mxu0 0.0
    %3045 = vmatpush.xpose.msra.mxu0 %v3031
    %3046 = vmatpush.xpose.msra.mxu0 %v3029
    %3047 = vmatpush.xpose.msra.mxu0 %v3027
    %3048 = vmatpush.xpose.msra.mxu0 %v3025
    %3049 = vmatmul.f32.gmra.mxu0 %v3017
    %v3050 = vpop.f32.mrf.mxu0
    %v3051 = vadd.f32 0.0, %v3050
    %3052 = vmatmul.f32.gmra.mxu0 %v3019
    %v3053 = vpop.f32.mrf.mxu0
    %v3054 = vadd.f32 0.0, %v3053
    %3055 = vmatmul.f32.gmra.mxu0 %v3021
    %v3056 = vpop.f32.mrf.mxu0
    %v3057 = vadd.f32 0.0, %v3056
    %3058 = vmatmul.f32.gmra.mxu0 %v3023
    %v3059 = vpop.f32.mrf.mxu0
    %v3060 = vadd.f32 0.0, %v3059
    %3061 = vdwg.mxu0
    %v3062 = vmul.f32 %v3051, 0.35355338
    %v3063 = vmul.f32 %v3054, 0.35355338
    %v3064 = vmul.f32 %v3057, 0.35355338
    %v3065 = vmul.f32 %v3060, 0.35355338
    %v3066 = vadd.f32 %v3062, %v1154
    %v3067 = vadd.f32 %v3063, %v1155
    %v3068 = vadd.f32 %v3064, %v1156
    %v3069 = vadd.f32 %v3065, %v1157
    %v3070 = vadd.f32 %v3066, %v136
    %v3071 = vadd.f32 %v3067, %v137
    %v3072 = vadd.f32 %v3068, %v138
    %v3073 = vadd.f32 %v3069, %v139
    %v3074 = vsel %vm332, %v3070, -inf
    %3075 = vmax.xlane.f32.xlu0 %v3074
    %v3076 = vpop.xlane.xlu0 %3075
    %v3077 = vsel %vm332, %v3071, -inf
    %3078 = vmax.xlane.f32.xlu0 %v3077
    %v3079 = vpop.xlane.xlu0 %3078
    %v3080 = vsel %vm332, %v3072, -inf
    %3081 = vmax.xlane.f32.xlu0 %v3080
    %v3082 = vpop.xlane.xlu0 %3081
    %v3083 = vsel %vm332, %v3073, -inf
    %3084 = vmax.xlane.f32.xlu0 %v3083
    %v3085 = vpop.xlane.xlu0 %3084
    %v3086 = vsub.f32 %v3070, %v3076
    %v3087 = vsub.f32 %v3071, %v3079
    %v3088 = vsub.f32 %v3072, %v3082
    %v3089 = vsub.f32 %v3073, %v3085
    %v3090 = vmul.f32 %v3086, 1.442695
    %v3091 = vpow.pop %v3090
    %v3092 = vmul.f32 %v3087, 1.442695
    %v3093 = vpow.pop %v3092
    %v3094 = vmul.f32 %v3088, 1.442695
    %v3095 = vpow.pop %v3094
    %v3096 = vmul.f32 %v3089, 1.442695
    %v3097 = vpow.pop %v3096
    %v3098 = vsel %vm332, %v3091, 0.0
    %3099 = vadd.xlane.f32.xlu0 %v3098
    %v3100 = vpop.xlane.xlu0 %3099
    %v3101 = vsel %vm332, %v3093, 0.0
    %3102 = vadd.xlane.f32.xlu0 %v3101
    %v3103 = vpop.xlane.xlu0 %3102
    %v3104 = vsel %vm332, %v3095, 0.0
    %3105 = vadd.xlane.f32.xlu0 %v3104
    %v3106 = vpop.xlane.xlu0 %3105
    %v3107 = vsel %vm332, %v3097, 0.0
    %3108 = vadd.xlane.f32.xlu0 %v3107
    %v3109 = vpop.xlane.xlu0 %3108
    %v3110 = vrcp.pop %v3100
    %v3111 = vrcp.pop %v3103
    %v3112 = vrcp.pop %v3106
    %v3113 = vrcp.pop %v3109
    %v3114 = vmul.f32 %v3091, %v3110
    %v3115 = vmul.f32 %v3093, %v3111
    %v3116 = vmul.f32 %v3095, %v3112
    %v3117 = vmul.f32 %v3097, %v3113
    %3118 = vrot.lane.b32.xlu0 %v1311, 40
    %v3119 = vpop.permute.xlu0 %3118
    %3120 = vrot.lane.b32.xlu0 %v1314, 40
    %v3121 = vpop.permute.xlu0 %3120
    %3122 = vrot.lane.b32.xlu0 %v1317, 40
    %v3123 = vpop.permute.xlu0 %3122
    %3124 = vrot.lane.b32.xlu0 %v1320, 40
    %v3125 = vpop.permute.xlu0 %3124
    %v3131 = vsel %vm332, %v3114, 0
    %v3134 = vsel %vm332, %v3115, 0
    %v3137 = vsel %vm332, %v3116, 0
    %v3140 = vsel %vm332, %v3117, 0
    %3142 = vmatpush.msra.mxu0 0.0
    %3143 = vmatpush.msra.mxu0 0.0
    %3144 = vmatpush.msra.mxu0 0.0
    %3145 = vmatpush.msra.mxu0 0.0
    %3146 = vmatpush.msra.mxu0 0.0
    %3147 = vmatpush.msra.mxu0 0.0
    %3148 = vmatpush.msra.mxu0 0.0
    %3149 = vmatpush.msra.mxu0 0.0
    %3150 = vmatpush.msra.mxu0 0.0
    %3151 = vmatpush.msra.mxu0 0.0
    %3152 = vmatpush.msra.mxu0 0.0
    %3153 = vmatpush.msra.mxu0 0.0
    %3154 = vmatpush.msra.mxu0 %v3125
    %3155 = vmatpush.msra.mxu0 %v3123
    %3156 = vmatpush.msra.mxu0 %v3121
    %3157 = vmatpush.msra.mxu0 %v3119
    %3158 = vmatmul.f32.gmra.mxu0 %v3131
    %v3159 = vpop.f32.mrf.mxu0
    %v3160 = vadd.f32 0.0, %v3159
    %3161 = vmatmul.f32.gmra.mxu0 %v3134
    %v3162 = vpop.f32.mrf.mxu0
    %v3163 = vadd.f32 0.0, %v3162
    %3164 = vmatmul.f32.gmra.mxu0 %v3137
    %v3165 = vpop.f32.mrf.mxu0
    %v3166 = vadd.f32 0.0, %v3165
    %3167 = vmatmul.f32.gmra.mxu0 %v3140
    %v3168 = vpop.f32.mrf.mxu0
    %v3169 = vadd.f32 0.0, %v3168
    %3170 = vdwg.mxu0
    %v3171 = vld [vmem:[%s6 + $0x68] sm:$0xff]
    %v3173 = vsel %vm1322, %v3160, 0
    %v3176 = vsel %vm1322, %v3163, 0
    %v3179 = vsel %vm1322, %v3166, 0
    %v3182 = vsel %vm1322, %v3169, 0
    %3184 = vmatpush.msra.mxu0 0.0
    %3185 = vmatpush.msra.mxu0 0.0
    %3186 = vmatpush.msra.mxu0 0.0
    %3187 = vmatpush.msra.mxu0 0.0
    %3188 = vmatpush.msra.mxu0 0.0
    %3189 = vmatpush.msra.mxu0 0.0
    %3190 = vmatpush.msra.mxu0 0.0
    %3191 = vmatpush.msra.mxu0 0.0
    %3192 = vmatpush.msra.mxu0 0.0
    %3193 = vmatpush.msra.mxu0 0.0
    %3194 = vmatpush.msra.mxu0 0.0
    %3195 = vmatpush.msra.mxu0 0.0
    %3196 = vmatpush.msra.mxu0 0.0
    %3197 = vmatpush.msra.mxu0 0.0
    %3198 = vmatpush.msra.mxu0 0.0
    %3199 = vmatpush.msra.mxu0 %v3171
    %3200 = vmatmul.f32.gmra.mxu0 %v3173
    %v3201 = vpop.f32.mrf.mxu0
    %v3202 = vadd.f32 0.0, %v3201
    %3203 = vmatmul.f32.gmra.mxu0 %v3176
    %v3204 = vpop.f32.mrf.mxu0
    %v3205 = vadd.f32 0.0, %v3204
    %3206 = vmatmul.f32.gmra.mxu0 %v3179
    %v3207 = vpop.f32.mrf.mxu0
    %v3208 = vadd.f32 0.0, %v3207
    %3209 = vmatmul.f32.gmra.mxu0 %v3182
    %v3210 = vpop.f32.mrf.mxu0
    %v3211 = vadd.f32 0.0, %v3210
    %3212 = vdwg.mxu0
    %v3213 = vadd.f32 %v2729, %v3202
    %v3214 = vadd.f32 %v2730, %v3205
    %v3215 = vadd.f32 %v2731, %v3208
    %v3216 = vadd.f32 %v2732, %v3211
    %v3217 = vadd.f32 %v3213, %v174
    %v3218 = vadd.f32 %v3214, %v174
    %v3219 = vadd.f32 %v3215, %v174
    %v3220 = vadd.f32 %v3216, %v174
    %v3221 = vmul.f32 %v3217, %v509
    %v3222 = vmul.f32 %v3218, %v524
    %v3223 = vmul.f32 %v3219, %v539
    %v3224 = vmul.f32 %v3220, %v554
    %v3225 = vmul.f32 %v3221, %v182
    %v3226 = vmul.f32 %v3222, %v187
    %v3227 = vmul.f32 %v3223, %v192
    %v3228 = vmul.f32 %v3224, %v197
    %v3229 = vadd.f32 %v3225, %v199
    %v3230 = vadd.f32 %v3226, %v200
    %v3231 = vadd.f32 %v3227, %v201
    %v3232 = vadd.f32 %v3228, %v202
    %v3233 = vmul.f32 %v3229, %v182
    %v3234 = vmul.f32 %v3230, %v187
    %v3235 = vmul.f32 %v3231, %v192
    %v3236 = vmul.f32 %v3232, %v197
    %v3237 = vsel %vm332, %v3233, 0.0
    %3238 = vadd.xlane.f32.xlu0 %v3237
    %v3239 = vpop.xlane.xlu0 %3238
    %v3240 = vsel %vm332, %v3234, 0.0
    %3241 = vadd.xlane.f32.xlu0 %v3240
    %v3242 = vpop.xlane.xlu0 %3241
    %v3243 = vsel %vm332, %v3235, 0.0
    %3244 = vadd.xlane.f32.xlu0 %v3243
    %v3245 = vpop.xlane.xlu0 %3244
    %v3246 = vsel %vm332, %v3236, 0.0
    %3247 = vadd.xlane.f32.xlu0 %v3246
    %v3248 = vpop.xlane.xlu0 %3247
    %v3249 = vmul.f32 %v3239, %v1176
    %v3250 = vmul.f32 %v3242, %v1176
    %v3251 = vmul.f32 %v3245, %v1176
    %v3252 = vmul.f32 %v3248, %v1176
    %v3253 = vsub.f32 %v3233, %v3249
    %v3254 = vsub.f32 %v3234, %v3250
    %v3255 = vsub.f32 %v3235, %v3251
    %v3256 = vsub.f32 %v3236, %v3252
    %v3257 = vmul.f32 %v3253, %v3253
    %v3258 = vmul.f32 %v3254, %v3254
    %v3259 = vmul.f32 %v3255, %v3255
    %v3260 = vmul.f32 %v3256, %v3256
    %v3261 = vsel %vm332, %v3257, 0.0
    %3262 = vadd.xlane.f32.xlu0 %v3261
    %v3263 = vpop.xlane.xlu0 %3262
    %v3264 = vsel %vm332, %v3258, 0.0
    %3265 = vadd.xlane.f32.xlu0 %v3264
    %v3266 = vpop.xlane.xlu0 %3265
    %v3267 = vsel %vm332, %v3259, 0.0
    %3268 = vadd.xlane.f32.xlu0 %v3267
    %v3269 = vpop.xlane.xlu0 %3268
    %v3270 = vsel %vm332, %v3260, 0.0
    %3271 = vadd.xlane.f32.xlu0 %v3270
    %v3272 = vpop.xlane.xlu0 %3271
    %v3273 = vmul.f32 %v3263, %v1176
    %v3274 = vmul.f32 %v3266, %v1176
    %v3275 = vmul.f32 %v3269, %v1176
    %v3276 = vmul.f32 %v3272, %v1176
    %v3277 = vadd.f32 %v3273, 1e-05
    %v3278 = vadd.f32 %v3274, 1e-05
    %v3279 = vadd.f32 %v3275, 1e-05
    %v3280 = vadd.f32 %v3276, 1e-05
    %v3281 = vrsqrt.pop %v3277
    %v3282 = vmul.f32 %v3281, %v3277
    %v3283 = vmul.f32 %v3282, %v3281
    %v3284 = vmul.f32 0.5, %v3283
    %v3285 = vsub.f32 1.5, %v3284
    %v3286 = vmul.f32 %v3281, %v3285
    %vm3287 = vweird.f32 %v3277
    %vm3288 = vweird.f32 %v3281
    %vm3289 = vmor %vm3287, %vm3288
    %v3290 = vsel %vm3289, %v3281, %v3286
    %v3291 = vrsqrt.pop %v3278
    %v3292 = vmul.f32 %v3291, %v3278
    %v3293 = vmul.f32 %v3292, %v3291
    %v3294 = vmul.f32 0.5, %v3293
    %v3295 = vsub.f32 1.5, %v3294
    %v3296 = vmul.f32 %v3291, %v3295
    %vm3297 = vweird.f32 %v3278
    %vm3298 = vweird.f32 %v3291
    %vm3299 = vmor %vm3297, %vm3298
    %v3300 = vsel %vm3299, %v3291, %v3296
    %v3301 = vrsqrt.pop %v3279
    %v3302 = vmul.f32 %v3301, %v3279
    %v3303 = vmul.f32 %v3302, %v3301
    %v3304 = vmul.f32 0.5, %v3303
    %v3305 = vsub.f32 1.5, %v3304
    %v3306 = vmul.f32 %v3301, %v3305
    %vm3307 = vweird.f32 %v3279
    %vm3308 = vweird.f32 %v3301
    %vm3309 = vmor %vm3307, %vm3308
    %v3310 = vsel %vm3309, %v3301, %v3306
    %v3311 = vrsqrt.pop %v3280
    %v3312 = vmul.f32 %v3311, %v3280
    %v3313 = vmul.f32 %v3312, %v3311
    %v3314 = vmul.f32 0.5, %v3313
    %v3315 = vsub.f32 1.5, %v3314
    %v3316 = vmul.f32 %v3311, %v3315
    %vm3317 = vweird.f32 %v3280
    %vm3318 = vweird.f32 %v3311
    %vm3319 = vmor %vm3317, %vm3318
    %v3320 = vsel %vm3319, %v3311, %v3316
    %v3321 = vmul.f32 %v3253, %v3290
    %v3322 = vmul.f32 %v3254, %v3300
    %v3323 = vmul.f32 %v3255, %v3310
    %v3324 = vmul.f32 %v3256, %v3320
    %3329 = vrot.lane.b32.xlu0 %v433, 64
    %v3330 = vpop.permute.xlu0 %3329
    %3331 = vrot.lane.b32.xlu0 %v448, 64
    %v3332 = vpop.permute.xlu0 %3331
    %3333 = vrot.lane.b32.xlu0 %v463, 64
    %v3334 = vpop.permute.xlu0 %3333
    %3335 = vrot.lane.b32.xlu0 %v478, 64
    %v3336 = vpop.permute.xlu0 %3335
    %v3341 = vmul.f32 %v3321, %v3330
    %v3342 = vmul.f32 %v3322, %v3332
    %v3343 = vmul.f32 %v3323, %v3334
    %v3344 = vmul.f32 %v3324, %v3336
    %3345 = vrot.lane.b32.xlu0 %v363, 32
    %v3346 = vpop.permute.xlu0 %3345
    %3347 = vrot.lane.b32.xlu0 %v366, 32
    %v3348 = vpop.permute.xlu0 %3347
    %3349 = vrot.lane.b32.xlu0 %v369, 32
    %v3350 = vpop.permute.xlu0 %3349
    %3351 = vrot.lane.b32.xlu0 %v372, 32
    %v3352 = vpop.permute.xlu0 %3351
    %v3357 = vadd.f32 %v3341, %v3346
    %v3358 = vadd.f32 %v3342, %v3348
    %v3359 = vadd.f32 %v3343, %v3350
    %v3360 = vadd.f32 %v3344, %v3352
    %v3361 = vmul.f32 %v3357, %v182
    %v3362 = vmul.f32 %v3358, %v187
    %v3363 = vmul.f32 %v3359, %v192
    %v3364 = vmul.f32 %v3360, %v197
    %v3366 = vsel %vm332, %v3361, 0
    %v3369 = vsel %vm332, %v3362, 0
    %v3372 = vsel %vm332, %v3363, 0
    %v3375 = vsel %vm332, %v3364, 0
    %3377 = vmatpush.msra.mxu0 0.0
    %3378 = vmatpush.msra.mxu0 0.0
    %3379 = vmatpush.msra.mxu0 0.0
    %3380 = vmatpush.msra.mxu0 0.0
    %3381 = vmatpush.msra.mxu0 0.0
    %3382 = vmatpush.msra.mxu0 0.0
    %3383 = vmatpush.msra.mxu0 0.0
    %3384 = vmatpush.msra.mxu0 0.0
    %3385 = vmatpush.msra.mxu0 0.0
    %3386 = vmatpush.msra.mxu0 0.0
    %3387 = vmatpush.msra.mxu0 0.0
    %3388 = vmatpush.msra.mxu0 0.0
    %3389 = vmatpush.msra.mxu0 %v154
    %3390 = vmatpush.msra.mxu0 %v152
    %3391 = vmatpush.msra.mxu0 %v150
    %3392 = vmatpush.msra.mxu0 %v148
    %3393 = vmatmul.f32.gmra.mxu0 %v3366
    %v3394 = vpop.f32.mrf.mxu0
    %v3395 = vadd.f32 0.0, %v3394
    %3396 = vmatmul.f32.gmra.mxu0 %v3369
    %v3397 = vpop.f32.mrf.mxu0
    %v3398 = vadd.f32 0.0, %v3397
    %3399 = vmatmul.f32.gmra.mxu0 %v3372
    %v3400 = vpop.f32.mrf.mxu0
    %v3401 = vadd.f32 0.0, %v3400
    %3402 = vmatmul.f32.gmra.mxu0 %v3375
    %v3403 = vpop.f32.mrf.mxu0
    %v3404 = vadd.f32 0.0, %v3403
    %3405 = vdwg.mxu0
    %3406 = vmatpush.msra.mxu0 0.0
    %3407 = vmatpush.msra.mxu0 0.0
    %3408 = vmatpush.msra.mxu0 0.0
    %3409 = vmatpush.msra.mxu0 0.0
    %3410 = vmatpush.msra.mxu0 0.0
    %3411 = vmatpush.msra.mxu0 0.0
    %3412 = vmatpush.msra.mxu0 0.0
    %3413 = vmatpush.msra.mxu0 0.0
    %3414 = vmatpush.msra.mxu0 0.0
    %3415 = vmatpush.msra.mxu0 0.0
    %3416 = vmatpush.msra.mxu0 0.0
    %3417 = vmatpush.msra.mxu0 0.0
    %3418 = vmatpush.msra.mxu0 %v155
    %3419 = vmatpush.msra.mxu0 %v153
    %3420 = vmatpush.msra.mxu0 %v151
    %3421 = vmatpush.msra.mxu0 %v149
    %3422 = vmatmul.f32.gmra.mxu0 %v3366
    %v3423 = vpop.f32.mrf.mxu0
    %v3424 = vadd.f32 0.0, %v3423
    %3425 = vmatmul.f32.gmra.mxu0 %v3369
    %v3426 = vpop.f32.mrf.mxu0
    %v3427 = vadd.f32 0.0, %v3426
    %3428 = vmatmul.f32.gmra.mxu0 %v3372
    %v3429 = vpop.f32.mrf.mxu0
    %v3430 = vadd.f32 0.0, %v3429
    %3431 = vmatmul.f32.gmra.mxu0 %v3375
    %v3432 = vpop.f32.mrf.mxu0
    %v3433 = vadd.f32 0.0, %v3432
    %3434 = vdwg.mxu0
    %v3435 = vxor.u32 %v3424, 2147483648
    %v3436 = vxor.u32 %v3427, 2147483648
    %v3437 = vxor.u32 %v3430, 2147483648
    %v3438 = vxor.u32 %v3433, 2147483648
    %v3439 = vmul.f32 %v3435, 1.442695
    %v3440 = vpow.pop %v3439
    %v3441 = vmul.f32 %v3436, 1.442695
    %v3442 = vpow.pop %v3441
    %v3443 = vmul.f32 %v3437, 1.442695
    %v3444 = vpow.pop %v3443
    %v3445 = vmul.f32 %v3438, 1.442695
    %v3446 = vpow.pop %v3445
    %v3447 = vadd.f32 %v3440, 1.0
    %v3448 = vadd.f32 %v3442, 1.0
    %v3449 = vadd.f32 %v3444, 1.0
    %v3450 = vadd.f32 %v3446, 1.0
    %v3451 = vrcp.pop %v3447
    %v3452 = vmul.f32 %v3447, %v3451
    %v3453 = vsub.f32 1.0, %v3452
    %v3454 = vmul.f32 %v3451, %v3453
    %v3455 = vadd.f32 %v3451, %v3454
    %vm3456 = vweird.f32 %v3447
    %vm3457 = vweird.f32 %v3451
    %vm3458 = vmor %vm3456, %vm3457
    %v3459 = vsel %vm3458, %v3451, %v3455
    %v3460 = vand.u32 2147483647, %v3447
    %vm3461 = vcmp.eq.f32.partialorder %v3460, 8.507059e+37
    %v3462 = vand.u32 %v3447, 2147483648
    %v3463 = vor.u32 1.1754944e-38, %v3462
    %v3464 = vsel %vm3461, %v3463, %v3459
    %v3465 = vmul.f32 1.0, %v3464
    %v3466 = vrcp.pop %v3448
    %v3467 = vmul.f32 %v3448, %v3466
    %v3468 = vsub.f32 1.0, %v3467
    %v3469 = vmul.f32 %v3466, %v3468
    %v3470 = vadd.f32 %v3466, %v3469
    %vm3471 = vweird.f32 %v3448
    %vm3472 = vweird.f32 %v3466
    %vm3473 = vmor %vm3471, %vm3472
    %v3474 = vsel %vm3473, %v3466, %v3470
    %v3475 = vand.u32 2147483647, %v3448
    %vm3476 = vcmp.eq.f32.partialorder %v3475, 8.507059e+37
    %v3477 = vand.u32 %v3448, 2147483648
    %v3478 = vor.u32 1.1754944e-38, %v3477
    %v3479 = vsel %vm3476, %v3478, %v3474
    %v3480 = vmul.f32 1.0, %v3479
    %v3481 = vrcp.pop %v3449
    %v3482 = vmul.f32 %v3449, %v3481
    %v3483 = vsub.f32 1.0, %v3482
    %v3484 = vmul.f32 %v3481, %v3483
    %v3485 = vadd.f32 %v3481, %v3484
    %vm3486 = vweird.f32 %v3449
    %vm3487 = vweird.f32 %v3481
    %vm3488 = vmor %vm3486, %vm3487
    %v3489 = vsel %vm3488, %v3481, %v3485
    %v3490 = vand.u32 2147483647, %v3449
    %vm3491 = vcmp.eq.f32.partialorder %v3490, 8.507059e+37
    %v3492 = vand.u32 %v3449, 2147483648
    %v3493 = vor.u32 1.1754944e-38, %v3492
    %v3494 = vsel %vm3491, %v3493, %v3489
    %v3495 = vmul.f32 1.0, %v3494
    %v3496 = vrcp.pop %v3450
    %v3497 = vmul.f32 %v3450, %v3496
    %v3498 = vsub.f32 1.0, %v3497
    %v3499 = vmul.f32 %v3496, %v3498
    %v3500 = vadd.f32 %v3496, %v3499
    %vm3501 = vweird.f32 %v3450
    %vm3502 = vweird.f32 %v3496
    %vm3503 = vmor %vm3501, %vm3502
    %v3504 = vsel %vm3503, %v3496, %v3500
    %v3505 = vand.u32 2147483647, %v3450
    %vm3506 = vcmp.eq.f32.partialorder %v3505, 8.507059e+37
    %v3507 = vand.u32 %v3450, 2147483648
    %v3508 = vor.u32 1.1754944e-38, %v3507
    %v3509 = vsel %vm3506, %v3508, %v3504
    %v3510 = vmul.f32 1.0, %v3509
    %v3511 = vmul.f32 %v3424, %v3465
    %v3512 = vmul.f32 %v3427, %v3480
    %v3513 = vmul.f32 %v3430, %v3495
    %v3514 = vmul.f32 %v3433, %v3510
    %v3515 = vmul.f32 %v3511, %v3395
    %v3516 = vmul.f32 %v3512, %v3398
    %v3517 = vmul.f32 %v3513, %v3401
    %v3518 = vmul.f32 %v3514, %v3404
    %3519 = vmatpush.msra.mxu0 %v171
    %3520 = vmatpush.msra.mxu0 %v170
    %3521 = vmatpush.msra.mxu0 %v169
    %3522 = vmatpush.msra.mxu0 %v168
    %3523 = vmatpush.msra.mxu0 %v167
    %3524 = vmatpush.msra.mxu0 %v166
    %3525 = vmatpush.msra.mxu0 %v165
    %3526 = vmatpush.msra.mxu0 %v164
    %3527 = vmatpush.msra.mxu0 %v163
    %3528 = vmatpush.msra.mxu0 %v162
    %3529 = vmatpush.msra.mxu0 %v161
    %3530 = vmatpush.msra.mxu0 %v160
    %3531 = vmatpush.msra.mxu0 %v159
    %3532 = vmatpush.msra.mxu0 %v158
    %3533 = vmatpush.msra.mxu0 %v157
    %3534 = vmatpush.msra.mxu0 %v156
    %3535 = vmatmul.f32.gmra.mxu0 %v3515
    %v3536 = vpop.f32.mrf.mxu0
    %v3537 = vadd.f32 0.0, %v3536
    %3538 = vmatmul.f32.gmra.mxu0 %v3516
    %v3539 = vpop.f32.mrf.mxu0
    %v3540 = vadd.f32 0.0, %v3539
    %3541 = vmatmul.f32.gmra.mxu0 %v3517
    %v3542 = vpop.f32.mrf.mxu0
    %v3543 = vadd.f32 0.0, %v3542
    %3544 = vmatmul.f32.gmra.mxu0 %v3518
    %v3545 = vpop.f32.mrf.mxu0
    %v3546 = vadd.f32 0.0, %v3545
    %3547 = vdwg.mxu0
    %v3548 = vmul.f32 %v3537, %v182
    %v3549 = vmul.f32 %v3540, %v187
    %v3550 = vmul.f32 %v3543, %v192
    %v3551 = vmul.f32 %v3546, %v197
    %3556 = vrot.lane.b32.xlu0 %v509, 96
    %v3557 = vpop.permute.xlu0 %3556
    %3558 = vrot.lane.b32.xlu0 %v524, 96
    %v3559 = vpop.permute.xlu0 %3558
    %3560 = vrot.lane.b32.xlu0 %v539, 96
    %v3561 = vpop.permute.xlu0 %3560
    %3562 = vrot.lane.b32.xlu0 %v554, 96
    %v3563 = vpop.permute.xlu0 %3562
    %v3568 = vmul.f32 %v3548, %v3557
    %v3569 = vmul.f32 %v3549, %v3559
    %v3570 = vmul.f32 %v3550, %v3561
    %v3571 = vmul.f32 %v3551, %v3563
    %v3572 = vmul.f32 %v3568, %v182
    %v3573 = vmul.f32 %v3569, %v187
    %v3574 = vmul.f32 %v3570, %v192
    %v3575 = vmul.f32 %v3571, %v197
    %v3576 = vadd.f32 %v3572, %v3233
    %v3577 = vadd.f32 %v3573, %v3234
    %v3578 = vadd.f32 %v3574, %v3235
    %v3579 = vadd.f32 %v3575, %v3236
    %v3580 = vmul.f32 %v3576, %v182
    %v3581 = vmul.f32 %v3577, %v187
    %v3582 = vmul.f32 %v3578, %v192
    %v3583 = vmul.f32 %v3579, %v197
    %v3584 = vmul.f32 %v3580, %v182
    %v3585 = vmul.f32 %v3581, %v187
    %v3586 = vmul.f32 %v3582, %v192
    %v3587 = vmul.f32 %v3583, %v197
    %3588 = vst.msk [vmem:[#allocation10] sm:$0xff] %vm332, %v3584
    %3589 = vst.msk [vmem:[#allocation10 + $0x8] sm:$0xff] %vm332, %v3585
    %3590 = vst.msk [vmem:[#allocation10 + $0x10] sm:$0xff] %vm332, %v3586
    %3591 = vst.msk [vmem:[#allocation10 + $0x18] sm:$0xff] %vm332, %v3587
    // Predicated region
    $region58: #{tpu_custom_call.1} parent=1 // pred_check
      _
    $region59: #{tpu_custom_call.1} parent=1 // pred_check_branch
      %3593 = sbr.rel (0) target = $region61
    $region60: #{tpu_custom_call.1} parent=1 // pred_region
      %3595 = vsyncadd [#allocation4], 0
      %s3596 = sshll.u32 [#allocation10], 4
      %s3597 = int_to_ptr.vmem [resolvable:$true] %s3596
      %s3598 = sshll.u32 %s10, 4
      %s3599 = int_to_ptr.hbm [resolvable:$true] %s3598
      %3604 = dma.vmem_to_hbm [thread:$0]  %s3597, 512, %s3599, [#allocation4], 128, 128, 8
    $region61: #{tpu_custom_call.1} parent=1 // pred_fallthru
      _
    // Predicated region
    $region62: #{tpu_custom_call.1} parent=1 // pred_check
      _
    $region63: #{tpu_custom_call.1} parent=1 // pred_check_branch
      %3606 = sbr.rel (0) target = $region65
    $region64: #{tpu_custom_call.1} parent=1 // pred_region
      %3608 = dma.done [#allocation4], 512
    $region65: #{tpu_custom_call.1} parent=1 // pred_fallthru
      _
    %3609 = vsyncpa [#allocation3], 1
    %3610 = vsyncpa [#allocation7], 1
    %3611 = vsyncpa [#allocation4], 1
    %3612 = vsyncpa [#allocation5], 1

</llo_original>
